<compile_context>
chip_gen: v7x
topology: tpu7x:2x2x1
jax: 0.10.0
libtpu: 0.0.40
codegen_flags: <defaults>
</compile_context>

<pallas_src>
import functools

import jax
import jax.numpy as jnp
from jax import lax
from jax.experimental import pallas as pl
from jax.experimental.pallas import tpu as pltpu

EPS = 1e-3  # matches nn.BatchNorm2d(eps=0.001)


# --------------------------- in-kernel helpers ------------------------------ #

def _im2col_taps_w(b2, H, W):
    """(1,7) conv along W: pad W (sublane axis) by 3 zeros each side, return the
    7 shifted taps concatenated along lanes as a (H*W, 7*128) bf16 matrix."""
    CB = b2.shape[-1]
    rows = H * W
    z = jnp.zeros((H, 3, CB), jnp.float32)
    padded = jnp.concatenate([z, b2.reshape(H, W, CB), z], axis=1)   # (H, W+6, CB)
    # f32 sublane-offset slices (robust); cast each 128-wide tap to bf16.
    return jnp.concatenate(
        [padded[:, k:k + W, :].reshape(rows, CB).astype(jnp.bfloat16)
         for k in range(7)], axis=-1)                                # (rows, 7*CB)


def _im2col_taps_h(b2, H, W):
    """(7,1) conv along H: pad the major axis; taps are pure address offsets,
    so cast to bf16 once on the padded block."""
    CB = b2.shape[-1]
    rows = H * W
    z = jnp.zeros((3, W, CB), jnp.float32)
    padded = jnp.concatenate([z, b2.reshape(H, W, CB), z],
                             axis=0).astype(jnp.bfloat16)            # (H+6, W, CB)
    return jnp.concatenate(
        [padded[k:k + H, :, :].reshape(rows, CB) for k in range(7)], axis=-1)


def _block_kernel(x_ref, w12_ref, b12_ref, w2b_ref, b2b_ref,
                  w2c_ref, b2c_ref, wr_ref, br_ref, o_ref, *, H, W):
    CB = 128
    x = x_ref[0]                                              # (H*W, 896) f32

    # ---- branch1 (1x1) + branch2[0] (1x1): ONE fused matmul, K=896 ----------
    y12 = jnp.dot(x.astype(jnp.bfloat16), w12_ref[...],
                  preferred_element_type=jnp.float32)         # (rows, 256)
    y12 = jnp.maximum(y12 + b12_ref[...], 0.0)                # folded BN + relu
    b1, b2 = y12[:, :CB], y12[:, CB:]

    # ---- branch2[1]: (1,7) conv along W as a single K=7*128 matmul ----------
    xs = _im2col_taps_w(b2, H, W)
    b2 = jnp.maximum(
        jnp.dot(xs, w2b_ref[...], preferred_element_type=jnp.float32)
        + b2b_ref[...], 0.0)

    # ---- branch2[2]: (7,1) conv along H as a single K=7*128 matmul ----------
    xs = _im2col_taps_h(b2, H, W)
    b2 = jnp.maximum(
        jnp.dot(xs, w2c_ref[...], preferred_element_type=jnp.float32)
        + b2c_ref[...], 0.0)

    # ---- final 1x1 (256->896): concat -> single K=256 matmul; BN and the 0.1
    #      residual scale are folded into wr/br; residual add + final relu ----
    cat = jnp.concatenate([b1, b2], axis=-1).astype(jnp.bfloat16)   # (rows, 256)
    y = jnp.dot(cat, wr_ref[...], preferred_element_type=jnp.float32)
    y = jnp.maximum(y + br_ref[...], 0.0)
    o_ref[0] = jnp.maximum(y + x, 0.0)


# ------------------------------- wrapper ------------------------------------ #

def inception_resnet_b_forward(x_nchw, p):
    N, C, H, W = x_nchw.shape
    assert C == 896, "residual add requires in_channels == 896"
    HW = H * W

    # channels-last rows for the kernel (layout plumbing outside the kernel).
    x_rows = jnp.transpose(x_nchw, (0, 2, 3, 1)).reshape(N, HW, C)

    act_spec = pl.BlockSpec((1, HW, C), lambda n: (n, 0, 0))

    def resident(shape):        # constant index_map -> DMA'd once, stays in VMEM
        return pl.BlockSpec(shape, lambda n: (0, 0))

    out = pl.pallas_call(
        functools.partial(_block_kernel, H=H, W=W),
        out_shape=jax.ShapeDtypeStruct((N, HW, C), jnp.float32),
        grid=(N,),
        in_specs=[act_spec,
                  resident((C, 256)), resident((1, 256)),
                  resident((7 * 128, 128)), resident((1, 128)),
                  resident((7 * 128, 128)), resident((1, 128)),
                  resident((256, C)), resident((1, C))],
        out_specs=act_spec,
        compiler_params=pltpu.CompilerParams(
            dimension_semantics=("parallel",),
            vmem_limit_bytes=32 * 1024 * 1024),
    )(x_rows, p["w12"], p["b12"], p["w2b"], p["b2b"],
      p["w2c"], p["b2c"], p["wr"], p["br"])

    return jnp.transpose(out.reshape(N, H, W, C), (0, 3, 1, 2))   # back to NCHW


# ------------------------------- params -------------------------------------- #

def make_params(key):
    keys = iter(jax.random.split(key, 32))

    def conv_w(cout, cin, kh, kw):
        # PyTorch nn.Conv2d weight layout (Cout, Cin, kh, kw), bias=False.
        return 0.05 * jax.random.normal(next(keys), (cout, cin, kh, kw), jnp.float32)

    def bn_stats(c):
        gamma = 0.5 + jax.random.uniform(next(keys), (c,), jnp.float32)
        beta = 0.1 * jax.random.normal(next(keys), (c,), jnp.float32)
        mean = 0.1 * jax.random.normal(next(keys), (c,), jnp.float32)
        var = 0.5 + jax.random.uniform(next(keys), (c,), jnp.float32)
        return gamma, beta, mean, var

    def fold(w, gamma, beta, mean, var, extra=1.0):
        # Eval-mode BN folded into the conv:  bn(conv(x, w)) = conv(x, w*s) + b
        # with s = gamma*rsqrt(var+eps), b = beta - mean*s (both scaled by extra).
        s = gamma * lax.rsqrt(var + EPS)
        return w * (s * extra)[:, None, None, None], (beta - mean * s) * extra

    p = {}

    # branch1: 1x1 896->128   +   branch2[0]: 1x1 896->128  -> fused (896, 256)
    w1f, bias1 = fold(conv_w(128, 896, 1, 1), *bn_stats(128))
    w2f, bias2 = fold(conv_w(128, 896, 1, 1), *bn_stats(128))
    p["w12"] = jnp.concatenate(
        [w1f[:, :, 0, 0].T, w2f[:, :, 0, 0].T], axis=1).astype(jnp.bfloat16)
    p["b12"] = jnp.concatenate([bias1, bias2]).reshape(1, 256)

    # branch2[1]: (1,7) conv 128->128, padding (0,3) -> im2col weight (7*128, 128)
    wf, bias = fold(conv_w(128, 128, 1, 7), *bn_stats(128))
    p["w2b"] = (jnp.transpose(wf[:, :, 0, :], (2, 1, 0))      # (kw, cin, cout)
                .reshape(7 * 128, 128).astype(jnp.bfloat16))
    p["b2b"] = bias.reshape(1, 128)

    # branch2[2]: (7,1) conv 128->128, padding (3,0) -> im2col weight (7*128, 128)
    wf, bias = fold(conv_w(128, 128, 7, 1), *bn_stats(128))
    p["w2c"] = (jnp.transpose(wf[:, :, :, 0], (2, 1, 0))      # (kh, cin, cout)
                .reshape(7 * 128, 128).astype(jnp.bfloat16))
    p["b2c"] = bias.reshape(1, 128)

    # branch: 1x1, 256 -> 896; the 0.1 residual scale is folded in here.
    wf, bias = fold(conv_w(896, 256, 1, 1), *bn_stats(896), extra=0.1)
    p["wr"] = wf[:, :, 0, 0].T.astype(jnp.bfloat16)           # (256, 896)
    p["br"] = bias.reshape(1, 896)

    return p


if __name__ == "__main__":
    key = jax.random.PRNGKey(0)
    kx, kp = jax.random.split(key)
    # in_channels must be 896 for the residual add; keep batch/spatial small.
    x = jax.random.normal(kx, (2, 896, 8, 8), jnp.float32)
    params = make_params(kp)

    fwd = jax.jit(inception_resnet_b_forward)
    out = fwd(x, params)
    jax.block_until_ready(out)
    assert out.shape == x.shape and out.dtype == jnp.float32
    print("KERNEL_OK")
</pallas_src>

<mosaic_0001>
module attributes {stable_mosaic.version = 11 : i64} {
  func.func @_block_kernel(%arg0: i32, %arg1: memref<1x64x896xf32, #tpu.memory_space<vmem>>, %arg2: memref<896x256xbf16, #tpu.memory_space<vmem>>, %arg3: memref<1x256xf32, #tpu.memory_space<vmem>>, %arg4: memref<896x128xbf16, #tpu.memory_space<vmem>>, %arg5: memref<1x128xf32, #tpu.memory_space<vmem>>, %arg6: memref<896x128xbf16, #tpu.memory_space<vmem>>, %arg7: memref<1x128xf32, #tpu.memory_space<vmem>>, %arg8: memref<256x896xbf16, #tpu.memory_space<vmem>>, %arg9: memref<1x896xf32, #tpu.memory_space<vmem>>, %arg10: memref<1x64x896xf32, #tpu.memory_space<vmem>>) attributes {dimension_semantics = [#tpu.dimension_semantics<parallel>], iteration_bounds = array<i64: 2>, scalar_prefetch = 0 : i64, scratch_operands = 0 : i64, tpu.core_type = #tpu.core_type<tc>, window_params = [{transform_indices = @transform_0, window_bounds = array<i64: 1, 64, 896>}, {pipeline_mode = #tpu.pipeline_mode<synchronous>, transform_indices = @transform_1, window_bounds = array<i64: 896, 256>}, {pipeline_mode = #tpu.pipeline_mode<synchronous>, transform_indices = @transform_2, window_bounds = array<i64: 1, 256>}, {pipeline_mode = #tpu.pipeline_mode<synchronous>, transform_indices = @transform_3, window_bounds = array<i64: 896, 128>}, {pipeline_mode = #tpu.pipeline_mode<synchronous>, transform_indices = @transform_4, window_bounds = array<i64: 1, 128>}, {pipeline_mode = #tpu.pipeline_mode<synchronous>, transform_indices = @transform_5, window_bounds = array<i64: 896, 128>}, {pipeline_mode = #tpu.pipeline_mode<synchronous>, transform_indices = @transform_6, window_bounds = array<i64: 1, 128>}, {pipeline_mode = #tpu.pipeline_mode<synchronous>, transform_indices = @transform_7, window_bounds = array<i64: 256, 896>}, {pipeline_mode = #tpu.pipeline_mode<synchronous>, transform_indices = @transform_8, window_bounds = array<i64: 1, 896>}, {transform_indices = @transform_9, window_bounds = array<i64: 1, 64, 896>}]} {
    %c0 = arith.constant 0 : index
    %c0_0 = arith.constant 0 : index
    %c0_1 = arith.constant 0 : index
    %0 = vector.load %arg1[%c0, %c0_0, %c0_1] : memref<1x64x896xf32, #tpu.memory_space<vmem>>, vector<1x64x896xf32>
    %1 = vector.shape_cast %0 : vector<1x64x896xf32> to vector<64x896xf32>
    %2 = arith.truncf %1 : vector<64x896xf32> to vector<64x896xbf16>
    %c0_2 = arith.constant 0 : index
    %c0_3 = arith.constant 0 : index
    %3 = vector.load %arg2[%c0_2, %c0_3] : memref<896x256xbf16, #tpu.memory_space<vmem>>, vector<896x256xbf16>
    %cst = arith.constant dense<0.000000e+00> : vector<64x256xf32>
    %4 = tpu.matmul %2, %3, %cst {dimension_numbers = #tpu.dot_dimension_numbers<[1], [0], [0], [1], [0, 0, 1, 1], [], []>} : vector<64x896xbf16>, vector<896x256xbf16>, vector<64x256xf32> -> vector<64x256xf32>
    %c0_4 = arith.constant 0 : index
    %c0_5 = arith.constant 0 : index
    %5 = vector.load %arg3[%c0_4, %c0_5] : memref<1x256xf32, #tpu.memory_space<vmem>>, vector<1x256xf32>
    %6 = vector.broadcast %5 : vector<1x256xf32> to vector<64x256xf32>
    %7 = arith.addf %4, %6 : vector<64x256xf32>
    %cst_6 = arith.constant 0.000000e+00 : f32
    %8 = vector.broadcast %cst_6 : f32 to vector<64x256xf32>
    %9 = arith.maximumf %7, %8 : vector<64x256xf32>
    %10 = vector.extract_strided_slice %9 {offsets = [0, 0], sizes = [64, 128], strides = [1, 1]} : vector<64x256xf32> to vector<64x128xf32>
    %11 = vector.extract_strided_slice %9 {offsets = [0, 128], sizes = [64, 128], strides = [1, 1]} : vector<64x256xf32> to vector<64x128xf32>
    %cst_7 = arith.constant 0.000000e+00 : f32
    %12 = vector.broadcast %cst_7 : f32 to vector<8x3x128xf32>
    %13 = vector.shape_cast %11 : vector<64x128xf32> to vector<8x8x128xf32>
    %14 = tpu.concatenate %12, %13, %12 in 1 : vector<8x3x128xf32>, vector<8x8x128xf32>, vector<8x3x128xf32> -> vector<8x14x128xf32>
    %15 = vector.extract_strided_slice %14 {offsets = [0, 0, 0], sizes = [8, 8, 128], strides = [1, 1, 1]} : vector<8x14x128xf32> to vector<8x8x128xf32>
    %16 = vector.shape_cast %15 : vector<8x8x128xf32> to vector<64x128xf32>
    %17 = arith.truncf %16 : vector<64x128xf32> to vector<64x128xbf16>
    %18 = vector.extract_strided_slice %14 {offsets = [0, 1, 0], sizes = [8, 8, 128], strides = [1, 1, 1]} : vector<8x14x128xf32> to vector<8x8x128xf32>
    %19 = vector.shape_cast %18 : vector<8x8x128xf32> to vector<64x128xf32>
    %20 = arith.truncf %19 : vector<64x128xf32> to vector<64x128xbf16>
    %21 = vector.extract_strided_slice %14 {offsets = [0, 2, 0], sizes = [8, 8, 128], strides = [1, 1, 1]} : vector<8x14x128xf32> to vector<8x8x128xf32>
    %22 = vector.shape_cast %21 : vector<8x8x128xf32> to vector<64x128xf32>
    %23 = arith.truncf %22 : vector<64x128xf32> to vector<64x128xbf16>
    %24 = vector.extract_strided_slice %14 {offsets = [0, 3, 0], sizes = [8, 8, 128], strides = [1, 1, 1]} : vector<8x14x128xf32> to vector<8x8x128xf32>
    %25 = vector.shape_cast %24 : vector<8x8x128xf32> to vector<64x128xf32>
    %26 = arith.truncf %25 : vector<64x128xf32> to vector<64x128xbf16>
    %27 = vector.extract_strided_slice %14 {offsets = [0, 4, 0], sizes = [8, 8, 128], strides = [1, 1, 1]} : vector<8x14x128xf32> to vector<8x8x128xf32>
    %28 = vector.shape_cast %27 : vector<8x8x128xf32> to vector<64x128xf32>
    %29 = arith.truncf %28 : vector<64x128xf32> to vector<64x128xbf16>
    %30 = vector.extract_strided_slice %14 {offsets = [0, 5, 0], sizes = [8, 8, 128], strides = [1, 1, 1]} : vector<8x14x128xf32> to vector<8x8x128xf32>
    %31 = vector.shape_cast %30 : vector<8x8x128xf32> to vector<64x128xf32>
    %32 = arith.truncf %31 : vector<64x128xf32> to vector<64x128xbf16>
    %33 = vector.extract_strided_slice %14 {offsets = [0, 6, 0], sizes = [8, 8, 128], strides = [1, 1, 1]} : vector<8x14x128xf32> to vector<8x8x128xf32>
    %34 = vector.shape_cast %33 : vector<8x8x128xf32> to vector<64x128xf32>
    %35 = arith.truncf %34 : vector<64x128xf32> to vector<64x128xbf16>
    %36 = tpu.concatenate %17, %20, %23, %26, %29, %32, %35 in 1 : vector<64x128xbf16>, vector<64x128xbf16>, vector<64x128xbf16>, vector<64x128xbf16>, vector<64x128xbf16>, vector<64x128xbf16>, vector<64x128xbf16> -> vector<64x896xbf16>
    %c0_8 = arith.constant 0 : index
    %c0_9 = arith.constant 0 : index
    %37 = vector.load %arg4[%c0_8, %c0_9] : memref<896x128xbf16, #tpu.memory_space<vmem>>, vector<896x128xbf16>
    %cst_10 = arith.constant dense<0.000000e+00> : vector<64x128xf32>
    %38 = tpu.matmul %36, %37, %cst_10 {dimension_numbers = #tpu.dot_dimension_numbers<[1], [0], [0], [1], [0, 0, 1, 1], [], []>} : vector<64x896xbf16>, vector<896x128xbf16>, vector<64x128xf32> -> vector<64x128xf32>
    %c0_11 = arith.constant 0 : index
    %c0_12 = arith.constant 0 : index
    %39 = vector.load %arg5[%c0_11, %c0_12] : memref<1x128xf32, #tpu.memory_space<vmem>>, vector<1x128xf32>
    %40 = vector.broadcast %39 : vector<1x128xf32> to vector<64x128xf32>
    %41 = arith.addf %38, %40 : vector<64x128xf32>
    %cst_13 = arith.constant 0.000000e+00 : f32
    %42 = vector.broadcast %cst_13 : f32 to vector<64x128xf32>
    %43 = arith.maximumf %41, %42 : vector<64x128xf32>
    %cst_14 = arith.constant 0.000000e+00 : f32
    %44 = vector.broadcast %cst_14 : f32 to vector<3x8x128xf32>
    %45 = vector.shape_cast %43 : vector<64x128xf32> to vector<8x8x128xf32>
    %46 = tpu.concatenate %44, %45, %44 in 0 : vector<3x8x128xf32>, vector<8x8x128xf32>, vector<3x8x128xf32> -> vector<14x8x128xf32>
    %47 = arith.truncf %46 : vector<14x8x128xf32> to vector<14x8x128xbf16>
    %48 = vector.extract_strided_slice %47 {offsets = [0, 0, 0], sizes = [8, 8, 128], strides = [1, 1, 1]} : vector<14x8x128xbf16> to vector<8x8x128xbf16>
    %49 = vector.shape_cast %48 : vector<8x8x128xbf16> to vector<64x128xbf16>
    %50 = vector.extract_strided_slice %47 {offsets = [1, 0, 0], sizes = [8, 8, 128], strides = [1, 1, 1]} : vector<14x8x128xbf16> to vector<8x8x128xbf16>
    %51 = vector.shape_cast %50 : vector<8x8x128xbf16> to vector<64x128xbf16>
    %52 = vector.extract_strided_slice %47 {offsets = [2, 0, 0], sizes = [8, 8, 128], strides = [1, 1, 1]} : vector<14x8x128xbf16> to vector<8x8x128xbf16>
    %53 = vector.shape_cast %52 : vector<8x8x128xbf16> to vector<64x128xbf16>
    %54 = vector.extract_strided_slice %47 {offsets = [3, 0, 0], sizes = [8, 8, 128], strides = [1, 1, 1]} : vector<14x8x128xbf16> to vector<8x8x128xbf16>
    %55 = vector.shape_cast %54 : vector<8x8x128xbf16> to vector<64x128xbf16>
    %56 = vector.extract_strided_slice %47 {offsets = [4, 0, 0], sizes = [8, 8, 128], strides = [1, 1, 1]} : vector<14x8x128xbf16> to vector<8x8x128xbf16>
    %57 = vector.shape_cast %56 : vector<8x8x128xbf16> to vector<64x128xbf16>
    %58 = vector.extract_strided_slice %47 {offsets = [5, 0, 0], sizes = [8, 8, 128], strides = [1, 1, 1]} : vector<14x8x128xbf16> to vector<8x8x128xbf16>
    %59 = vector.shape_cast %58 : vector<8x8x128xbf16> to vector<64x128xbf16>
    %60 = vector.extract_strided_slice %47 {offsets = [6, 0, 0], sizes = [8, 8, 128], strides = [1, 1, 1]} : vector<14x8x128xbf16> to vector<8x8x128xbf16>
    %61 = vector.shape_cast %60 : vector<8x8x128xbf16> to vector<64x128xbf16>
    %62 = tpu.concatenate %49, %51, %53, %55, %57, %59, %61 in 1 : vector<64x128xbf16>, vector<64x128xbf16>, vector<64x128xbf16>, vector<64x128xbf16>, vector<64x128xbf16>, vector<64x128xbf16>, vector<64x128xbf16> -> vector<64x896xbf16>
    %c0_15 = arith.constant 0 : index
    %c0_16 = arith.constant 0 : index
    %63 = vector.load %arg6[%c0_15, %c0_16] : memref<896x128xbf16, #tpu.memory_space<vmem>>, vector<896x128xbf16>
    %cst_17 = arith.constant dense<0.000000e+00> : vector<64x128xf32>
    %64 = tpu.matmul %62, %63, %cst_17 {dimension_numbers = #tpu.dot_dimension_numbers<[1], [0], [0], [1], [0, 0, 1, 1], [], []>} : vector<64x896xbf16>, vector<896x128xbf16>, vector<64x128xf32> -> vector<64x128xf32>
    %c0_18 = arith.constant 0 : index
    %c0_19 = arith.constant 0 : index
    %65 = vector.load %arg7[%c0_18, %c0_19] : memref<1x128xf32, #tpu.memory_space<vmem>>, vector<1x128xf32>
    %66 = vector.broadcast %65 : vector<1x128xf32> to vector<64x128xf32>
    %67 = arith.addf %64, %66 : vector<64x128xf32>
    %cst_20 = arith.constant 0.000000e+00 : f32
    %68 = vector.broadcast %cst_20 : f32 to vector<64x128xf32>
    %69 = arith.maximumf %67, %68 : vector<64x128xf32>
    %70 = tpu.concatenate %10, %69 in 1 : vector<64x128xf32>, vector<64x128xf32> -> vector<64x256xf32>
    %71 = arith.truncf %70 : vector<64x256xf32> to vector<64x256xbf16>
    %c0_21 = arith.constant 0 : index
    %c0_22 = arith.constant 0 : index
    %72 = vector.load %arg8[%c0_21, %c0_22] : memref<256x896xbf16, #tpu.memory_space<vmem>>, vector<256x896xbf16>
    %cst_23 = arith.constant dense<0.000000e+00> : vector<64x896xf32>
    %73 = tpu.matmul %71, %72, %cst_23 {dimension_numbers = #tpu.dot_dimension_numbers<[1], [0], [0], [1], [0, 0, 1, 1], [], []>} : vector<64x256xbf16>, vector<256x896xbf16>, vector<64x896xf32> -> vector<64x896xf32>
    %c0_24 = arith.constant 0 : index
    %c0_25 = arith.constant 0 : index
    %74 = vector.load %arg9[%c0_24, %c0_25] : memref<1x896xf32, #tpu.memory_space<vmem>>, vector<1x896xf32>
    %75 = vector.broadcast %74 : vector<1x896xf32> to vector<64x896xf32>
    %76 = arith.addf %73, %75 : vector<64x896xf32>
    %cst_26 = arith.constant 0.000000e+00 : f32
    %77 = vector.broadcast %cst_26 : f32 to vector<64x896xf32>
    %78 = arith.maximumf %76, %77 : vector<64x896xf32>
    %79 = arith.addf %78, %1 : vector<64x896xf32>
    %cst_27 = arith.constant 0.000000e+00 : f32
    %80 = vector.broadcast %cst_27 : f32 to vector<64x896xf32>
    %81 = arith.maximumf %79, %80 : vector<64x896xf32>
    %c0_28 = arith.constant 0 : index
    %c0_29 = arith.constant 0 : index
    %c0_30 = arith.constant 0 : index
    %82 = vector.load %arg10[%c0_28, %c0_29, %c0_30] : memref<1x64x896xf32, #tpu.memory_space<vmem>>, vector<1x64x896xf32>
    %83 = vector.shape_cast %82 : vector<1x64x896xf32> to vector<64x896xf32>
    %84 = vector.shape_cast %81 : vector<64x896xf32> to vector<1x64x896xf32>
    tpu.vector_store %arg10[%c0_28, %c0_29, %c0_30], %84 {strides = array<i32>} : memref<1x64x896xf32, #tpu.memory_space<vmem>>, vector<1x64x896xf32>,
    return
  }
  func.func @transform_0(%arg0: i32) -> (i32, i32, i32) {
    %c0_i32 = arith.constant 0 : i32
    %c0_i32_0 = arith.constant 0 : i32
    %c0_i32_1 = arith.constant 0 : i32
    return %arg0, %c0_i32, %c0_i32_0 : i32, i32, i32
  }
  func.func @transform_1(%arg0: i32) -> (i32, i32) {
    %c0_i32 = arith.constant 0 : i32
    %c0_i32_0 = arith.constant 0 : i32
    %c0_i32_1 = arith.constant 0 : i32
    return %c0_i32, %c0_i32_0 : i32, i32
  }
  func.func @transform_2(%arg0: i32) -> (i32, i32) {
    %c0_i32 = arith.constant 0 : i32
    %c0_i32_0 = arith.constant 0 : i32
    %c0_i32_1 = arith.constant 0 : i32
    return %c0_i32, %c0_i32_0 : i32, i32
  }
  func.func @transform_3(%arg0: i32) -> (i32, i32) {
    %c0_i32 = arith.constant 0 : i32
    %c0_i32_0 = arith.constant 0 : i32
    %c0_i32_1 = arith.constant 0 : i32
    return %c0_i32, %c0_i32_0 : i32, i32
  }
  func.func @transform_4(%arg0: i32) -> (i32, i32) {
    %c0_i32 = arith.constant 0 : i32
    %c0_i32_0 = arith.constant 0 : i32
    %c0_i32_1 = arith.constant 0 : i32
    return %c0_i32, %c0_i32_0 : i32, i32
  }
  func.func @transform_5(%arg0: i32) -> (i32, i32) {
    %c0_i32 = arith.constant 0 : i32
    %c0_i32_0 = arith.constant 0 : i32
    %c0_i32_1 = arith.constant 0 : i32
    return %c0_i32, %c0_i32_0 : i32, i32
  }
  func.func @transform_6(%arg0: i32) -> (i32, i32) {
    %c0_i32 = arith.constant 0 : i32
    %c0_i32_0 = arith.constant 0 : i32
    %c0_i32_1 = arith.constant 0 : i32
    return %c0_i32, %c0_i32_0 : i32, i32
  }
  func.func @transform_7(%arg0: i32) -> (i32, i32) {
    %c0_i32 = arith.constant 0 : i32
    %c0_i32_0 = arith.constant 0 : i32
    %c0_i32_1 = arith.constant 0 : i32
    return %c0_i32, %c0_i32_0 : i32, i32
  }
  func.func @transform_8(%arg0: i32) -> (i32, i32) {
    %c0_i32 = arith.constant 0 : i32
    %c0_i32_0 = arith.constant 0 : i32
    %c0_i32_1 = arith.constant 0 : i32
    return %c0_i32, %c0_i32_0 : i32, i32
  }
  func.func @transform_9(%arg0: i32) -> (i32, i32, i32) {
    %c0_i32 = arith.constant 0 : i32
    %c0_i32_0 = arith.constant 0 : i32
    %c0_i32_1 = arith.constant 0 : i32
    return %arg0, %c0_i32, %c0_i32_0 : i32, i32, i32
  }
}

</mosaic_0001>

<llo_original>
// kernel: inception_resnet_b_forward.1
$region0: #{inception_resnet_b_forward.1}
  #allocation0 [shape = 'u32[]', space=smem, size = 0x4, offset = 0x4, fixed_abs, tag = 'smem constant byte address 0x4 - core index']
  #allocation1 [shape = 'u32[144,128]{1,0:T(1,128)}', space=vmem, size = 0x12000, scoped, tag = 'internal scratch']
  %s0 = inlined_call_operand.hbm [shape: f32[2,64,896], index: 0, kind: input, shape index: {}]
  %s1 = inlined_call_operand.hbm [shape: bf16[896,256], index: 1, kind: input, shape index: {}]
  %s2 = inlined_call_operand.vmem [shape: f32[1,256], index: 2, kind: input, shape index: {}]
  %s3 = inlined_call_operand.hbm [shape: bf16[896,128], index: 3, kind: input, shape index: {}]
  %s4 = inlined_call_operand.vmem [shape: f32[1,128], index: 4, kind: input, shape index: {}]
  %s5 = inlined_call_operand.hbm [shape: bf16[896,128], index: 5, kind: input, shape index: {}]
  %s6 = inlined_call_operand.vmem [shape: f32[1,128], index: 6, kind: input, shape index: {}]
  %s7 = inlined_call_operand.hbm [shape: bf16[256,896], index: 7, kind: input, shape index: {}]
  %s8 = inlined_call_operand.vmem [shape: f32[1,896], index: 8, kind: input, shape index: {}]
  %s9 = inlined_call_operand.hbm [shape: f32[2,64,896], index: 9, kind: output, shape index: {}]
  %s10 = sld [smem:[#allocation0]]
  $region89: #{inception_resnet_b_forward.1} parent=0
    _
  %s12 = ssub.s32 1, %s10
  %s13 = scalar_select 0, %s12, %s10
  $region1: #{inception_resnet_b_forward.1} parent=0
    #allocation2 [shape = 'u8[458752]{0}', space=vmem, size = 0x70000, scoped, tag = 'input window, operand 0']
    #allocation3 [shape = 's32[2]{0}', space=sflag, size = 0x8, scoped, tag = 'scoped memory for inception_resnet_b_forward.1']
    #allocation4 [shape = 's32[2]{0}', space=sflag, size = 0x8, scoped, tag = 'scoped memory for inception_resnet_b_forward.1']
    #allocation5 [shape = 'u8[458752]{0}', space=vmem, size = 0x70000, scoped, tag = 'input window, operand 1, single buffered']
    #allocation6 [shape = 's32[1]{0}', space=sflag, size = 0x4, scoped, tag = 'scoped memory for inception_resnet_b_forward.1']
    #allocation7 [shape = 'u8[229376]{0}', space=vmem, size = 0x38000, scoped, tag = 'input window, operand 3, single buffered']
    #allocation8 [shape = 'u8[229376]{0}', space=vmem, size = 0x38000, scoped, tag = 'input window, operand 5, single buffered']
    #allocation9 [shape = 's32[1]{0}', space=sflag, size = 0x4, scoped, tag = 'scoped memory for inception_resnet_b_forward.1']
    #allocation10 [shape = 'u8[458752]{0}', space=vmem, size = 0x70000, scoped, tag = 'input window, operand 7, single buffered']
    #allocation11 [shape = 'u8[458752]{0}', space=vmem, size = 0x70000, scoped, tag = 'output window, operand 0']
    %14 = vsyncpa [#allocation3], 0
    %s15 = scalar_lea.sflag [#allocation3], 1
    %16 = vsyncpa %s15, 0
    %17 = vsyncpa [#allocation6], 0
    %18 = vsyncpa [#allocation9], 0
    %19 = vsyncpa [#allocation4], 0
    %s20 = scalar_lea.sflag [#allocation4], 1
    %21 = vsyncpa %s20, 0
    loop: start=0, step=1, limit=4
    $region2: #{inception_resnet_b_forward.1} parent=1 // loop_pre_header
      _
    $region3: #{inception_resnet_b_forward.1} parent=1 // loop_header
      %s23 = sphi 0, %s27
      %p24 = scmp.ge.s32.totalorder %s23, 4
      %s33 = sphi 0, %s35
      %s36 = sphi 0, %s33
      %s37 = sphi 0, %s36
      %s53 = sphi 0, %s37
      %s57 = sphi 0, %s57
      %s59 = sphi 0, %s57
      %s60 = sphi 0, %s59
      %s74 = sphi 0, %s60
      %s78 = sphi 0, %s78
      %s80 = sphi 0, %s78
      %s81 = sphi 0, %s80
      %s95 = sphi 0, %s81
      %s99 = sphi 0, %s99
      %s101 = sphi 0, %s99
      %s102 = sphi 0, %s101
      %s116 = sphi 0, %s102
      %s120 = sphi 0, %s120
      %s122 = sphi 0, %s120
      %s123 = sphi 0, %s122
      %s137 = sphi 0, %s123
      %s141 = sphi 0, %s141
      %s143 = sphi 0, %s141
      %s144 = sphi 0, %s143
      %s158 = sphi 0, %s144
      %s162 = sphi 0, %s162
      %s164 = sphi 0, %s162
      %s165 = sphi 0, %s164
      %s179 = sphi 0, %s165
      %s183 = sphi 0, %s183
      %s185 = sphi 0, %s183
      %s186 = sphi 0, %s185
      %s200 = sphi 0, %s186
      %s204 = sphi 0, %s204
      %s206 = sphi 0, %s204
      %s207 = sphi 0, %s206
      %s221 = sphi 0, %s207
      %s227 = sphi 0, %s229
      %s230 = sphi 0, %s227
      %s231 = sphi 0, %s230
      %s247 = sphi 0, %s231
    $region4: #{inception_resnet_b_forward.1} parent=1 // loop_header_branch
      %26 = sbr.rel (%p24) target = $region8
    $region5: #{inception_resnet_b_forward.1} parent=1 // loop_body
      %s28 = ssub.s32 %s23, 1
      %s29 = ssub.s32 %s23, 2
      %s30 = sadd.s32 %s23, 1
      %s31 = ssub.s32 %s23, %s30
      %p32 = scmp.eq.s32.totalorder %s31, 0
      %s34 = sadd.s32 %s33, 1
      %s35 = scalar_select %p32, %s33, %s34
      %p38 = pneg %p32
      %p39 = scmp.eq.s32.totalorder %s23, 1
      %p40 = por %p38, %p39
      %p41 = scmp.ne.s32.totalorder %s33, %s36
      %p42 = scmp.eq.s32.totalorder %s23, 0
      %p43 = por %p41, %p42
      %p44 = scmp.ne.s32.totalorder %s33, %s36
      %p45 = scmp.eq.s32.totalorder %s28, 1
      %p46 = por %p44, %p45
      %p47 = scmp.ne.s32.totalorder %s36, %s37
      %p48 = scmp.eq.s32.totalorder %s28, 0
      %p49 = por %p47, %p48
      %p50 = scmp.ne.s32.totalorder %s36, %s37
      %p51 = scmp.eq.s32.totalorder %s29, 1
      %p52 = por %p50, %p51
      %p54 = scmp.ne.s32.totalorder %s37, %s53
      %p55 = scmp.eq.s32.totalorder %s29, 0
      %p56 = por %p54, %p55
      %s58 = sadd.s32 %s57, 1
      %p61 = scmp.eq.s32.totalorder %s23, 1
      %p62 = scmp.ne.s32.totalorder %s57, %s59
      %p63 = scmp.eq.s32.totalorder %s23, 0
      %p64 = por %p62, %p63
      %p65 = scmp.ne.s32.totalorder %s57, %s59
      %p66 = scmp.eq.s32.totalorder %s28, 1
      %p67 = por %p65, %p66
      %p68 = scmp.ne.s32.totalorder %s59, %s60
      %p69 = scmp.eq.s32.totalorder %s28, 0
      %p70 = por %p68, %p69
      %p71 = scmp.ne.s32.totalorder %s59, %s60
      %p72 = scmp.eq.s32.totalorder %s29, 1
      %p73 = por %p71, %p72
      %p75 = scmp.ne.s32.totalorder %s60, %s74
      %p76 = scmp.eq.s32.totalorder %s29, 0
      %p77 = por %p75, %p76
      %s79 = sadd.s32 %s78, 1
      %p82 = scmp.eq.s32.totalorder %s23, 1
      %p83 = scmp.ne.s32.totalorder %s78, %s80
      %p84 = scmp.eq.s32.totalorder %s23, 0
      %p85 = por %p83, %p84
      %p86 = scmp.ne.s32.totalorder %s78, %s80
      %p87 = scmp.eq.s32.totalorder %s28, 1
      %p88 = por %p86, %p87
      %p89 = scmp.ne.s32.totalorder %s80, %s81
      %p90 = scmp.eq.s32.totalorder %s28, 0
      %p91 = por %p89, %p90
      %p92 = scmp.ne.s32.totalorder %s80, %s81
      %p93 = scmp.eq.s32.totalorder %s29, 1
      %p94 = por %p92, %p93
      %p96 = scmp.ne.s32.totalorder %s81, %s95
      %p97 = scmp.eq.s32.totalorder %s29, 0
      %p98 = por %p96, %p97
      %s100 = sadd.s32 %s99, 1
      %p103 = scmp.eq.s32.totalorder %s23, 1
      %p104 = scmp.ne.s32.totalorder %s99, %s101
      %p105 = scmp.eq.s32.totalorder %s23, 0
      %p106 = por %p104, %p105
      %p107 = scmp.ne.s32.totalorder %s99, %s101
      %p108 = scmp.eq.s32.totalorder %s28, 1
      %p109 = por %p107, %p108
      %p110 = scmp.ne.s32.totalorder %s101, %s102
      %p111 = scmp.eq.s32.totalorder %s28, 0
      %p112 = por %p110, %p111
      %p113 = scmp.ne.s32.totalorder %s101, %s102
      %p114 = scmp.eq.s32.totalorder %s29, 1
      %p115 = por %p113, %p114
      %p117 = scmp.ne.s32.totalorder %s102, %s116
      %p118 = scmp.eq.s32.totalorder %s29, 0
      %p119 = por %p117, %p118
      %s121 = sadd.s32 %s120, 1
      %p124 = scmp.eq.s32.totalorder %s23, 1
      %p125 = scmp.ne.s32.totalorder %s120, %s122
      %p126 = scmp.eq.s32.totalorder %s23, 0
      %p127 = por %p125, %p126
      %p128 = scmp.ne.s32.totalorder %s120, %s122
      %p129 = scmp.eq.s32.totalorder %s28, 1
      %p130 = por %p128, %p129
      %p131 = scmp.ne.s32.totalorder %s122, %s123
      %p132 = scmp.eq.s32.totalorder %s28, 0
      %p133 = por %p131, %p132
      %p134 = scmp.ne.s32.totalorder %s122, %s123
      %p135 = scmp.eq.s32.totalorder %s29, 1
      %p136 = por %p134, %p135
      %p138 = scmp.ne.s32.totalorder %s123, %s137
      %p139 = scmp.eq.s32.totalorder %s29, 0
      %p140 = por %p138, %p139
      %s142 = sadd.s32 %s141, 1
      %p145 = scmp.eq.s32.totalorder %s23, 1
      %p146 = scmp.ne.s32.totalorder %s141, %s143
      %p147 = scmp.eq.s32.totalorder %s23, 0
      %p148 = por %p146, %p147
      %p149 = scmp.ne.s32.totalorder %s141, %s143
      %p150 = scmp.eq.s32.totalorder %s28, 1
      %p151 = por %p149, %p150
      %p152 = scmp.ne.s32.totalorder %s143, %s144
      %p153 = scmp.eq.s32.totalorder %s28, 0
      %p154 = por %p152, %p153
      %p155 = scmp.ne.s32.totalorder %s143, %s144
      %p156 = scmp.eq.s32.totalorder %s29, 1
      %p157 = por %p155, %p156
      %p159 = scmp.ne.s32.totalorder %s144, %s158
      %p160 = scmp.eq.s32.totalorder %s29, 0
      %p161 = por %p159, %p160
      %s163 = sadd.s32 %s162, 1
      %p166 = scmp.eq.s32.totalorder %s23, 1
      %p167 = scmp.ne.s32.totalorder %s162, %s164
      %p168 = scmp.eq.s32.totalorder %s23, 0
      %p169 = por %p167, %p168
      %p170 = scmp.ne.s32.totalorder %s162, %s164
      %p171 = scmp.eq.s32.totalorder %s28, 1
      %p172 = por %p170, %p171
      %p173 = scmp.ne.s32.totalorder %s164, %s165
      %p174 = scmp.eq.s32.totalorder %s28, 0
      %p175 = por %p173, %p174
      %p176 = scmp.ne.s32.totalorder %s164, %s165
      %p177 = scmp.eq.s32.totalorder %s29, 1
      %p178 = por %p176, %p177
      %p180 = scmp.ne.s32.totalorder %s165, %s179
      %p181 = scmp.eq.s32.totalorder %s29, 0
      %p182 = por %p180, %p181
      %s184 = sadd.s32 %s183, 1
      %p187 = scmp.eq.s32.totalorder %s23, 1
      %p188 = scmp.ne.s32.totalorder %s183, %s185
      %p189 = scmp.eq.s32.totalorder %s23, 0
      %p190 = por %p188, %p189
      %p191 = scmp.ne.s32.totalorder %s183, %s185
      %p192 = scmp.eq.s32.totalorder %s28, 1
      %p193 = por %p191, %p192
      %p194 = scmp.ne.s32.totalorder %s185, %s186
      %p195 = scmp.eq.s32.totalorder %s28, 0
      %p196 = por %p194, %p195
      %p197 = scmp.ne.s32.totalorder %s185, %s186
      %p198 = scmp.eq.s32.totalorder %s29, 1
      %p199 = por %p197, %p198
      %p201 = scmp.ne.s32.totalorder %s186, %s200
      %p202 = scmp.eq.s32.totalorder %s29, 0
      %p203 = por %p201, %p202
      %s205 = sadd.s32 %s204, 1
      %p208 = scmp.eq.s32.totalorder %s23, 1
      %p209 = scmp.ne.s32.totalorder %s204, %s206
      %p210 = scmp.eq.s32.totalorder %s23, 0
      %p211 = por %p209, %p210
      %p212 = scmp.ne.s32.totalorder %s204, %s206
      %p213 = scmp.eq.s32.totalorder %s28, 1
      %p214 = por %p212, %p213
      %p215 = scmp.ne.s32.totalorder %s206, %s207
      %p216 = scmp.eq.s32.totalorder %s28, 0
      %p217 = por %p215, %p216
      %p218 = scmp.ne.s32.totalorder %s206, %s207
      %p219 = scmp.eq.s32.totalorder %s29, 1
      %p220 = por %p218, %p219
      %p222 = scmp.ne.s32.totalorder %s207, %s221
      %p223 = scmp.eq.s32.totalorder %s29, 0
      %p224 = por %p222, %p223
      %s225 = ssub.s32 %s23, %s30
      %p226 = scmp.eq.s32.totalorder %s225, 0
      %s228 = sadd.s32 %s227, 1
      %s229 = scalar_select %p226, %s227, %s228
      %p232 = pneg %p226
      %p233 = scmp.eq.s32.totalorder %s23, 1
      %p234 = por %p232, %p233
      %p235 = scmp.ne.s32.totalorder %s227, %s230
      %p236 = scmp.eq.s32.totalorder %s23, 0
      %p237 = por %p235, %p236
      %p238 = scmp.ne.s32.totalorder %s227, %s230
      %p239 = scmp.eq.s32.totalorder %s28, 1
      %p240 = por %p238, %p239
      %p241 = scmp.ne.s32.totalorder %s230, %s231
      %p242 = scmp.eq.s32.totalorder %s28, 0
      %p243 = por %p241, %p242
      %p244 = scmp.ne.s32.totalorder %s230, %s231
      %p245 = scmp.eq.s32.totalorder %s29, 1
      %p246 = por %p244, %p245
      %p248 = scmp.ne.s32.totalorder %s231, %s247
      %p249 = scmp.eq.s32.totalorder %s29, 0
      %p250 = por %p248, %p249
      %p251 = scmp.le.s32.totalorder 1, %s23
      %p252 = scmp.lt.s32.totalorder %s23, 3
      %p253 = pnand %p251, %p252
      %p254 = pneg %p253
      // Predicated region
      $region9: #{inception_resnet_b_forward.1} parent=5 // pred_check
        _
      $region10: #{inception_resnet_b_forward.1} parent=5 // pred_check_branch
        %256 = sbr.rel (%p253) target = $region12
      $region11: #{inception_resnet_b_forward.1} parent=5 // pred_region
        %s257 = ssub.s32 %s23, 1
        // Predicated region
        $region13: #{inception_resnet_b_forward.1} parent=11 // pred_check
          %p258 = pneg %p70
        $region14: #{inception_resnet_b_forward.1} parent=11 // pred_check_branch
          %260 = sbr.rel (%p258) target = $region16
        $region15: #{inception_resnet_b_forward.1} parent=11 // pred_region
          %s262 = ssub.s32 14336, 14336
          %263 = vsyncadd [#allocation6], %s262
          %s264 = sshll.u32 [#allocation5], 4
          %s265 = int_to_ptr.vmem [resolvable:$true] %s264
          %270 = dma.hbm_to_vmem [thread:$0]  %s1, 14336, %s265, [#allocation6], 128, 128, 8
        $region16: #{inception_resnet_b_forward.1} parent=11 // pred_fallthru
          _
        // Predicated region
        $region17: #{inception_resnet_b_forward.1} parent=11 // pred_check
          %p271 = pneg %p91
        $region18: #{inception_resnet_b_forward.1} parent=11 // pred_check_branch
          %273 = sbr.rel (%p271) target = $region20
        $region19: #{inception_resnet_b_forward.1} parent=11 // pred_region
          _
        $region20: #{inception_resnet_b_forward.1} parent=11 // pred_fallthru
          _
        // Predicated region
        $region21: #{inception_resnet_b_forward.1} parent=11 // pred_check
          %p274 = pneg %p112
        $region22: #{inception_resnet_b_forward.1} parent=11 // pred_check_branch
          %276 = sbr.rel (%p274) target = $region24
        $region23: #{inception_resnet_b_forward.1} parent=11 // pred_region
          %s278 = ssub.s32 7168, 7168
          %279 = vsyncadd [#allocation6], %s278
          %s280 = sshll.u32 [#allocation7], 4
          %s281 = int_to_ptr.vmem [resolvable:$true] %s280
          %286 = dma.hbm_to_vmem [thread:$0]  %s3, 7168, %s281, [#allocation6], 64, 64, 4
        $region24: #{inception_resnet_b_forward.1} parent=11 // pred_fallthru
          _
        // Predicated region
        $region25: #{inception_resnet_b_forward.1} parent=11 // pred_check
          %p287 = pneg %p133
        $region26: #{inception_resnet_b_forward.1} parent=11 // pred_check_branch
          %289 = sbr.rel (%p287) target = $region28
        $region27: #{inception_resnet_b_forward.1} parent=11 // pred_region
          _
        $region28: #{inception_resnet_b_forward.1} parent=11 // pred_fallthru
          _
        // Predicated region
        $region29: #{inception_resnet_b_forward.1} parent=11 // pred_check
          %p290 = pneg %p154
        $region30: #{inception_resnet_b_forward.1} parent=11 // pred_check_branch
          %292 = sbr.rel (%p290) target = $region32
        $region31: #{inception_resnet_b_forward.1} parent=11 // pred_region
          %s294 = ssub.s32 7168, 7168
          %295 = vsyncadd [#allocation9], %s294
          %s296 = sshll.u32 [#allocation8], 4
          %s297 = int_to_ptr.vmem [resolvable:$true] %s296
          %302 = dma.hbm_to_vmem [thread:$0]  %s5, 7168, %s297, [#allocation9], 64, 64, 4
        $region32: #{inception_resnet_b_forward.1} parent=11 // pred_fallthru
          _
        // Predicated region
        $region33: #{inception_resnet_b_forward.1} parent=11 // pred_check
          %p303 = pneg %p175
        $region34: #{inception_resnet_b_forward.1} parent=11 // pred_check_branch
          %305 = sbr.rel (%p303) target = $region36
        $region35: #{inception_resnet_b_forward.1} parent=11 // pred_region
          _
        $region36: #{inception_resnet_b_forward.1} parent=11 // pred_fallthru
          _
        // Predicated region
        $region37: #{inception_resnet_b_forward.1} parent=11 // pred_check
          %p306 = pneg %p196
        $region38: #{inception_resnet_b_forward.1} parent=11 // pred_check_branch
          %308 = sbr.rel (%p306) target = $region40
        $region39: #{inception_resnet_b_forward.1} parent=11 // pred_region
          %s310 = ssub.s32 14336, 14336
          %311 = vsyncadd [#allocation9], %s310
          %s312 = sshll.u32 [#allocation10], 4
          %s313 = int_to_ptr.vmem [resolvable:$true] %s312
          %318 = dma.hbm_to_vmem [thread:$0]  %s7, 14336, %s313, [#allocation9], 448, 448, 28
        $region40: #{inception_resnet_b_forward.1} parent=11 // pred_fallthru
          _
        // Predicated region
        $region41: #{inception_resnet_b_forward.1} parent=11 // pred_check
          %p319 = pneg %p217
        $region42: #{inception_resnet_b_forward.1} parent=11 // pred_check_branch
          %321 = sbr.rel (%p319) target = $region44
        $region43: #{inception_resnet_b_forward.1} parent=11 // pred_region
          _
        $region44: #{inception_resnet_b_forward.1} parent=11 // pred_fallthru
          _
      $region12: #{inception_resnet_b_forward.1} parent=5 // pred_fallthru
        _
      %p322 = scmp.lt.s32.totalorder %s23, 2
      // Predicated region
      $region45: #{inception_resnet_b_forward.1} parent=5 // pred_check
        %p323 = pneg %p322
      $region46: #{inception_resnet_b_forward.1} parent=5 // pred_check_branch
        %325 = sbr.rel (%p323) target = $region48
      $region47: #{inception_resnet_b_forward.1} parent=5 // pred_region
        // Predicated region
        $region49: #{inception_resnet_b_forward.1} parent=47 // pred_check
          %p326 = pneg %p43
        $region50: #{inception_resnet_b_forward.1} parent=47 // pred_check_branch
          %328 = sbr.rel (%p326) target = $region52
        $region51: #{inception_resnet_b_forward.1} parent=47 // pred_region
          %s329 = sand.u32 %s33, 1
          %s330 = scalar_lea.sflag [#allocation3], %s329
          %s331 = sand.u32 %s33, 1
          %s332 = smul.addr %s331, 448
          %s333 = scalar_lea.vmem [#allocation2], %s332
          %s335 = ssub.s32 7168, 7168
          %336 = vsyncadd %s330, %s335
          %s337 = smul.addr %s23, 56
          %s338 = smul.addr %s337, 128
          %s339 = scalar_lea.hbm %s0, %s338
          %s340 = sshll.u32 %s333, 4
          %s341 = int_to_ptr.vmem [resolvable:$true] %s340
          %346 = dma.hbm_to_vmem [thread:$0]  %s339, 7168, %s341, %s330, 896, 896, 56
        $region52: #{inception_resnet_b_forward.1} parent=47 // pred_fallthru
          _
      $region48: #{inception_resnet_b_forward.1} parent=5 // pred_fallthru
        _
      %p347 = scmp.le.s32.totalorder 1, %s23
      %p348 = scmp.lt.s32.totalorder %s23, 3
      %p349 = pnand %p347, %p348
      %p350 = pneg %p349
      // Predicated region
      $region53: #{inception_resnet_b_forward.1} parent=5 // pred_check
        _
      $region54: #{inception_resnet_b_forward.1} parent=5 // pred_check_branch
        %352 = sbr.rel (%p349) target = $region56
      $region55: #{inception_resnet_b_forward.1} parent=5 // pred_region
        %s353 = ssub.s32 %s23, 1
        %s354 = sand.u32 %s36, 1
        %s355 = scalar_lea.sflag [#allocation3], %s354
        %s356 = sand.u32 %s36, 1
        %s357 = smul.addr %s356, 448
        %s358 = scalar_lea.vmem [#allocation2], %s357
        // Predicated region
        $region57: #{inception_resnet_b_forward.1} parent=55 // pred_check
          %p359 = pneg %p49
        $region58: #{inception_resnet_b_forward.1} parent=55 // pred_check_branch
          %361 = sbr.rel (%p359) target = $region60
        $region59: #{inception_resnet_b_forward.1} parent=55 // pred_region
          %362 = dma.done %s355, 7168
        $region60: #{inception_resnet_b_forward.1} parent=55 // pred_fallthru
          _
        // Predicated region
        $region61: #{inception_resnet_b_forward.1} parent=55 // pred_check
          %p363 = pneg %p70
        $region62: #{inception_resnet_b_forward.1} parent=55 // pred_check_branch
          %365 = sbr.rel (%p363) target = $region64
        $region63: #{inception_resnet_b_forward.1} parent=55 // pred_region
          %366 = dma.done [#allocation6], 14336
        $region64: #{inception_resnet_b_forward.1} parent=55 // pred_fallthru
          _
        // Predicated region
        $region65: #{inception_resnet_b_forward.1} parent=55 // pred_check
          %p367 = pneg %p112
        $region66: #{inception_resnet_b_forward.1} parent=55 // pred_check_branch
          %369 = sbr.rel (%p367) target = $region68
        $region67: #{inception_resnet_b_forward.1} parent=55 // pred_region
          %370 = dma.done [#allocation6], 7168
        $region68: #{inception_resnet_b_forward.1} parent=55 // pred_fallthru
          _
        // Predicated region
        $region69: #{inception_resnet_b_forward.1} parent=55 // pred_check
          %p371 = pneg %p154
        $region70: #{inception_resnet_b_forward.1} parent=55 // pred_check_branch
          %373 = sbr.rel (%p371) target = $region72
        $region71: #{inception_resnet_b_forward.1} parent=55 // pred_region
          %374 = dma.done [#allocation9], 7168
        $region72: #{inception_resnet_b_forward.1} parent=55 // pred_fallthru
          _
        // Predicated region
        $region73: #{inception_resnet_b_forward.1} parent=55 // pred_check
          %p375 = pneg %p196
        $region74: #{inception_resnet_b_forward.1} parent=55 // pred_check_branch
          %377 = sbr.rel (%p375) target = $region76
        $region75: #{inception_resnet_b_forward.1} parent=55 // pred_region
          %378 = dma.done [#allocation9], 14336
        $region76: #{inception_resnet_b_forward.1} parent=55 // pred_fallthru
          _
        %s379 = sand.u32 %s36, 1
        %s380 = scalar_lea.sflag [#allocation3], %s379
        %s381 = sand.u32 %s36, 1
        %s382 = smul.addr %s381, 448
        %s383 = scalar_lea.vmem [#allocation2], %s382
        %p384 = pneg %p49
        %p385 = pneg %p46
        %p386 = pneg %p70
        %p387 = pneg %p67
        %p388 = pneg %p91
        %p389 = pneg %p88
        %p390 = pneg %p112
        %p391 = pneg %p109
        %p392 = pneg %p133
        %p393 = pneg %p130
        %p394 = pneg %p154
        %p395 = pneg %p151
        %p396 = pneg %p175
        %p397 = pneg %p172
        %p398 = pneg %p196
        %p399 = pneg %p193
        %p400 = pneg %p217
        %p401 = pneg %p214
        %p402 = pneg %p243
        %p403 = pneg %p240
        %s404 = sand.u32 %s230, 1
        %s405 = scalar_lea.sflag [#allocation4], %s404
        %s406 = sand.u32 %s230, 1
        %s407 = smul.addr %s406, 448
        %s408 = scalar_lea.vmem [#allocation11], %s407
        %v410 = vld [vmem:[%s358] sm:$0xff]
        %v411 = vld [vmem:[%s358 + $0x8] sm:$0xff]
        %v412 = vld [vmem:[%s358 + $0x10] sm:$0xff]
        %v413 = vld [vmem:[%s358 + $0x18] sm:$0xff]
        %v414 = vld [vmem:[%s358 + $0x20] sm:$0xff]
        %v415 = vld [vmem:[%s358 + $0x28] sm:$0xff]
        %v416 = vld [vmem:[%s358 + $0x30] sm:$0xff]
        %v417 = vld [vmem:[%s358 + $0x38] sm:$0xff]
        %v418 = vld [vmem:[%s358 + $0x40] sm:$0xff]
        %v419 = vld [vmem:[%s358 + $0x48] sm:$0xff]
        %v420 = vld [vmem:[%s358 + $0x50] sm:$0xff]
        %v421 = vld [vmem:[%s358 + $0x58] sm:$0xff]
        %v422 = vld [vmem:[%s358 + $0x60] sm:$0xff]
        %v423 = vld [vmem:[%s358 + $0x68] sm:$0xff]
        %v424 = vld [vmem:[%s358 + $0x70] sm:$0xff]
        %v425 = vld [vmem:[%s358 + $0x78] sm:$0xff]
        %v426 = vld [vmem:[%s358 + $0x80] sm:$0xff]
        %v427 = vld [vmem:[%s358 + $0x88] sm:$0xff]
        %v428 = vld [vmem:[%s358 + $0x90] sm:$0xff]
        %v429 = vld [vmem:[%s358 + $0x98] sm:$0xff]
        %v430 = vld [vmem:[%s358 + $0xa0] sm:$0xff]
        %v431 = vld [vmem:[%s358 + $0xa8] sm:$0xff]
        %v432 = vld [vmem:[%s358 + $0xb0] sm:$0xff]
        %v433 = vld [vmem:[%s358 + $0xb8] sm:$0xff]
        %v434 = vld [vmem:[%s358 + $0xc0] sm:$0xff]
        %v435 = vld [vmem:[%s358 + $0xc8] sm:$0xff]
        %v436 = vld [vmem:[%s358 + $0xd0] sm:$0xff]
        %v437 = vld [vmem:[%s358 + $0xd8] sm:$0xff]
        %v438 = vld [vmem:[%s358 + $0xe0] sm:$0xff]
        %v439 = vld [vmem:[%s358 + $0xe8] sm:$0xff]
        %v440 = vld [vmem:[%s358 + $0xf0] sm:$0xff]
        %v441 = vld [vmem:[%s358 + $0xf8] sm:$0xff]
        %v442 = vld [vmem:[%s358 + $0x100] sm:$0xff]
        %v443 = vld [vmem:[%s358 + $0x108] sm:$0xff]
        %v444 = vld [vmem:[%s358 + $0x110] sm:$0xff]
        %v445 = vld [vmem:[%s358 + $0x118] sm:$0xff]
        %v446 = vld [vmem:[%s358 + $0x120] sm:$0xff]
        %v447 = vld [vmem:[%s358 + $0x128] sm:$0xff]
        %v448 = vld [vmem:[%s358 + $0x130] sm:$0xff]
        %v449 = vld [vmem:[%s358 + $0x138] sm:$0xff]
        %v450 = vld [vmem:[%s358 + $0x140] sm:$0xff]
        %v451 = vld [vmem:[%s358 + $0x148] sm:$0xff]
        %v452 = vld [vmem:[%s358 + $0x150] sm:$0xff]
        %v453 = vld [vmem:[%s358 + $0x158] sm:$0xff]
        %v454 = vld [vmem:[%s358 + $0x160] sm:$0xff]
        %v455 = vld [vmem:[%s358 + $0x168] sm:$0xff]
        %v456 = vld [vmem:[%s358 + $0x170] sm:$0xff]
        %v457 = vld [vmem:[%s358 + $0x178] sm:$0xff]
        %v458 = vld [vmem:[%s358 + $0x180] sm:$0xff]
        %v459 = vld [vmem:[%s358 + $0x188] sm:$0xff]
        %v460 = vld [vmem:[%s358 + $0x190] sm:$0xff]
        %v461 = vld [vmem:[%s358 + $0x198] sm:$0xff]
        %v462 = vld [vmem:[%s358 + $0x1a0] sm:$0xff]
        %v463 = vld [vmem:[%s358 + $0x1a8] sm:$0xff]
        %v464 = vld [vmem:[%s358 + $0x1b0] sm:$0xff]
        %v465 = vld [vmem:[%s358 + $0x1b8] sm:$0xff]
        %v466 = vpack.c.bf16 %v417, %v410
        %v467 = vpack.c.bf16 %v418, %v411
        %v468 = vpack.c.bf16 %v419, %v412
        %v469 = vpack.c.bf16 %v420, %v413
        %v470 = vpack.c.bf16 %v421, %v414
        %v471 = vpack.c.bf16 %v422, %v415
        %v472 = vpack.c.bf16 %v423, %v416
        %v473 = vpack.c.bf16 %v431, %v424
        %v474 = vpack.c.bf16 %v432, %v425
        %v475 = vpack.c.bf16 %v433, %v426
        %v476 = vpack.c.bf16 %v434, %v427
        %v477 = vpack.c.bf16 %v435, %v428
        %v478 = vpack.c.bf16 %v436, %v429
        %v479 = vpack.c.bf16 %v437, %v430
        %v480 = vpack.c.bf16 %v445, %v438
        %v481 = vpack.c.bf16 %v446, %v439
        %v482 = vpack.c.bf16 %v447, %v440
        %v483 = vpack.c.bf16 %v448, %v441
        %v484 = vpack.c.bf16 %v449, %v442
        %v485 = vpack.c.bf16 %v450, %v443
        %v486 = vpack.c.bf16 %v451, %v444
        %v487 = vpack.c.bf16 %v459, %v452
        %v488 = vpack.c.bf16 %v460, %v453
        %v489 = vpack.c.bf16 %v461, %v454
        %v490 = vpack.c.bf16 %v462, %v455
        %v491 = vpack.c.bf16 %v463, %v456
        %v492 = vpack.c.bf16 %v464, %v457
        %v493 = vpack.c.bf16 %v465, %v458
        %v494 = vld [vmem:[#allocation5] sm:$0xff]
        %v495 = vld [vmem:[#allocation5 + $0x8] sm:$0xff]
        %v496 = vld [vmem:[#allocation5 + $0x10] sm:$0xff]
        %v497 = vld [vmem:[#allocation5 + $0x18] sm:$0xff]
        %v498 = vld [vmem:[#allocation5 + $0x20] sm:$0xff]
        %v499 = vld [vmem:[#allocation5 + $0x28] sm:$0xff]
        %v500 = vld [vmem:[#allocation5 + $0x30] sm:$0xff]
        %v501 = vld [vmem:[#allocation5 + $0x38] sm:$0xff]
        %v502 = vld [vmem:[#allocation5 + $0x40] sm:$0xff]
        %v503 = vld [vmem:[#allocation5 + $0x48] sm:$0xff]
        %v504 = vld [vmem:[#allocation5 + $0x50] sm:$0xff]
        %v505 = vld [vmem:[#allocation5 + $0x58] sm:$0xff]
        %v506 = vld [vmem:[#allocation5 + $0x60] sm:$0xff]
        %v507 = vld [vmem:[#allocation5 + $0x68] sm:$0xff]
        %v508 = vld [vmem:[#allocation5 + $0x70] sm:$0xff]
        %v509 = vld [vmem:[#allocation5 + $0x78] sm:$0xff]
        %v510 = vld [vmem:[#allocation5 + $0x80] sm:$0xff]
        %v511 = vld [vmem:[#allocation5 + $0x88] sm:$0xff]
        %v512 = vld [vmem:[#allocation5 + $0x90] sm:$0xff]
        %v513 = vld [vmem:[#allocation5 + $0x98] sm:$0xff]
        %v514 = vld [vmem:[#allocation5 + $0xa0] sm:$0xff]
        %v515 = vld [vmem:[#allocation5 + $0xa8] sm:$0xff]
        %v516 = vld [vmem:[#allocation5 + $0xb0] sm:$0xff]
        %v517 = vld [vmem:[#allocation5 + $0xb8] sm:$0xff]
        %v518 = vld [vmem:[#allocation5 + $0xc0] sm:$0xff]
        %v519 = vld [vmem:[#allocation5 + $0xc8] sm:$0xff]
        %v520 = vld [vmem:[#allocation5 + $0xd0] sm:$0xff]
        %v521 = vld [vmem:[#allocation5 + $0xd8] sm:$0xff]
        %v522 = vld [vmem:[#allocation5 + $0xe0] sm:$0xff]
        %v523 = vld [vmem:[#allocation5 + $0xe8] sm:$0xff]
        %v524 = vld [vmem:[#allocation5 + $0xf0] sm:$0xff]
        %v525 = vld [vmem:[#allocation5 + $0xf8] sm:$0xff]
        %v526 = vld [vmem:[#allocation5 + $0x100] sm:$0xff]
        %v527 = vld [vmem:[#allocation5 + $0x108] sm:$0xff]
        %v528 = vld [vmem:[#allocation5 + $0x110] sm:$0xff]
        %v529 = vld [vmem:[#allocation5 + $0x118] sm:$0xff]
        %v530 = vld [vmem:[#allocation5 + $0x120] sm:$0xff]
        %v531 = vld [vmem:[#allocation5 + $0x128] sm:$0xff]
        %v532 = vld [vmem:[#allocation5 + $0x130] sm:$0xff]
        %v533 = vld [vmem:[#allocation5 + $0x138] sm:$0xff]
        %v534 = vld [vmem:[#allocation5 + $0x140] sm:$0xff]
        %v535 = vld [vmem:[#allocation5 + $0x148] sm:$0xff]
        %v536 = vld [vmem:[#allocation5 + $0x150] sm:$0xff]
        %v537 = vld [vmem:[#allocation5 + $0x158] sm:$0xff]
        %v538 = vld [vmem:[#allocation5 + $0x160] sm:$0xff]
        %v539 = vld [vmem:[#allocation5 + $0x168] sm:$0xff]
        %v540 = vld [vmem:[#allocation5 + $0x170] sm:$0xff]
        %v541 = vld [vmem:[#allocation5 + $0x178] sm:$0xff]
        %v542 = vld [vmem:[#allocation5 + $0x180] sm:$0xff]
        %v543 = vld [vmem:[#allocation5 + $0x188] sm:$0xff]
        %v544 = vld [vmem:[#allocation5 + $0x190] sm:$0xff]
        %v545 = vld [vmem:[#allocation5 + $0x198] sm:$0xff]
        %v546 = vld [vmem:[#allocation5 + $0x1a0] sm:$0xff]
        %v547 = vld [vmem:[#allocation5 + $0x1a8] sm:$0xff]
        %v548 = vld [vmem:[#allocation5 + $0x1b0] sm:$0xff]
        %v549 = vld [vmem:[#allocation5 + $0x1b8] sm:$0xff]
        %v550 = vld [vmem:[#allocation5 + $0x1c0] sm:$0xff]
        %v551 = vld [vmem:[#allocation5 + $0x1c8] sm:$0xff]
        %v552 = vld [vmem:[#allocation5 + $0x1d0] sm:$0xff]
        %v553 = vld [vmem:[#allocation5 + $0x1d8] sm:$0xff]
        %v554 = vld [vmem:[#allocation5 + $0x1e0] sm:$0xff]
        %v555 = vld [vmem:[#allocation5 + $0x1e8] sm:$0xff]
        %v556 = vld [vmem:[#allocation5 + $0x1f0] sm:$0xff]
        %v557 = vld [vmem:[#allocation5 + $0x1f8] sm:$0xff]
        %v558 = vld [vmem:[#allocation5 + $0x200] sm:$0xff]
        %v559 = vld [vmem:[#allocation5 + $0x208] sm:$0xff]
        %v560 = vld [vmem:[#allocation5 + $0x210] sm:$0xff]
        %v561 = vld [vmem:[#allocation5 + $0x218] sm:$0xff]
        %v562 = vld [vmem:[#allocation5 + $0x220] sm:$0xff]
        %v563 = vld [vmem:[#allocation5 + $0x228] sm:$0xff]
        %v564 = vld [vmem:[#allocation5 + $0x230] sm:$0xff]
        %v565 = vld [vmem:[#allocation5 + $0x238] sm:$0xff]
        %v566 = vld [vmem:[#allocation5 + $0x240] sm:$0xff]
        %v567 = vld [vmem:[#allocation5 + $0x248] sm:$0xff]
        %v568 = vld [vmem:[#allocation5 + $0x250] sm:$0xff]
        %v569 = vld [vmem:[#allocation5 + $0x258] sm:$0xff]
        %v570 = vld [vmem:[#allocation5 + $0x260] sm:$0xff]
        %v571 = vld [vmem:[#allocation5 + $0x268] sm:$0xff]
        %v572 = vld [vmem:[#allocation5 + $0x270] sm:$0xff]
        %v573 = vld [vmem:[#allocation5 + $0x278] sm:$0xff]
        %v574 = vld [vmem:[#allocation5 + $0x280] sm:$0xff]
        %v575 = vld [vmem:[#allocation5 + $0x288] sm:$0xff]
        %v576 = vld [vmem:[#allocation5 + $0x290] sm:$0xff]
        %v577 = vld [vmem:[#allocation5 + $0x298] sm:$0xff]
        %v578 = vld [vmem:[#allocation5 + $0x2a0] sm:$0xff]
        %v579 = vld [vmem:[#allocation5 + $0x2a8] sm:$0xff]
        %v580 = vld [vmem:[#allocation5 + $0x2b0] sm:$0xff]
        %v581 = vld [vmem:[#allocation5 + $0x2b8] sm:$0xff]
        %v582 = vld [vmem:[#allocation5 + $0x2c0] sm:$0xff]
        %v583 = vld [vmem:[#allocation5 + $0x2c8] sm:$0xff]
        %v584 = vld [vmem:[#allocation5 + $0x2d0] sm:$0xff]
        %v585 = vld [vmem:[#allocation5 + $0x2d8] sm:$0xff]
        %v586 = vld [vmem:[#allocation5 + $0x2e0] sm:$0xff]
        %v587 = vld [vmem:[#allocation5 + $0x2e8] sm:$0xff]
        %v588 = vld [vmem:[#allocation5 + $0x2f0] sm:$0xff]
        %v589 = vld [vmem:[#allocation5 + $0x2f8] sm:$0xff]
        %v590 = vld [vmem:[#allocation5 + $0x300] sm:$0xff]
        %v591 = vld [vmem:[#allocation5 + $0x308] sm:$0xff]
        %v592 = vld [vmem:[#allocation5 + $0x310] sm:$0xff]
        %v593 = vld [vmem:[#allocation5 + $0x318] sm:$0xff]
        %v594 = vld [vmem:[#allocation5 + $0x320] sm:$0xff]
        %v595 = vld [vmem:[#allocation5 + $0x328] sm:$0xff]
        %v596 = vld [vmem:[#allocation5 + $0x330] sm:$0xff]
        %v597 = vld [vmem:[#allocation5 + $0x338] sm:$0xff]
        %v598 = vld [vmem:[#allocation5 + $0x340] sm:$0xff]
        %v599 = vld [vmem:[#allocation5 + $0x348] sm:$0xff]
        %v600 = vld [vmem:[#allocation5 + $0x350] sm:$0xff]
        %v601 = vld [vmem:[#allocation5 + $0x358] sm:$0xff]
        %v602 = vld [vmem:[#allocation5 + $0x360] sm:$0xff]
        %v603 = vld [vmem:[#allocation5 + $0x368] sm:$0xff]
        %v604 = vld [vmem:[#allocation5 + $0x370] sm:$0xff]
        %v605 = vld [vmem:[#allocation5 + $0x378] sm:$0xff]
        %v606 = vld [vmem:[%s2] sm:$0x3]
        %v608 = vlaneseq
        %v609 = vshrl.u32 %v608, 7
        %v610 = vsub.s32 0, %v609
        %v611 = vrot.slane %v606, %v610
        %v612 = vlaneseq
        %v613 = vshrl.u32 %v612, 7
        %v614 = vsub.s32 1, %v613
        %v615 = vrot.slane %v606, %v614
        %v730 = vunpack.c.l.b16 %v494
        %v731 = vunpack.c.h.b16 %v494
        %v732 = vunpack.c.l.b16 %v495
        %v733 = vunpack.c.h.b16 %v495
        %v734 = vunpack.c.l.b16 %v496
        %v735 = vunpack.c.h.b16 %v496
        %v736 = vunpack.c.l.b16 %v497
        %v737 = vunpack.c.h.b16 %v497
        %v738 = vunpack.c.l.b16 %v498
        %v739 = vunpack.c.h.b16 %v498
        %v740 = vunpack.c.l.b16 %v499
        %v741 = vunpack.c.h.b16 %v499
        %v742 = vunpack.c.l.b16 %v500
        %v743 = vunpack.c.h.b16 %v500
        %v744 = vunpack.c.l.b16 %v501
        %v745 = vunpack.c.h.b16 %v501
        %v746 = vunpack.c.l.b16 %v502
        %v747 = vunpack.c.h.b16 %v502
        %v748 = vunpack.c.l.b16 %v503
        %v749 = vunpack.c.h.b16 %v503
        %v750 = vunpack.c.l.b16 %v504
        %v751 = vunpack.c.h.b16 %v504
        %v752 = vunpack.c.l.b16 %v505
        %v753 = vunpack.c.h.b16 %v505
        %v754 = vunpack.c.l.b16 %v506
        %v755 = vunpack.c.h.b16 %v506
        %v756 = vunpack.c.l.b16 %v507
        %v757 = vunpack.c.h.b16 %v507
        %v758 = vunpack.c.l.b16 %v508
        %v759 = vunpack.c.h.b16 %v508
        %v760 = vunpack.c.l.b16 %v509
        %v761 = vunpack.c.h.b16 %v509
        %v762 = vunpack.c.l.b16 %v510
        %v763 = vunpack.c.h.b16 %v510
        %v764 = vunpack.c.l.b16 %v511
        %v765 = vunpack.c.h.b16 %v511
        %v766 = vunpack.c.l.b16 %v512
        %v767 = vunpack.c.h.b16 %v512
        %v768 = vunpack.c.l.b16 %v513
        %v769 = vunpack.c.h.b16 %v513
        %v770 = vunpack.c.l.b16 %v514
        %v771 = vunpack.c.h.b16 %v514
        %v772 = vunpack.c.l.b16 %v515
        %v773 = vunpack.c.h.b16 %v515
        %v774 = vunpack.c.l.b16 %v516
        %v775 = vunpack.c.h.b16 %v516
        %v776 = vunpack.c.l.b16 %v517
        %v777 = vunpack.c.h.b16 %v517
        %v778 = vunpack.c.l.b16 %v518
        %v779 = vunpack.c.h.b16 %v518
        %v780 = vunpack.c.l.b16 %v519
        %v781 = vunpack.c.h.b16 %v519
        %v782 = vunpack.c.l.b16 %v520
        %v783 = vunpack.c.h.b16 %v520
        %v784 = vunpack.c.l.b16 %v521
        %v785 = vunpack.c.h.b16 %v521
        %v786 = vunpack.c.l.b16 %v522
        %v787 = vunpack.c.h.b16 %v522
        %v788 = vunpack.c.l.b16 %v523
        %v789 = vunpack.c.h.b16 %v523
        %v790 = vunpack.c.l.b16 %v524
        %v791 = vunpack.c.h.b16 %v524
        %v792 = vunpack.c.l.b16 %v525
        %v793 = vunpack.c.h.b16 %v525
        %v794 = vunpack.c.l.b16 %v526
        %v795 = vunpack.c.h.b16 %v526
        %v796 = vunpack.c.l.b16 %v527
        %v797 = vunpack.c.h.b16 %v527
        %v798 = vunpack.c.l.b16 %v528
        %v799 = vunpack.c.h.b16 %v528
        %v800 = vunpack.c.l.b16 %v529
        %v801 = vunpack.c.h.b16 %v529
        %v802 = vunpack.c.l.b16 %v530
        %v803 = vunpack.c.h.b16 %v530
        %v804 = vunpack.c.l.b16 %v531
        %v805 = vunpack.c.h.b16 %v531
        %v806 = vunpack.c.l.b16 %v532
        %v807 = vunpack.c.h.b16 %v532
        %v808 = vunpack.c.l.b16 %v533
        %v809 = vunpack.c.h.b16 %v533
        %v810 = vunpack.c.l.b16 %v534
        %v811 = vunpack.c.h.b16 %v534
        %v812 = vunpack.c.l.b16 %v535
        %v813 = vunpack.c.h.b16 %v535
        %v814 = vunpack.c.l.b16 %v536
        %v815 = vunpack.c.h.b16 %v536
        %v816 = vunpack.c.l.b16 %v537
        %v817 = vunpack.c.h.b16 %v537
        %v818 = vunpack.c.l.b16 %v538
        %v819 = vunpack.c.h.b16 %v538
        %v820 = vunpack.c.l.b16 %v539
        %v821 = vunpack.c.h.b16 %v539
        %v822 = vunpack.c.l.b16 %v540
        %v823 = vunpack.c.h.b16 %v540
        %v824 = vunpack.c.l.b16 %v541
        %v825 = vunpack.c.h.b16 %v541
        %v826 = vunpack.c.l.b16 %v542
        %v827 = vunpack.c.h.b16 %v542
        %v828 = vunpack.c.l.b16 %v543
        %v829 = vunpack.c.h.b16 %v543
        %v830 = vunpack.c.l.b16 %v544
        %v831 = vunpack.c.h.b16 %v544
        %v832 = vunpack.c.l.b16 %v545
        %v833 = vunpack.c.h.b16 %v545
        %v834 = vunpack.c.l.b16 %v546
        %v835 = vunpack.c.h.b16 %v546
        %v836 = vunpack.c.l.b16 %v547
        %v837 = vunpack.c.h.b16 %v547
        %v838 = vunpack.c.l.b16 %v548
        %v839 = vunpack.c.h.b16 %v548
        %v840 = vunpack.c.l.b16 %v549
        %v841 = vunpack.c.h.b16 %v549
        %v842 = vunpack.c.l.b16 %v550
        %v843 = vunpack.c.h.b16 %v550
        %v844 = vunpack.c.l.b16 %v551
        %v845 = vunpack.c.h.b16 %v551
        %v846 = vunpack.c.l.b16 %v552
        %v847 = vunpack.c.h.b16 %v552
        %v848 = vunpack.c.l.b16 %v553
        %v849 = vunpack.c.h.b16 %v553
        %v850 = vunpack.c.l.b16 %v554
        %v851 = vunpack.c.h.b16 %v554
        %v852 = vunpack.c.l.b16 %v555
        %v853 = vunpack.c.h.b16 %v555
        %v854 = vunpack.c.l.b16 %v556
        %v855 = vunpack.c.h.b16 %v556
        %v856 = vunpack.c.l.b16 %v557
        %v857 = vunpack.c.h.b16 %v557
        %v858 = vunpack.c.l.b16 %v558
        %v859 = vunpack.c.h.b16 %v558
        %v860 = vunpack.c.l.b16 %v559
        %v861 = vunpack.c.h.b16 %v559
        %v862 = vunpack.c.l.b16 %v560
        %v863 = vunpack.c.h.b16 %v560
        %v864 = vunpack.c.l.b16 %v561
        %v865 = vunpack.c.h.b16 %v561
        %v866 = vunpack.c.l.b16 %v562
        %v867 = vunpack.c.h.b16 %v562
        %v868 = vunpack.c.l.b16 %v563
        %v869 = vunpack.c.h.b16 %v563
        %v870 = vunpack.c.l.b16 %v564
        %v871 = vunpack.c.h.b16 %v564
        %v872 = vunpack.c.l.b16 %v565
        %v873 = vunpack.c.h.b16 %v565
        %v874 = vunpack.c.l.b16 %v566
        %v875 = vunpack.c.h.b16 %v566
        %v876 = vunpack.c.l.b16 %v567
        %v877 = vunpack.c.h.b16 %v567
        %v878 = vunpack.c.l.b16 %v568
        %v879 = vunpack.c.h.b16 %v568
        %v880 = vunpack.c.l.b16 %v569
        %v881 = vunpack.c.h.b16 %v569
        %v882 = vunpack.c.l.b16 %v570
        %v883 = vunpack.c.h.b16 %v570
        %v884 = vunpack.c.l.b16 %v571
        %v885 = vunpack.c.h.b16 %v571
        %v886 = vunpack.c.l.b16 %v572
        %v887 = vunpack.c.h.b16 %v572
        %v888 = vunpack.c.l.b16 %v573
        %v889 = vunpack.c.h.b16 %v573
        %v890 = vunpack.c.l.b16 %v574
        %v891 = vunpack.c.h.b16 %v574
        %v892 = vunpack.c.l.b16 %v575
        %v893 = vunpack.c.h.b16 %v575
        %v894 = vunpack.c.l.b16 %v576
        %v895 = vunpack.c.h.b16 %v576
        %v896 = vunpack.c.l.b16 %v577
        %v897 = vunpack.c.h.b16 %v577
        %v898 = vunpack.c.l.b16 %v578
        %v899 = vunpack.c.h.b16 %v578
        %v900 = vunpack.c.l.b16 %v579
        %v901 = vunpack.c.h.b16 %v579
        %v902 = vunpack.c.l.b16 %v580
        %v903 = vunpack.c.h.b16 %v580
        %v904 = vunpack.c.l.b16 %v581
        %v905 = vunpack.c.h.b16 %v581
        %v906 = vunpack.c.l.b16 %v582
        %v907 = vunpack.c.h.b16 %v582
        %v908 = vunpack.c.l.b16 %v583
        %v909 = vunpack.c.h.b16 %v583
        %v910 = vunpack.c.l.b16 %v584
        %v911 = vunpack.c.h.b16 %v584
        %v912 = vunpack.c.l.b16 %v585
        %v913 = vunpack.c.h.b16 %v585
        %v914 = vunpack.c.l.b16 %v586
        %v915 = vunpack.c.h.b16 %v586
        %v916 = vunpack.c.l.b16 %v587
        %v917 = vunpack.c.h.b16 %v587
        %v918 = vunpack.c.l.b16 %v588
        %v919 = vunpack.c.h.b16 %v588
        %v920 = vunpack.c.l.b16 %v589
        %v921 = vunpack.c.h.b16 %v589
        %v922 = vunpack.c.l.b16 %v590
        %v923 = vunpack.c.h.b16 %v590
        %v924 = vunpack.c.l.b16 %v591
        %v925 = vunpack.c.h.b16 %v591
        %v926 = vunpack.c.l.b16 %v592
        %v927 = vunpack.c.h.b16 %v592
        %v928 = vunpack.c.l.b16 %v593
        %v929 = vunpack.c.h.b16 %v593
        %v930 = vunpack.c.l.b16 %v594
        %v931 = vunpack.c.h.b16 %v594
        %v932 = vunpack.c.l.b16 %v595
        %v933 = vunpack.c.h.b16 %v595
        %v934 = vunpack.c.l.b16 %v596
        %v935 = vunpack.c.h.b16 %v596
        %v936 = vunpack.c.l.b16 %v597
        %v937 = vunpack.c.h.b16 %v597
        %v938 = vunpack.c.l.b16 %v598
        %v939 = vunpack.c.h.b16 %v598
        %v940 = vunpack.c.l.b16 %v599
        %v941 = vunpack.c.h.b16 %v599
        %v942 = vunpack.c.l.b16 %v600
        %v943 = vunpack.c.h.b16 %v600
        %v944 = vunpack.c.l.b16 %v601
        %v945 = vunpack.c.h.b16 %v601
        %v946 = vunpack.c.l.b16 %v602
        %v947 = vunpack.c.h.b16 %v602
        %v948 = vunpack.c.l.b16 %v603
        %v949 = vunpack.c.h.b16 %v603
        %v950 = vunpack.c.l.b16 %v604
        %v951 = vunpack.c.h.b16 %v604
        %v952 = vunpack.c.l.b16 %v605
        %v953 = vunpack.c.h.b16 %v605
        %v954 = vpack.c.b16 %v732, %v730
        %v955 = vpack.c.b16 %v733, %v731
        %v956 = vpack.c.b16 %v736, %v734
        %v957 = vpack.c.b16 %v737, %v735
        %v958 = vpack.c.b16 %v740, %v738
        %v959 = vpack.c.b16 %v741, %v739
        %v960 = vpack.c.b16 %v744, %v742
        %v961 = vpack.c.b16 %v745, %v743
        %v962 = vpack.c.b16 %v748, %v746
        %v963 = vpack.c.b16 %v749, %v747
        %v964 = vpack.c.b16 %v752, %v750
        %v965 = vpack.c.b16 %v753, %v751
        %v966 = vpack.c.b16 %v756, %v754
        %v967 = vpack.c.b16 %v757, %v755
        %v968 = vpack.c.b16 %v760, %v758
        %v969 = vpack.c.b16 %v761, %v759
        %v970 = vpack.c.b16 %v764, %v762
        %v971 = vpack.c.b16 %v765, %v763
        %v972 = vpack.c.b16 %v768, %v766
        %v973 = vpack.c.b16 %v769, %v767
        %v974 = vpack.c.b16 %v772, %v770
        %v975 = vpack.c.b16 %v773, %v771
        %v976 = vpack.c.b16 %v776, %v774
        %v977 = vpack.c.b16 %v777, %v775
        %v978 = vpack.c.b16 %v780, %v778
        %v979 = vpack.c.b16 %v781, %v779
        %v980 = vpack.c.b16 %v784, %v782
        %v981 = vpack.c.b16 %v785, %v783
        %v982 = vpack.c.b16 %v788, %v786
        %v983 = vpack.c.b16 %v789, %v787
        %v984 = vpack.c.b16 %v792, %v790
        %v985 = vpack.c.b16 %v793, %v791
        %v986 = vpack.c.b16 %v796, %v794
        %v987 = vpack.c.b16 %v797, %v795
        %v988 = vpack.c.b16 %v800, %v798
        %v989 = vpack.c.b16 %v801, %v799
        %v990 = vpack.c.b16 %v804, %v802
        %v991 = vpack.c.b16 %v805, %v803
        %v992 = vpack.c.b16 %v808, %v806
        %v993 = vpack.c.b16 %v809, %v807
        %v994 = vpack.c.b16 %v812, %v810
        %v995 = vpack.c.b16 %v813, %v811
        %v996 = vpack.c.b16 %v816, %v814
        %v997 = vpack.c.b16 %v817, %v815
        %v998 = vpack.c.b16 %v820, %v818
        %v999 = vpack.c.b16 %v821, %v819
        %v1000 = vpack.c.b16 %v824, %v822
        %v1001 = vpack.c.b16 %v825, %v823
        %v1002 = vpack.c.b16 %v828, %v826
        %v1003 = vpack.c.b16 %v829, %v827
        %v1004 = vpack.c.b16 %v832, %v830
        %v1005 = vpack.c.b16 %v833, %v831
        %v1006 = vpack.c.b16 %v836, %v834
        %v1007 = vpack.c.b16 %v837, %v835
        %v1008 = vpack.c.b16 %v840, %v838
        %v1009 = vpack.c.b16 %v841, %v839
        %v1010 = vpack.c.b16 %v844, %v842
        %v1011 = vpack.c.b16 %v845, %v843
        %v1012 = vpack.c.b16 %v848, %v846
        %v1013 = vpack.c.b16 %v849, %v847
        %v1014 = vpack.c.b16 %v852, %v850
        %v1015 = vpack.c.b16 %v853, %v851
        %v1016 = vpack.c.b16 %v856, %v854
        %v1017 = vpack.c.b16 %v857, %v855
        %v1018 = vpack.c.b16 %v860, %v858
        %v1019 = vpack.c.b16 %v861, %v859
        %v1020 = vpack.c.b16 %v864, %v862
        %v1021 = vpack.c.b16 %v865, %v863
        %v1022 = vpack.c.b16 %v868, %v866
        %v1023 = vpack.c.b16 %v869, %v867
        %v1024 = vpack.c.b16 %v872, %v870
        %v1025 = vpack.c.b16 %v873, %v871
        %v1026 = vpack.c.b16 %v876, %v874
        %v1027 = vpack.c.b16 %v877, %v875
        %v1028 = vpack.c.b16 %v880, %v878
        %v1029 = vpack.c.b16 %v881, %v879
        %v1030 = vpack.c.b16 %v884, %v882
        %v1031 = vpack.c.b16 %v885, %v883
        %v1032 = vpack.c.b16 %v888, %v886
        %v1033 = vpack.c.b16 %v889, %v887
        %v1034 = vpack.c.b16 %v892, %v890
        %v1035 = vpack.c.b16 %v893, %v891
        %v1036 = vpack.c.b16 %v896, %v894
        %v1037 = vpack.c.b16 %v897, %v895
        %v1038 = vpack.c.b16 %v900, %v898
        %v1039 = vpack.c.b16 %v901, %v899
        %v1040 = vpack.c.b16 %v904, %v902
        %v1041 = vpack.c.b16 %v905, %v903
        %v1042 = vpack.c.b16 %v908, %v906
        %v1043 = vpack.c.b16 %v909, %v907
        %v1044 = vpack.c.b16 %v912, %v910
        %v1045 = vpack.c.b16 %v913, %v911
        %v1046 = vpack.c.b16 %v916, %v914
        %v1047 = vpack.c.b16 %v917, %v915
        %v1048 = vpack.c.b16 %v920, %v918
        %v1049 = vpack.c.b16 %v921, %v919
        %v1050 = vpack.c.b16 %v924, %v922
        %v1051 = vpack.c.b16 %v925, %v923
        %v1052 = vpack.c.b16 %v928, %v926
        %v1053 = vpack.c.b16 %v929, %v927
        %v1054 = vpack.c.b16 %v932, %v930
        %v1055 = vpack.c.b16 %v933, %v931
        %v1056 = vpack.c.b16 %v936, %v934
        %v1057 = vpack.c.b16 %v937, %v935
        %v1058 = vpack.c.b16 %v940, %v938
        %v1059 = vpack.c.b16 %v941, %v939
        %v1060 = vpack.c.b16 %v944, %v942
        %v1061 = vpack.c.b16 %v945, %v943
        %v1062 = vpack.c.b16 %v948, %v946
        %v1063 = vpack.c.b16 %v949, %v947
        %v1064 = vpack.c.b16 %v952, %v950
        %v1065 = vpack.c.b16 %v953, %v951
        %1178 = vmatprep.subr.bf16.mxu0 %v955
        %1179 = vmatpush1.bf16.msra.mxu0 %v954
        %1180 = vmatprep.subr.bf16.mxu0 %v957
        %1181 = vmatpush1.bf16.msra.mxu0 %v956
        %1182 = vmatprep.subr.bf16.mxu0 %v959
        %1183 = vmatpush1.bf16.msra.mxu0 %v958
        %1184 = vmatprep.subr.bf16.mxu0 %v961
        %1185 = vmatpush1.bf16.msra.mxu0 %v960
        %1186 = vmatprep.subr.bf16.mxu0 %v963
        %1187 = vmatpush1.bf16.msra.mxu0 %v962
        %1188 = vmatprep.subr.bf16.mxu0 %v965
        %1189 = vmatpush1.bf16.msra.mxu0 %v964
        %1190 = vmatprep.subr.bf16.mxu0 %v967
        %1191 = vmatpush1.bf16.msra.mxu0 %v966
        %1192 = vmatprep.subr.bf16.mxu0 %v969
        %1193 = vmatpush1.bf16.msra.mxu0 %v968
        %1194 = vmatprep.subr.bf16.mxu0 %v971
        %1195 = vmatpush1.bf16.msra.mxu0 %v970
        %1196 = vmatprep.subr.bf16.mxu0 %v973
        %1197 = vmatpush1.bf16.msra.mxu0 %v972
        %1198 = vmatprep.subr.bf16.mxu0 %v975
        %1199 = vmatpush1.bf16.msra.mxu0 %v974
        %1200 = vmatprep.subr.bf16.mxu0 %v977
        %1201 = vmatpush1.bf16.msra.mxu0 %v976
        %1202 = vmatprep.subr.bf16.mxu0 %v979
        %1203 = vmatpush1.bf16.msra.mxu0 %v978
        %1204 = vmatprep.subr.bf16.mxu0 %v981
        %1205 = vmatpush1.bf16.msra.mxu0 %v980
        %1206 = vmatprep.subr.bf16.mxu0 %v983
        %1207 = vmatpush1.bf16.msra.mxu0 %v982
        %1208 = vmatprep.subr.bf16.mxu0 %v985
        %1209 = vmatpush1.bf16.msra.mxu0 %v984
        %1210 = vmatprep.mubr.bf16.mxu0 %v467
        %1211 = vmatmul.mubr.bf16.gmra.mrb[0].mxu0 %v466
        %v1212 = vpop.f32.mrb[0].mxu0
        %v1213 = vadd.f32 %v611, %v1212
        %v1214 = vpop.f32.mrb[0].mxu0
        %v1215 = vadd.f32 %v615, %v1214
        %v1216 = vpop.f32.mrb[0].mxu0
        %v1217 = vadd.f32 %v611, %v1216
        %v1218 = vpop.f32.mrb[0].mxu0
        %v1219 = vadd.f32 %v615, %v1218
        %1220 = vmatprep.mubr.bf16.mxu0 %v474
        %1221 = vmatmul.mubr.bf16.gmra.mrb[0].mxu0 %v473
        %v1222 = vpop.f32.mrb[0].mxu0
        %v1223 = vadd.f32 %v611, %v1222
        %v1224 = vpop.f32.mrb[0].mxu0
        %v1225 = vadd.f32 %v615, %v1224
        %v1226 = vpop.f32.mrb[0].mxu0
        %v1227 = vadd.f32 %v611, %v1226
        %v1228 = vpop.f32.mrb[0].mxu0
        %v1229 = vadd.f32 %v615, %v1228
        %1230 = vmatprep.mubr.bf16.mxu0 %v481
        %1231 = vmatmul.mubr.bf16.gmra.mrb[0].mxu0 %v480
        %v1232 = vpop.f32.mrb[0].mxu0
        %v1233 = vadd.f32 %v611, %v1232
        %v1234 = vpop.f32.mrb[0].mxu0
        %v1235 = vadd.f32 %v615, %v1234
        %v1236 = vpop.f32.mrb[0].mxu0
        %v1237 = vadd.f32 %v611, %v1236
        %v1238 = vpop.f32.mrb[0].mxu0
        %v1239 = vadd.f32 %v615, %v1238
        %1240 = vmatprep.mubr.bf16.mxu0 %v488
        %1241 = vmatmul.mubr.bf16.gmra.mrb[0].mxu0 %v487
        %v1242 = vpop.f32.mrb[0].mxu0
        %v1243 = vadd.f32 %v611, %v1242
        %v1244 = vpop.f32.mrb[0].mxu0
        %v1245 = vadd.f32 %v615, %v1244
        %v1246 = vpop.f32.mrb[0].mxu0
        %v1247 = vadd.f32 %v611, %v1246
        %v1248 = vpop.f32.mrb[0].mxu0
        %v1249 = vadd.f32 %v615, %v1248
        %1250 = vdwg.mxu0
        %1251 = vmatprep.subr.bf16.mxu0 %v987
        %1252 = vmatpush1.bf16.msra.mxu0 %v986
        %1253 = vmatprep.subr.bf16.mxu0 %v989
        %1254 = vmatpush1.bf16.msra.mxu0 %v988
        %1255 = vmatprep.subr.bf16.mxu0 %v991
        %1256 = vmatpush1.bf16.msra.mxu0 %v990
        %1257 = vmatprep.subr.bf16.mxu0 %v993
        %1258 = vmatpush1.bf16.msra.mxu0 %v992
        %1259 = vmatprep.subr.bf16.mxu0 %v995
        %1260 = vmatpush1.bf16.msra.mxu0 %v994
        %1261 = vmatprep.subr.bf16.mxu0 %v997
        %1262 = vmatpush1.bf16.msra.mxu0 %v996
        %1263 = vmatprep.subr.bf16.mxu0 %v999
        %1264 = vmatpush1.bf16.msra.mxu0 %v998
        %1265 = vmatprep.subr.bf16.mxu0 %v1001
        %1266 = vmatpush1.bf16.msra.mxu0 %v1000
        %1267 = vmatprep.subr.bf16.mxu0 %v1003
        %1268 = vmatpush1.bf16.msra.mxu0 %v1002
        %1269 = vmatprep.subr.bf16.mxu0 %v1005
        %1270 = vmatpush1.bf16.msra.mxu0 %v1004
        %1271 = vmatprep.subr.bf16.mxu0 %v1007
        %1272 = vmatpush1.bf16.msra.mxu0 %v1006
        %1273 = vmatprep.subr.bf16.mxu0 %v1009
        %1274 = vmatpush1.bf16.msra.mxu0 %v1008
        %1275 = vmatprep.subr.bf16.mxu0 %v1011
        %1276 = vmatpush1.bf16.msra.mxu0 %v1010
        %1277 = vmatprep.subr.bf16.mxu0 %v1013
        %1278 = vmatpush1.bf16.msra.mxu0 %v1012
        %1279 = vmatprep.subr.bf16.mxu0 %v1015
        %1280 = vmatpush1.bf16.msra.mxu0 %v1014
        %1281 = vmatprep.subr.bf16.mxu0 %v1017
        %1282 = vmatpush1.bf16.msra.mxu0 %v1016
        %1283 = vmatprep.mubr.bf16.mxu0 %v469
        %1284 = vmatmul.mubr.bf16.gmra.mrb[0].mxu0 %v468
        %v1285 = vpop.f32.mrb[0].mxu0
        %v1286 = vadd.f32 %v1213, %v1285
        %v1287 = vpop.f32.mrb[0].mxu0
        %v1288 = vadd.f32 %v1215, %v1287
        %v1289 = vpop.f32.mrb[0].mxu0
        %v1290 = vadd.f32 %v1217, %v1289
        %v1291 = vpop.f32.mrb[0].mxu0
        %v1292 = vadd.f32 %v1219, %v1291
        %1293 = vmatprep.mubr.bf16.mxu0 %v476
        %1294 = vmatmul.mubr.bf16.gmra.mrb[0].mxu0 %v475
        %v1295 = vpop.f32.mrb[0].mxu0
        %v1296 = vadd.f32 %v1223, %v1295
        %v1297 = vpop.f32.mrb[0].mxu0
        %v1298 = vadd.f32 %v1225, %v1297
        %v1299 = vpop.f32.mrb[0].mxu0
        %v1300 = vadd.f32 %v1227, %v1299
        %v1301 = vpop.f32.mrb[0].mxu0
        %v1302 = vadd.f32 %v1229, %v1301
        %1303 = vmatprep.mubr.bf16.mxu0 %v483
        %1304 = vmatmul.mubr.bf16.gmra.mrb[0].mxu0 %v482
        %v1305 = vpop.f32.mrb[0].mxu0
        %v1306 = vadd.f32 %v1233, %v1305
        %v1307 = vpop.f32.mrb[0].mxu0
        %v1308 = vadd.f32 %v1235, %v1307
        %v1309 = vpop.f32.mrb[0].mxu0
        %v1310 = vadd.f32 %v1237, %v1309
        %v1311 = vpop.f32.mrb[0].mxu0
        %v1312 = vadd.f32 %v1239, %v1311
        %1313 = vmatprep.mubr.bf16.mxu0 %v490
        %1314 = vmatmul.mubr.bf16.gmra.mrb[0].mxu0 %v489
        %v1315 = vpop.f32.mrb[0].mxu0
        %v1316 = vadd.f32 %v1243, %v1315
        %v1317 = vpop.f32.mrb[0].mxu0
        %v1318 = vadd.f32 %v1245, %v1317
        %v1319 = vpop.f32.mrb[0].mxu0
        %v1320 = vadd.f32 %v1247, %v1319
        %v1321 = vpop.f32.mrb[0].mxu0
        %v1322 = vadd.f32 %v1249, %v1321
        %1323 = vdwg.mxu0
        %1324 = vmatprep.subr.bf16.mxu0 %v1019
        %1325 = vmatpush1.bf16.msra.mxu0 %v1018
        %1326 = vmatprep.subr.bf16.mxu0 %v1021
        %1327 = vmatpush1.bf16.msra.mxu0 %v1020
        %1328 = vmatprep.subr.bf16.mxu0 %v1023
        %1329 = vmatpush1.bf16.msra.mxu0 %v1022
        %1330 = vmatprep.subr.bf16.mxu0 %v1025
        %1331 = vmatpush1.bf16.msra.mxu0 %v1024
        %1332 = vmatprep.subr.bf16.mxu0 %v1027
        %1333 = vmatpush1.bf16.msra.mxu0 %v1026
        %1334 = vmatprep.subr.bf16.mxu0 %v1029
        %1335 = vmatpush1.bf16.msra.mxu0 %v1028
        %1336 = vmatprep.subr.bf16.mxu0 %v1031
        %1337 = vmatpush1.bf16.msra.mxu0 %v1030
        %1338 = vmatprep.subr.bf16.mxu0 %v1033
        %1339 = vmatpush1.bf16.msra.mxu0 %v1032
        %1340 = vmatprep.subr.bf16.mxu0 %v1035
        %1341 = vmatpush1.bf16.msra.mxu0 %v1034
        %1342 = vmatprep.subr.bf16.mxu0 %v1037
        %1343 = vmatpush1.bf16.msra.mxu0 %v1036
        %1344 = vmatprep.subr.bf16.mxu0 %v1039
        %1345 = vmatpush1.bf16.msra.mxu0 %v1038
        %1346 = vmatprep.subr.bf16.mxu0 %v1041
        %1347 = vmatpush1.bf16.msra.mxu0 %v1040
        %1348 = vmatprep.subr.bf16.mxu0 %v1043
        %1349 = vmatpush1.bf16.msra.mxu0 %v1042
        %1350 = vmatprep.subr.bf16.mxu0 %v1045
        %1351 = vmatpush1.bf16.msra.mxu0 %v1044
        %1352 = vmatprep.subr.bf16.mxu0 %v1047
        %1353 = vmatpush1.bf16.msra.mxu0 %v1046
        %1354 = vmatprep.subr.bf16.mxu0 %v1049
        %1355 = vmatpush1.bf16.msra.mxu0 %v1048
        %1356 = vmatprep.mubr.bf16.mxu0 %v471
        %1357 = vmatmul.mubr.bf16.gmra.mrb[0].mxu0 %v470
        %v1358 = vpop.f32.mrb[0].mxu0
        %v1359 = vadd.f32 %v1286, %v1358
        %v1360 = vpop.f32.mrb[0].mxu0
        %v1361 = vadd.f32 %v1288, %v1360
        %v1362 = vpop.f32.mrb[0].mxu0
        %v1363 = vadd.f32 %v1290, %v1362
        %v1364 = vpop.f32.mrb[0].mxu0
        %v1365 = vadd.f32 %v1292, %v1364
        %1366 = vmatprep.mubr.bf16.mxu0 %v478
        %1367 = vmatmul.mubr.bf16.gmra.mrb[0].mxu0 %v477
        %v1368 = vpop.f32.mrb[0].mxu0
        %v1369 = vadd.f32 %v1296, %v1368
        %v1370 = vpop.f32.mrb[0].mxu0
        %v1371 = vadd.f32 %v1298, %v1370
        %v1372 = vpop.f32.mrb[0].mxu0
        %v1373 = vadd.f32 %v1300, %v1372
        %v1374 = vpop.f32.mrb[0].mxu0
        %v1375 = vadd.f32 %v1302, %v1374
        %1376 = vmatprep.mubr.bf16.mxu0 %v485
        %1377 = vmatmul.mubr.bf16.gmra.mrb[0].mxu0 %v484
        %v1378 = vpop.f32.mrb[0].mxu0
        %v1379 = vadd.f32 %v1306, %v1378
        %v1380 = vpop.f32.mrb[0].mxu0
        %v1381 = vadd.f32 %v1308, %v1380
        %v1382 = vpop.f32.mrb[0].mxu0
        %v1383 = vadd.f32 %v1310, %v1382
        %v1384 = vpop.f32.mrb[0].mxu0
        %v1385 = vadd.f32 %v1312, %v1384
        %1386 = vmatprep.mubr.bf16.mxu0 %v492
        %1387 = vmatmul.mubr.bf16.gmra.mrb[0].mxu0 %v491
        %v1388 = vpop.f32.mrb[0].mxu0
        %v1389 = vadd.f32 %v1316, %v1388
        %v1390 = vpop.f32.mrb[0].mxu0
        %v1391 = vadd.f32 %v1318, %v1390
        %v1392 = vpop.f32.mrb[0].mxu0
        %v1393 = vadd.f32 %v1320, %v1392
        %v1394 = vpop.f32.mrb[0].mxu0
        %v1395 = vadd.f32 %v1322, %v1394
        %1396 = vdwg.mxu0
        %1397 = vmatprep.subr.bf16.mxu0 %v1051
        %1398 = vmatpush1.bf16.msra.mxu0 %v1050
        %1399 = vmatprep.subr.bf16.mxu0 %v1053
        %1400 = vmatpush1.bf16.msra.mxu0 %v1052
        %1401 = vmatprep.subr.bf16.mxu0 %v1055
        %1402 = vmatpush1.bf16.msra.mxu0 %v1054
        %1403 = vmatprep.subr.bf16.mxu0 %v1057
        %1404 = vmatpush1.bf16.msra.mxu0 %v1056
        %1405 = vmatprep.subr.bf16.mxu0 %v1059
        %1406 = vmatpush1.bf16.msra.mxu0 %v1058
        %1407 = vmatprep.subr.bf16.mxu0 %v1061
        %1408 = vmatpush1.bf16.msra.mxu0 %v1060
        %1409 = vmatprep.subr.bf16.mxu0 %v1063
        %1410 = vmatpush1.bf16.msra.mxu0 %v1062
        %1411 = vmatprep.subr.bf16.mxu0 %v1065
        %1412 = vmatpush1.bf16.msra.mxu0 %v1064
        %1413 = vmatprep.subr.bf16.mxu0 0
        %1414 = vmatpush1.bf16.msra.mxu0 0
        %1415 = vmatprep.subr.bf16.mxu0 0
        %1416 = vmatpush1.bf16.msra.mxu0 0
        %1417 = vmatprep.subr.bf16.mxu0 0
        %1418 = vmatpush1.bf16.msra.mxu0 0
        %1419 = vmatprep.subr.bf16.mxu0 0
        %1420 = vmatpush1.bf16.msra.mxu0 0
        %1421 = vmatprep.subr.bf16.mxu0 0
        %1422 = vmatpush1.bf16.msra.mxu0 0
        %1423 = vmatprep.subr.bf16.mxu0 0
        %1424 = vmatpush1.bf16.msra.mxu0 0
        %1425 = vmatprep.subr.bf16.mxu0 0
        %1426 = vmatpush1.bf16.msra.mxu0 0
        %1427 = vmatprep.subr.bf16.mxu0 0
        %1428 = vmatpush1.bf16.msra.mxu0 0
        %1429 = vmatprep.mubr.bf16.mxu0 0
        %1430 = vmatmul.mubr.bf16.gmra.mrb[0].mxu0 %v472
        %v1431 = vpop.f32.mrb[0].mxu0
        %v1432 = vadd.f32 %v1359, %v1431
        %v1433 = vpop.f32.mrb[0].mxu0
        %v1434 = vadd.f32 %v1361, %v1433
        %v1435 = vpop.f32.mrb[0].mxu0
        %v1436 = vadd.f32 %v1363, %v1435
        %v1437 = vpop.f32.mrb[0].mxu0
        %v1438 = vadd.f32 %v1365, %v1437
        %1439 = vmatprep.mubr.bf16.mxu0 0
        %1440 = vmatmul.mubr.bf16.gmra.mrb[0].mxu0 %v479
        %v1441 = vpop.f32.mrb[0].mxu0
        %v1442 = vadd.f32 %v1369, %v1441
        %v1443 = vpop.f32.mrb[0].mxu0
        %v1444 = vadd.f32 %v1371, %v1443
        %v1445 = vpop.f32.mrb[0].mxu0
        %v1446 = vadd.f32 %v1373, %v1445
        %v1447 = vpop.f32.mrb[0].mxu0
        %v1448 = vadd.f32 %v1375, %v1447
        %1449 = vmatprep.mubr.bf16.mxu0 0
        %1450 = vmatmul.mubr.bf16.gmra.mrb[0].mxu0 %v486
        %v1451 = vpop.f32.mrb[0].mxu0
        %v1452 = vadd.f32 %v1379, %v1451
        %v1453 = vpop.f32.mrb[0].mxu0
        %v1454 = vadd.f32 %v1381, %v1453
        %v1455 = vpop.f32.mrb[0].mxu0
        %v1456 = vadd.f32 %v1383, %v1455
        %v1457 = vpop.f32.mrb[0].mxu0
        %v1458 = vadd.f32 %v1385, %v1457
        %1459 = vmatprep.mubr.bf16.mxu0 0
        %1460 = vmatmul.mubr.bf16.gmra.mrb[0].mxu0 %v493
        %v1461 = vpop.f32.mrb[0].mxu0
        %v1462 = vadd.f32 %v1389, %v1461
        %v1463 = vpop.f32.mrb[0].mxu0
        %v1464 = vadd.f32 %v1391, %v1463
        %v1465 = vpop.f32.mrb[0].mxu0
        %v1466 = vadd.f32 %v1393, %v1465
        %v1467 = vpop.f32.mrb[0].mxu0
        %v1468 = vadd.f32 %v1395, %v1467
        %1469 = vdwg.mxu0
        %v1470 = vmax.f32 %v1432, 0.0
        %v1471 = vmax.f32 %v1434, 0.0
        %v1472 = vmax.f32 %v1436, 0.0
        %v1473 = vmax.f32 %v1438, 0.0
        %v1474 = vmax.f32 %v1442, 0.0
        %v1475 = vmax.f32 %v1444, 0.0
        %v1476 = vmax.f32 %v1446, 0.0
        %v1477 = vmax.f32 %v1448, 0.0
        %v1478 = vmax.f32 %v1452, 0.0
        %v1479 = vmax.f32 %v1454, 0.0
        %v1480 = vmax.f32 %v1456, 0.0
        %v1481 = vmax.f32 %v1458, 0.0
        %v1482 = vmax.f32 %v1462, 0.0
        %v1483 = vmax.f32 %v1464, 0.0
        %v1484 = vmax.f32 %v1466, 0.0
        %v1485 = vmax.f32 %v1468, 0.0
        %v1494 = vrot.slane %v1471, 5
        %v1495 = vrot.slane %v1473, 5
        %v1496 = vrot.slane %v1475, 5
        %v1497 = vrot.slane %v1477, 5
        %v1498 = vrot.slane %v1479, 5
        %v1499 = vrot.slane %v1481, 5
        %v1500 = vrot.slane %v1483, 5
        %v1501 = vrot.slane %v1485, 5
        %vm1510 = vcmask 1042432
        %v1511 = vsel %vm1510, 0.0, %v1494
        %v1512 = vsel %vm1510, 0.0, %v1495
        %v1513 = vsel %vm1510, 0.0, %v1496
        %v1514 = vsel %vm1510, 0.0, %v1497
        %v1515 = vsel %vm1510, 0.0, %v1498
        %v1516 = vsel %vm1510, 0.0, %v1499
        %v1517 = vsel %vm1510, 0.0, %v1500
        %v1518 = vsel %vm1510, 0.0, %v1501
        %v1519 = vsel %vm1510, %v1494, 0.0
        %v1520 = vsel %vm1510, %v1495, 0.0
        %v1521 = vsel %vm1510, %v1496, 0.0
        %v1522 = vsel %vm1510, %v1497, 0.0
        %v1523 = vsel %vm1510, %v1498, 0.0
        %v1524 = vsel %vm1510, %v1499, 0.0
        %v1525 = vsel %vm1510, %v1500, 0.0
        %v1526 = vsel %vm1510, %v1501, 0.0
        %v1527 = vpack.c.bf16 %v1512, %v1511
        %v1528 = vpack.c.bf16 %v1514, %v1513
        %v1529 = vpack.c.bf16 %v1516, %v1515
        %v1530 = vpack.c.bf16 %v1518, %v1517
        %vm1547 = vcmask 1046528
        %v1548 = vrot.slane %v1511, 1
        %v1549 = vrot.slane %v1519, 1
        %v1550 = vsel %vm1547, %v1548, %v1549
        %v1551 = vrot.slane %v1512, 1
        %v1552 = vrot.slane %v1520, 1
        %v1553 = vsel %vm1547, %v1551, %v1552
        %v1554 = vrot.slane %v1513, 1
        %v1555 = vrot.slane %v1521, 1
        %v1556 = vsel %vm1547, %v1554, %v1555
        %v1557 = vrot.slane %v1514, 1
        %v1558 = vrot.slane %v1522, 1
        %v1559 = vsel %vm1547, %v1557, %v1558
        %v1560 = vrot.slane %v1515, 1
        %v1561 = vrot.slane %v1523, 1
        %v1562 = vsel %vm1547, %v1560, %v1561
        %v1563 = vrot.slane %v1516, 1
        %v1564 = vrot.slane %v1524, 1
        %v1565 = vsel %vm1547, %v1563, %v1564
        %v1566 = vrot.slane %v1517, 1
        %v1567 = vrot.slane %v1525, 1
        %v1568 = vsel %vm1547, %v1566, %v1567
        %v1569 = vrot.slane %v1518, 1
        %v1570 = vrot.slane %v1526, 1
        %v1571 = vsel %vm1547, %v1569, %v1570
        %v1580 = vpack.c.bf16 %v1553, %v1550
        %v1581 = vpack.c.bf16 %v1559, %v1556
        %v1582 = vpack.c.bf16 %v1565, %v1562
        %v1583 = vpack.c.bf16 %v1571, %v1568
        %vm1584 = vcmask 1045504
        %v1585 = vrot.slane %v1511, 2
        %v1586 = vrot.slane %v1519, 2
        %v1587 = vsel %vm1584, %v1585, %v1586
        %v1588 = vrot.slane %v1512, 2
        %v1589 = vrot.slane %v1520, 2
        %v1590 = vsel %vm1584, %v1588, %v1589
        %v1591 = vrot.slane %v1513, 2
        %v1592 = vrot.slane %v1521, 2
        %v1593 = vsel %vm1584, %v1591, %v1592
        %v1594 = vrot.slane %v1514, 2
        %v1595 = vrot.slane %v1522, 2
        %v1596 = vsel %vm1584, %v1594, %v1595
        %v1597 = vrot.slane %v1515, 2
        %v1598 = vrot.slane %v1523, 2
        %v1599 = vsel %vm1584, %v1597, %v1598
        %v1600 = vrot.slane %v1516, 2
        %v1601 = vrot.slane %v1524, 2
        %v1602 = vsel %vm1584, %v1600, %v1601
        %v1603 = vrot.slane %v1517, 2
        %v1604 = vrot.slane %v1525, 2
        %v1605 = vsel %vm1584, %v1603, %v1604
        %v1606 = vrot.slane %v1518, 2
        %v1607 = vrot.slane %v1526, 2
        %v1608 = vsel %vm1584, %v1606, %v1607
        %v1617 = vpack.c.bf16 %v1590, %v1587
        %v1618 = vpack.c.bf16 %v1596, %v1593
        %v1619 = vpack.c.bf16 %v1602, %v1599
        %v1620 = vpack.c.bf16 %v1608, %v1605
        %vm1621 = vcmask 1044480
        %v1622 = vrot.slane %v1511, 3
        %v1623 = vrot.slane %v1519, 3
        %v1624 = vsel %vm1621, %v1622, %v1623
        %v1625 = vrot.slane %v1512, 3
        %v1626 = vrot.slane %v1520, 3
        %v1627 = vsel %vm1621, %v1625, %v1626
        %v1628 = vrot.slane %v1513, 3
        %v1629 = vrot.slane %v1521, 3
        %v1630 = vsel %vm1621, %v1628, %v1629
        %v1631 = vrot.slane %v1514, 3
        %v1632 = vrot.slane %v1522, 3
        %v1633 = vsel %vm1621, %v1631, %v1632
        %v1634 = vrot.slane %v1515, 3
        %v1635 = vrot.slane %v1523, 3
        %v1636 = vsel %vm1621, %v1634, %v1635
        %v1637 = vrot.slane %v1516, 3
        %v1638 = vrot.slane %v1524, 3
        %v1639 = vsel %vm1621, %v1637, %v1638
        %v1640 = vrot.slane %v1517, 3
        %v1641 = vrot.slane %v1525, 3
        %v1642 = vsel %vm1621, %v1640, %v1641
        %v1643 = vrot.slane %v1518, 3
        %v1644 = vrot.slane %v1526, 3
        %v1645 = vsel %vm1621, %v1643, %v1644
        %v1654 = vpack.c.bf16 %v1627, %v1624
        %v1655 = vpack.c.bf16 %v1633, %v1630
        %v1656 = vpack.c.bf16 %v1639, %v1636
        %v1657 = vpack.c.bf16 %v1645, %v1642
        %vm1658 = vcmask 1043456
        %v1659 = vrot.slane %v1511, 4
        %v1660 = vrot.slane %v1519, 4
        %v1661 = vsel %vm1658, %v1659, %v1660
        %v1662 = vrot.slane %v1512, 4
        %v1663 = vrot.slane %v1520, 4
        %v1664 = vsel %vm1658, %v1662, %v1663
        %v1665 = vrot.slane %v1513, 4
        %v1666 = vrot.slane %v1521, 4
        %v1667 = vsel %vm1658, %v1665, %v1666
        %v1668 = vrot.slane %v1514, 4
        %v1669 = vrot.slane %v1522, 4
        %v1670 = vsel %vm1658, %v1668, %v1669
        %v1671 = vrot.slane %v1515, 4
        %v1672 = vrot.slane %v1523, 4
        %v1673 = vsel %vm1658, %v1671, %v1672
        %v1674 = vrot.slane %v1516, 4
        %v1675 = vrot.slane %v1524, 4
        %v1676 = vsel %vm1658, %v1674, %v1675
        %v1677 = vrot.slane %v1517, 4
        %v1678 = vrot.slane %v1525, 4
        %v1679 = vsel %vm1658, %v1677, %v1678
        %v1680 = vrot.slane %v1518, 4
        %v1681 = vrot.slane %v1526, 4
        %v1682 = vsel %vm1658, %v1680, %v1681
        %v1691 = vpack.c.bf16 %v1664, %v1661
        %v1692 = vpack.c.bf16 %v1670, %v1667
        %v1693 = vpack.c.bf16 %v1676, %v1673
        %v1694 = vpack.c.bf16 %v1682, %v1679
        %v1695 = vrot.slane %v1511, 5
        %v1696 = vrot.slane %v1519, 5
        %v1697 = vsel %vm1510, %v1695, %v1696
        %v1698 = vrot.slane %v1512, 5
        %v1699 = vrot.slane %v1520, 5
        %v1700 = vsel %vm1510, %v1698, %v1699
        %v1701 = vrot.slane %v1513, 5
        %v1702 = vrot.slane %v1521, 5
        %v1703 = vsel %vm1510, %v1701, %v1702
        %v1704 = vrot.slane %v1514, 5
        %v1705 = vrot.slane %v1522, 5
        %v1706 = vsel %vm1510, %v1704, %v1705
        %v1707 = vrot.slane %v1515, 5
        %v1708 = vrot.slane %v1523, 5
        %v1709 = vsel %vm1510, %v1707, %v1708
        %v1710 = vrot.slane %v1516, 5
        %v1711 = vrot.slane %v1524, 5
        %v1712 = vsel %vm1510, %v1710, %v1711
        %v1713 = vrot.slane %v1517, 5
        %v1714 = vrot.slane %v1525, 5
        %v1715 = vsel %vm1510, %v1713, %v1714
        %v1716 = vrot.slane %v1518, 5
        %v1717 = vrot.slane %v1526, 5
        %v1718 = vsel %vm1510, %v1716, %v1717
        %v1727 = vpack.c.bf16 %v1700, %v1697
        %v1728 = vpack.c.bf16 %v1706, %v1703
        %v1729 = vpack.c.bf16 %v1712, %v1709
        %v1730 = vpack.c.bf16 %v1718, %v1715
        %vm1731 = vcmask 1041408
        %v1732 = vrot.slane %v1511, 6
        %v1733 = vrot.slane %v1519, 6
        %v1734 = vsel %vm1731, %v1732, %v1733
        %v1735 = vrot.slane %v1512, 6
        %v1736 = vrot.slane %v1520, 6
        %v1737 = vsel %vm1731, %v1735, %v1736
        %v1738 = vrot.slane %v1513, 6
        %v1739 = vrot.slane %v1521, 6
        %v1740 = vsel %vm1731, %v1738, %v1739
        %v1741 = vrot.slane %v1514, 6
        %v1742 = vrot.slane %v1522, 6
        %v1743 = vsel %vm1731, %v1741, %v1742
        %v1744 = vrot.slane %v1515, 6
        %v1745 = vrot.slane %v1523, 6
        %v1746 = vsel %vm1731, %v1744, %v1745
        %v1747 = vrot.slane %v1516, 6
        %v1748 = vrot.slane %v1524, 6
        %v1749 = vsel %vm1731, %v1747, %v1748
        %v1750 = vrot.slane %v1517, 6
        %v1751 = vrot.slane %v1525, 6
        %v1752 = vsel %vm1731, %v1750, %v1751
        %v1753 = vrot.slane %v1518, 6
        %v1754 = vrot.slane %v1526, 6
        %v1755 = vsel %vm1731, %v1753, %v1754
        %v1764 = vpack.c.bf16 %v1737, %v1734
        %v1765 = vpack.c.bf16 %v1743, %v1740
        %v1766 = vpack.c.bf16 %v1749, %v1746
        %v1767 = vpack.c.bf16 %v1755, %v1752
        %v1768 = vld [vmem:[#allocation7] sm:$0xf]
        %v1769 = vld [vmem:[#allocation7 + $0x4] sm:$0xf]
        %v1770 = vld [vmem:[#allocation7 + $0x8] sm:$0xf]
        %v1771 = vld [vmem:[#allocation7 + $0xc] sm:$0xf]
        %v1772 = vld [vmem:[#allocation7 + $0x10] sm:$0xf]
        %v1773 = vld [vmem:[#allocation7 + $0x14] sm:$0xf]
        %v1774 = vld [vmem:[#allocation7 + $0x18] sm:$0xf]
        %v1775 = vld [vmem:[#allocation7 + $0x1c] sm:$0xf]
        %v1776 = vld [vmem:[#allocation7 + $0x20] sm:$0xf]
        %v1777 = vld [vmem:[#allocation7 + $0x24] sm:$0xf]
        %v1778 = vld [vmem:[#allocation7 + $0x28] sm:$0xf]
        %v1779 = vld [vmem:[#allocation7 + $0x2c] sm:$0xf]
        %v1780 = vld [vmem:[#allocation7 + $0x30] sm:$0xf]
        %v1781 = vld [vmem:[#allocation7 + $0x34] sm:$0xf]
        %v1782 = vld [vmem:[#allocation7 + $0x38] sm:$0xf]
        %v1783 = vld [vmem:[#allocation7 + $0x3c] sm:$0xf]
        %v1784 = vld [vmem:[#allocation7 + $0x40] sm:$0xf]
        %v1785 = vld [vmem:[#allocation7 + $0x44] sm:$0xf]
        %v1786 = vld [vmem:[#allocation7 + $0x48] sm:$0xf]
        %v1787 = vld [vmem:[#allocation7 + $0x4c] sm:$0xf]
        %v1788 = vld [vmem:[#allocation7 + $0x50] sm:$0xf]
        %v1789 = vld [vmem:[#allocation7 + $0x54] sm:$0xf]
        %v1790 = vld [vmem:[#allocation7 + $0x58] sm:$0xf]
        %v1791 = vld [vmem:[#allocation7 + $0x5c] sm:$0xf]
        %v1792 = vld [vmem:[#allocation7 + $0x60] sm:$0xf]
        %v1793 = vld [vmem:[#allocation7 + $0x64] sm:$0xf]
        %v1794 = vld [vmem:[#allocation7 + $0x68] sm:$0xf]
        %v1795 = vld [vmem:[#allocation7 + $0x6c] sm:$0xf]
        %v1796 = vld [vmem:[#allocation7 + $0x70] sm:$0xf]
        %v1797 = vld [vmem:[#allocation7 + $0x74] sm:$0xf]
        %v1798 = vld [vmem:[#allocation7 + $0x78] sm:$0xf]
        %v1799 = vld [vmem:[#allocation7 + $0x7c] sm:$0xf]
        %v1800 = vld [vmem:[#allocation7 + $0x80] sm:$0xf]
        %v1801 = vld [vmem:[#allocation7 + $0x84] sm:$0xf]
        %v1802 = vld [vmem:[#allocation7 + $0x88] sm:$0xf]
        %v1803 = vld [vmem:[#allocation7 + $0x8c] sm:$0xf]
        %v1804 = vld [vmem:[#allocation7 + $0x90] sm:$0xf]
        %v1805 = vld [vmem:[#allocation7 + $0x94] sm:$0xf]
        %v1806 = vld [vmem:[#allocation7 + $0x98] sm:$0xf]
        %v1807 = vld [vmem:[#allocation7 + $0x9c] sm:$0xf]
        %v1808 = vld [vmem:[#allocation7 + $0xa0] sm:$0xf]
        %v1809 = vld [vmem:[#allocation7 + $0xa4] sm:$0xf]
        %v1810 = vld [vmem:[#allocation7 + $0xa8] sm:$0xf]
        %v1811 = vld [vmem:[#allocation7 + $0xac] sm:$0xf]
        %v1812 = vld [vmem:[#allocation7 + $0xb0] sm:$0xf]
        %v1813 = vld [vmem:[#allocation7 + $0xb4] sm:$0xf]
        %v1814 = vld [vmem:[#allocation7 + $0xb8] sm:$0xf]
        %v1815 = vld [vmem:[#allocation7 + $0xbc] sm:$0xf]
        %v1816 = vld [vmem:[#allocation7 + $0xc0] sm:$0xf]
        %v1817 = vld [vmem:[#allocation7 + $0xc4] sm:$0xf]
        %v1818 = vld [vmem:[#allocation7 + $0xc8] sm:$0xf]
        %v1819 = vld [vmem:[#allocation7 + $0xcc] sm:$0xf]
        %v1820 = vld [vmem:[#allocation7 + $0xd0] sm:$0xf]
        %v1821 = vld [vmem:[#allocation7 + $0xd4] sm:$0xf]
        %v1822 = vld [vmem:[#allocation7 + $0xd8] sm:$0xf]
        %v1823 = vld [vmem:[#allocation7 + $0xdc] sm:$0xf]
        %v1824 = vld [vmem:[#allocation7 + $0xe0] sm:$0xf]
        %v1825 = vld [vmem:[#allocation7 + $0xe4] sm:$0xf]
        %v1826 = vld [vmem:[#allocation7 + $0xe8] sm:$0xf]
        %v1827 = vld [vmem:[#allocation7 + $0xec] sm:$0xf]
        %v1828 = vld [vmem:[#allocation7 + $0xf0] sm:$0xf]
        %v1829 = vld [vmem:[#allocation7 + $0xf4] sm:$0xf]
        %v1830 = vld [vmem:[#allocation7 + $0xf8] sm:$0xf]
        %v1831 = vld [vmem:[#allocation7 + $0xfc] sm:$0xf]
        %v1832 = vld [vmem:[#allocation7 + $0x100] sm:$0xf]
        %v1833 = vld [vmem:[#allocation7 + $0x104] sm:$0xf]
        %v1834 = vld [vmem:[#allocation7 + $0x108] sm:$0xf]
        %v1835 = vld [vmem:[#allocation7 + $0x10c] sm:$0xf]
        %v1836 = vld [vmem:[#allocation7 + $0x110] sm:$0xf]
        %v1837 = vld [vmem:[#allocation7 + $0x114] sm:$0xf]
        %v1838 = vld [vmem:[#allocation7 + $0x118] sm:$0xf]
        %v1839 = vld [vmem:[#allocation7 + $0x11c] sm:$0xf]
        %v1840 = vld [vmem:[#allocation7 + $0x120] sm:$0xf]
        %v1841 = vld [vmem:[#allocation7 + $0x124] sm:$0xf]
        %v1842 = vld [vmem:[#allocation7 + $0x128] sm:$0xf]
        %v1843 = vld [vmem:[#allocation7 + $0x12c] sm:$0xf]
        %v1844 = vld [vmem:[#allocation7 + $0x130] sm:$0xf]
        %v1845 = vld [vmem:[#allocation7 + $0x134] sm:$0xf]
        %v1846 = vld [vmem:[#allocation7 + $0x138] sm:$0xf]
        %v1847 = vld [vmem:[#allocation7 + $0x13c] sm:$0xf]
        %v1848 = vld [vmem:[#allocation7 + $0x140] sm:$0xf]
        %v1849 = vld [vmem:[#allocation7 + $0x144] sm:$0xf]
        %v1850 = vld [vmem:[#allocation7 + $0x148] sm:$0xf]
        %v1851 = vld [vmem:[#allocation7 + $0x14c] sm:$0xf]
        %v1852 = vld [vmem:[#allocation7 + $0x150] sm:$0xf]
        %v1853 = vld [vmem:[#allocation7 + $0x154] sm:$0xf]
        %v1854 = vld [vmem:[#allocation7 + $0x158] sm:$0xf]
        %v1855 = vld [vmem:[#allocation7 + $0x15c] sm:$0xf]
        %v1856 = vld [vmem:[#allocation7 + $0x160] sm:$0xf]
        %v1857 = vld [vmem:[#allocation7 + $0x164] sm:$0xf]
        %v1858 = vld [vmem:[#allocation7 + $0x168] sm:$0xf]
        %v1859 = vld [vmem:[#allocation7 + $0x16c] sm:$0xf]
        %v1860 = vld [vmem:[#allocation7 + $0x170] sm:$0xf]
        %v1861 = vld [vmem:[#allocation7 + $0x174] sm:$0xf]
        %v1862 = vld [vmem:[#allocation7 + $0x178] sm:$0xf]
        %v1863 = vld [vmem:[#allocation7 + $0x17c] sm:$0xf]
        %v1864 = vld [vmem:[#allocation7 + $0x180] sm:$0xf]
        %v1865 = vld [vmem:[#allocation7 + $0x184] sm:$0xf]
        %v1866 = vld [vmem:[#allocation7 + $0x188] sm:$0xf]
        %v1867 = vld [vmem:[#allocation7 + $0x18c] sm:$0xf]
        %v1868 = vld [vmem:[#allocation7 + $0x190] sm:$0xf]
        %v1869 = vld [vmem:[#allocation7 + $0x194] sm:$0xf]
        %v1870 = vld [vmem:[#allocation7 + $0x198] sm:$0xf]
        %v1871 = vld [vmem:[#allocation7 + $0x19c] sm:$0xf]
        %v1872 = vld [vmem:[#allocation7 + $0x1a0] sm:$0xf]
        %v1873 = vld [vmem:[#allocation7 + $0x1a4] sm:$0xf]
        %v1874 = vld [vmem:[#allocation7 + $0x1a8] sm:$0xf]
        %v1875 = vld [vmem:[#allocation7 + $0x1ac] sm:$0xf]
        %v1876 = vld [vmem:[#allocation7 + $0x1b0] sm:$0xf]
        %v1877 = vld [vmem:[#allocation7 + $0x1b4] sm:$0xf]
        %v1878 = vld [vmem:[#allocation7 + $0x1b8] sm:$0xf]
        %v1879 = vld [vmem:[#allocation7 + $0x1bc] sm:$0xf]
        %v1880 = vld [vmem:[%s4] sm:$0x1]
        %v1882 = vlaneseq
        %v1883 = vshrl.u32 %v1882, 7
        %v1884 = vsub.s32 0, %v1883
        %v1885 = vrot.slane %v1880, %v1884
        %v1999 = vunpack.c.l.b16 %v1768
        %v2000 = vunpack.c.l.b16 %v1769
        %v2001 = vunpack.c.l.b16 %v1770
        %v2002 = vunpack.c.l.b16 %v1771
        %v2003 = vunpack.c.l.b16 %v1772
        %v2004 = vunpack.c.l.b16 %v1773
        %v2005 = vunpack.c.l.b16 %v1774
        %v2006 = vunpack.c.l.b16 %v1775
        %v2007 = vunpack.c.l.b16 %v1776
        %v2008 = vunpack.c.l.b16 %v1777
        %v2009 = vunpack.c.l.b16 %v1778
        %v2010 = vunpack.c.l.b16 %v1779
        %v2011 = vunpack.c.l.b16 %v1780
        %v2012 = vunpack.c.l.b16 %v1781
        %v2013 = vunpack.c.l.b16 %v1782
        %v2014 = vunpack.c.l.b16 %v1783
        %v2015 = vunpack.c.l.b16 %v1784
        %v2016 = vunpack.c.l.b16 %v1785
        %v2017 = vunpack.c.l.b16 %v1786
        %v2018 = vunpack.c.l.b16 %v1787
        %v2019 = vunpack.c.l.b16 %v1788
        %v2020 = vunpack.c.l.b16 %v1789
        %v2021 = vunpack.c.l.b16 %v1790
        %v2022 = vunpack.c.l.b16 %v1791
        %v2023 = vunpack.c.l.b16 %v1792
        %v2024 = vunpack.c.l.b16 %v1793
        %v2025 = vunpack.c.l.b16 %v1794
        %v2026 = vunpack.c.l.b16 %v1795
        %v2027 = vunpack.c.l.b16 %v1796
        %v2028 = vunpack.c.l.b16 %v1797
        %v2029 = vunpack.c.l.b16 %v1798
        %v2030 = vunpack.c.l.b16 %v1799
        %v2031 = vunpack.c.l.b16 %v1800
        %v2032 = vunpack.c.l.b16 %v1801
        %v2033 = vunpack.c.l.b16 %v1802
        %v2034 = vunpack.c.l.b16 %v1803
        %v2035 = vunpack.c.l.b16 %v1804
        %v2036 = vunpack.c.l.b16 %v1805
        %v2037 = vunpack.c.l.b16 %v1806
        %v2038 = vunpack.c.l.b16 %v1807
        %v2039 = vunpack.c.l.b16 %v1808
        %v2040 = vunpack.c.l.b16 %v1809
        %v2041 = vunpack.c.l.b16 %v1810
        %v2042 = vunpack.c.l.b16 %v1811
        %v2043 = vunpack.c.l.b16 %v1812
        %v2044 = vunpack.c.l.b16 %v1813
        %v2045 = vunpack.c.l.b16 %v1814
        %v2046 = vunpack.c.l.b16 %v1815
        %v2047 = vunpack.c.l.b16 %v1816
        %v2048 = vunpack.c.l.b16 %v1817
        %v2049 = vunpack.c.l.b16 %v1818
        %v2050 = vunpack.c.l.b16 %v1819
        %v2051 = vunpack.c.l.b16 %v1820
        %v2052 = vunpack.c.l.b16 %v1821
        %v2053 = vunpack.c.l.b16 %v1822
        %v2054 = vunpack.c.l.b16 %v1823
        %v2055 = vunpack.c.l.b16 %v1824
        %v2056 = vunpack.c.l.b16 %v1825
        %v2057 = vunpack.c.l.b16 %v1826
        %v2058 = vunpack.c.l.b16 %v1827
        %v2059 = vunpack.c.l.b16 %v1828
        %v2060 = vunpack.c.l.b16 %v1829
        %v2061 = vunpack.c.l.b16 %v1830
        %v2062 = vunpack.c.l.b16 %v1831
        %v2063 = vunpack.c.l.b16 %v1832
        %v2064 = vunpack.c.l.b16 %v1833
        %v2065 = vunpack.c.l.b16 %v1834
        %v2066 = vunpack.c.l.b16 %v1835
        %v2067 = vunpack.c.l.b16 %v1836
        %v2068 = vunpack.c.l.b16 %v1837
        %v2069 = vunpack.c.l.b16 %v1838
        %v2070 = vunpack.c.l.b16 %v1839
        %v2071 = vunpack.c.l.b16 %v1840
        %v2072 = vunpack.c.l.b16 %v1841
        %v2073 = vunpack.c.l.b16 %v1842
        %v2074 = vunpack.c.l.b16 %v1843
        %v2075 = vunpack.c.l.b16 %v1844
        %v2076 = vunpack.c.l.b16 %v1845
        %v2077 = vunpack.c.l.b16 %v1846
        %v2078 = vunpack.c.l.b16 %v1847
        %v2079 = vunpack.c.l.b16 %v1848
        %v2080 = vunpack.c.l.b16 %v1849
        %v2081 = vunpack.c.l.b16 %v1850
        %v2082 = vunpack.c.l.b16 %v1851
        %v2083 = vunpack.c.l.b16 %v1852
        %v2084 = vunpack.c.l.b16 %v1853
        %v2085 = vunpack.c.l.b16 %v1854
        %v2086 = vunpack.c.l.b16 %v1855
        %v2087 = vunpack.c.l.b16 %v1856
        %v2088 = vunpack.c.l.b16 %v1857
        %v2089 = vunpack.c.l.b16 %v1858
        %v2090 = vunpack.c.l.b16 %v1859
        %v2091 = vunpack.c.l.b16 %v1860
        %v2092 = vunpack.c.l.b16 %v1861
        %v2093 = vunpack.c.l.b16 %v1862
        %v2094 = vunpack.c.l.b16 %v1863
        %v2095 = vunpack.c.l.b16 %v1864
        %v2096 = vunpack.c.l.b16 %v1865
        %v2097 = vunpack.c.l.b16 %v1866
        %v2098 = vunpack.c.l.b16 %v1867
        %v2099 = vunpack.c.l.b16 %v1868
        %v2100 = vunpack.c.l.b16 %v1869
        %v2101 = vunpack.c.l.b16 %v1870
        %v2102 = vunpack.c.l.b16 %v1871
        %v2103 = vunpack.c.l.b16 %v1872
        %v2104 = vunpack.c.l.b16 %v1873
        %v2105 = vunpack.c.l.b16 %v1874
        %v2106 = vunpack.c.l.b16 %v1875
        %v2107 = vunpack.c.l.b16 %v1876
        %v2108 = vunpack.c.l.b16 %v1877
        %v2109 = vunpack.c.l.b16 %v1878
        %v2110 = vunpack.c.l.b16 %v1879
        %v2111 = vpack.c.b16 %v2000, %v1999
        %v2112 = vpack.c.b16 %v2002, %v2001
        %v2113 = vpack.c.b16 %v2004, %v2003
        %v2114 = vpack.c.b16 %v2006, %v2005
        %v2115 = vpack.c.b16 %v2008, %v2007
        %v2116 = vpack.c.b16 %v2010, %v2009
        %v2117 = vpack.c.b16 %v2012, %v2011
        %v2118 = vpack.c.b16 %v2014, %v2013
        %v2119 = vpack.c.b16 %v2016, %v2015
        %v2120 = vpack.c.b16 %v2018, %v2017
        %v2121 = vpack.c.b16 %v2020, %v2019
        %v2122 = vpack.c.b16 %v2022, %v2021
        %v2123 = vpack.c.b16 %v2024, %v2023
        %v2124 = vpack.c.b16 %v2026, %v2025
        %v2125 = vpack.c.b16 %v2028, %v2027
        %v2126 = vpack.c.b16 %v2030, %v2029
        %v2127 = vpack.c.b16 %v2032, %v2031
        %v2128 = vpack.c.b16 %v2034, %v2033
        %v2129 = vpack.c.b16 %v2036, %v2035
        %v2130 = vpack.c.b16 %v2038, %v2037
        %v2131 = vpack.c.b16 %v2040, %v2039
        %v2132 = vpack.c.b16 %v2042, %v2041
        %v2133 = vpack.c.b16 %v2044, %v2043
        %v2134 = vpack.c.b16 %v2046, %v2045
        %v2135 = vpack.c.b16 %v2048, %v2047
        %v2136 = vpack.c.b16 %v2050, %v2049
        %v2137 = vpack.c.b16 %v2052, %v2051
        %v2138 = vpack.c.b16 %v2054, %v2053
        %v2139 = vpack.c.b16 %v2056, %v2055
        %v2140 = vpack.c.b16 %v2058, %v2057
        %v2141 = vpack.c.b16 %v2060, %v2059
        %v2142 = vpack.c.b16 %v2062, %v2061
        %v2143 = vpack.c.b16 %v2064, %v2063
        %v2144 = vpack.c.b16 %v2066, %v2065
        %v2145 = vpack.c.b16 %v2068, %v2067
        %v2146 = vpack.c.b16 %v2070, %v2069
        %v2147 = vpack.c.b16 %v2072, %v2071
        %v2148 = vpack.c.b16 %v2074, %v2073
        %v2149 = vpack.c.b16 %v2076, %v2075
        %v2150 = vpack.c.b16 %v2078, %v2077
        %v2151 = vpack.c.b16 %v2080, %v2079
        %v2152 = vpack.c.b16 %v2082, %v2081
        %v2153 = vpack.c.b16 %v2084, %v2083
        %v2154 = vpack.c.b16 %v2086, %v2085
        %v2155 = vpack.c.b16 %v2088, %v2087
        %v2156 = vpack.c.b16 %v2090, %v2089
        %v2157 = vpack.c.b16 %v2092, %v2091
        %v2158 = vpack.c.b16 %v2094, %v2093
        %v2159 = vpack.c.b16 %v2096, %v2095
        %v2160 = vpack.c.b16 %v2098, %v2097
        %v2161 = vpack.c.b16 %v2100, %v2099
        %v2162 = vpack.c.b16 %v2102, %v2101
        %v2163 = vpack.c.b16 %v2104, %v2103
        %v2164 = vpack.c.b16 %v2106, %v2105
        %v2165 = vpack.c.b16 %v2108, %v2107
        %v2166 = vpack.c.b16 %v2110, %v2109
        %2223 = vmatprep.subr.bf16.mxu0 0
        %2224 = vmatpush1.bf16.msra.mxu0 %v2111
        %2225 = vmatprep.subr.bf16.mxu0 0
        %2226 = vmatpush1.bf16.msra.mxu0 %v2112
        %2227 = vmatprep.subr.bf16.mxu0 0
        %2228 = vmatpush1.bf16.msra.mxu0 %v2113
        %2229 = vmatprep.subr.bf16.mxu0 0
        %2230 = vmatpush1.bf16.msra.mxu0 %v2114
        %2231 = vmatprep.subr.bf16.mxu0 0
        %2232 = vmatpush1.bf16.msra.mxu0 %v2115
        %2233 = vmatprep.subr.bf16.mxu0 0
        %2234 = vmatpush1.bf16.msra.mxu0 %v2116
        %2235 = vmatprep.subr.bf16.mxu0 0
        %2236 = vmatpush1.bf16.msra.mxu0 %v2117
        %2237 = vmatprep.subr.bf16.mxu0 0
        %2238 = vmatpush1.bf16.msra.mxu0 %v2118
        %2239 = vmatprep.subr.bf16.mxu0 0
        %2240 = vmatpush1.bf16.msra.mxu0 %v2119
        %2241 = vmatprep.subr.bf16.mxu0 0
        %2242 = vmatpush1.bf16.msra.mxu0 %v2120
        %2243 = vmatprep.subr.bf16.mxu0 0
        %2244 = vmatpush1.bf16.msra.mxu0 %v2121
        %2245 = vmatprep.subr.bf16.mxu0 0
        %2246 = vmatpush1.bf16.msra.mxu0 %v2122
        %2247 = vmatprep.subr.bf16.mxu0 0
        %2248 = vmatpush1.bf16.msra.mxu0 %v2123
        %2249 = vmatprep.subr.bf16.mxu0 0
        %2250 = vmatpush1.bf16.msra.mxu0 %v2124
        %2251 = vmatprep.subr.bf16.mxu0 0
        %2252 = vmatpush1.bf16.msra.mxu0 %v2125
        %2253 = vmatprep.subr.bf16.mxu0 0
        %2254 = vmatpush1.bf16.msra.mxu0 %v2126
        %2255 = vmatprep.mubr.bf16.mxu0 %v1580
        %2256 = vmatmul.mubr.bf16.gmra.mrb[0].mxu0 %v1527
        %v2257 = vpop.f32.mrb[0].mxu0
        %v2258 = vadd.f32 %v1885, %v2257
        %v2259 = vpop.f32.mrb[0].mxu0
        %v2260 = vpop.f32.mrb[0].mxu0
        %v2261 = vadd.f32 %v1885, %v2260
        %v2262 = vpop.f32.mrb[0].mxu0
        %2263 = vmatprep.mubr.bf16.mxu0 %v1581
        %2264 = vmatmul.mubr.bf16.gmra.mrb[0].mxu0 %v1528
        %v2265 = vpop.f32.mrb[0].mxu0
        %v2266 = vadd.f32 %v1885, %v2265
        %v2267 = vpop.f32.mrb[0].mxu0
        %v2268 = vpop.f32.mrb[0].mxu0
        %v2269 = vadd.f32 %v1885, %v2268
        %v2270 = vpop.f32.mrb[0].mxu0
        %2271 = vmatprep.mubr.bf16.mxu0 %v1582
        %2272 = vmatmul.mubr.bf16.gmra.mrb[0].mxu0 %v1529
        %v2273 = vpop.f32.mrb[0].mxu0
        %v2274 = vadd.f32 %v1885, %v2273
        %v2275 = vpop.f32.mrb[0].mxu0
        %v2276 = vpop.f32.mrb[0].mxu0
        %v2277 = vadd.f32 %v1885, %v2276
        %v2278 = vpop.f32.mrb[0].mxu0
        %2279 = vmatprep.mubr.bf16.mxu0 %v1583
        %2280 = vmatmul.mubr.bf16.gmra.mrb[0].mxu0 %v1530
        %v2281 = vpop.f32.mrb[0].mxu0
        %v2282 = vadd.f32 %v1885, %v2281
        %v2283 = vpop.f32.mrb[0].mxu0
        %v2284 = vpop.f32.mrb[0].mxu0
        %v2285 = vadd.f32 %v1885, %v2284
        %v2286 = vpop.f32.mrb[0].mxu0
        %2287 = vdwg.mxu0
        %2288 = vmatprep.subr.bf16.mxu0 0
        %2289 = vmatpush1.bf16.msra.mxu0 %v2127
        %2290 = vmatprep.subr.bf16.mxu0 0
        %2291 = vmatpush1.bf16.msra.mxu0 %v2128
        %2292 = vmatprep.subr.bf16.mxu0 0
        %2293 = vmatpush1.bf16.msra.mxu0 %v2129
        %2294 = vmatprep.subr.bf16.mxu0 0
        %2295 = vmatpush1.bf16.msra.mxu0 %v2130
        %2296 = vmatprep.subr.bf16.mxu0 0
        %2297 = vmatpush1.bf16.msra.mxu0 %v2131
        %2298 = vmatprep.subr.bf16.mxu0 0
        %2299 = vmatpush1.bf16.msra.mxu0 %v2132
        %2300 = vmatprep.subr.bf16.mxu0 0
        %2301 = vmatpush1.bf16.msra.mxu0 %v2133
        %2302 = vmatprep.subr.bf16.mxu0 0
        %2303 = vmatpush1.bf16.msra.mxu0 %v2134
        %2304 = vmatprep.subr.bf16.mxu0 0
        %2305 = vmatpush1.bf16.msra.mxu0 %v2135
        %2306 = vmatprep.subr.bf16.mxu0 0
        %2307 = vmatpush1.bf16.msra.mxu0 %v2136
        %2308 = vmatprep.subr.bf16.mxu0 0
        %2309 = vmatpush1.bf16.msra.mxu0 %v2137
        %2310 = vmatprep.subr.bf16.mxu0 0
        %2311 = vmatpush1.bf16.msra.mxu0 %v2138
        %2312 = vmatprep.subr.bf16.mxu0 0
        %2313 = vmatpush1.bf16.msra.mxu0 %v2139
        %2314 = vmatprep.subr.bf16.mxu0 0
        %2315 = vmatpush1.bf16.msra.mxu0 %v2140
        %2316 = vmatprep.subr.bf16.mxu0 0
        %2317 = vmatpush1.bf16.msra.mxu0 %v2141
        %2318 = vmatprep.subr.bf16.mxu0 0
        %2319 = vmatpush1.bf16.msra.mxu0 %v2142
        %2320 = vmatprep.mubr.bf16.mxu0 %v1654
        %2321 = vmatmul.mubr.bf16.gmra.mrb[0].mxu0 %v1617
        %v2322 = vpop.f32.mrb[0].mxu0
        %v2323 = vadd.f32 %v2258, %v2322
        %v2324 = vpop.f32.mrb[0].mxu0
        %v2325 = vpop.f32.mrb[0].mxu0
        %v2326 = vadd.f32 %v2261, %v2325
        %v2327 = vpop.f32.mrb[0].mxu0
        %2328 = vmatprep.mubr.bf16.mxu0 %v1655
        %2329 = vmatmul.mubr.bf16.gmra.mrb[0].mxu0 %v1618
        %v2330 = vpop.f32.mrb[0].mxu0
        %v2331 = vadd.f32 %v2266, %v2330
        %v2332 = vpop.f32.mrb[0].mxu0
        %v2333 = vpop.f32.mrb[0].mxu0
        %v2334 = vadd.f32 %v2269, %v2333
        %v2335 = vpop.f32.mrb[0].mxu0
        %2336 = vmatprep.mubr.bf16.mxu0 %v1656
        %2337 = vmatmul.mubr.bf16.gmra.mrb[0].mxu0 %v1619
        %v2338 = vpop.f32.mrb[0].mxu0
        %v2339 = vadd.f32 %v2274, %v2338
        %v2340 = vpop.f32.mrb[0].mxu0
        %v2341 = vpop.f32.mrb[0].mxu0
        %v2342 = vadd.f32 %v2277, %v2341
        %v2343 = vpop.f32.mrb[0].mxu0
        %2344 = vmatprep.mubr.bf16.mxu0 %v1657
        %2345 = vmatmul.mubr.bf16.gmra.mrb[0].mxu0 %v1620
        %v2346 = vpop.f32.mrb[0].mxu0
        %v2347 = vadd.f32 %v2282, %v2346
        %v2348 = vpop.f32.mrb[0].mxu0
        %v2349 = vpop.f32.mrb[0].mxu0
        %v2350 = vadd.f32 %v2285, %v2349
        %v2351 = vpop.f32.mrb[0].mxu0
        %2352 = vdwg.mxu0
        %2353 = vmatprep.subr.bf16.mxu0 0
        %2354 = vmatpush1.bf16.msra.mxu0 %v2143
        %2355 = vmatprep.subr.bf16.mxu0 0
        %2356 = vmatpush1.bf16.msra.mxu0 %v2144
        %2357 = vmatprep.subr.bf16.mxu0 0
        %2358 = vmatpush1.bf16.msra.mxu0 %v2145
        %2359 = vmatprep.subr.bf16.mxu0 0
        %2360 = vmatpush1.bf16.msra.mxu0 %v2146
        %2361 = vmatprep.subr.bf16.mxu0 0
        %2362 = vmatpush1.bf16.msra.mxu0 %v2147
        %2363 = vmatprep.subr.bf16.mxu0 0
        %2364 = vmatpush1.bf16.msra.mxu0 %v2148
        %2365 = vmatprep.subr.bf16.mxu0 0
        %2366 = vmatpush1.bf16.msra.mxu0 %v2149
        %2367 = vmatprep.subr.bf16.mxu0 0
        %2368 = vmatpush1.bf16.msra.mxu0 %v2150
        %2369 = vmatprep.subr.bf16.mxu0 0
        %2370 = vmatpush1.bf16.msra.mxu0 %v2151
        %2371 = vmatprep.subr.bf16.mxu0 0
        %2372 = vmatpush1.bf16.msra.mxu0 %v2152
        %2373 = vmatprep.subr.bf16.mxu0 0
        %2374 = vmatpush1.bf16.msra.mxu0 %v2153
        %2375 = vmatprep.subr.bf16.mxu0 0
        %2376 = vmatpush1.bf16.msra.mxu0 %v2154
        %2377 = vmatprep.subr.bf16.mxu0 0
        %2378 = vmatpush1.bf16.msra.mxu0 %v2155
        %2379 = vmatprep.subr.bf16.mxu0 0
        %2380 = vmatpush1.bf16.msra.mxu0 %v2156
        %2381 = vmatprep.subr.bf16.mxu0 0
        %2382 = vmatpush1.bf16.msra.mxu0 %v2157
        %2383 = vmatprep.subr.bf16.mxu0 0
        %2384 = vmatpush1.bf16.msra.mxu0 %v2158
        %2385 = vmatprep.mubr.bf16.mxu0 %v1727
        %2386 = vmatmul.mubr.bf16.gmra.mrb[0].mxu0 %v1691
        %v2387 = vpop.f32.mrb[0].mxu0
        %v2388 = vadd.f32 %v2323, %v2387
        %v2389 = vpop.f32.mrb[0].mxu0
        %v2390 = vpop.f32.mrb[0].mxu0
        %v2391 = vadd.f32 %v2326, %v2390
        %v2392 = vpop.f32.mrb[0].mxu0
        %2393 = vmatprep.mubr.bf16.mxu0 %v1728
        %2394 = vmatmul.mubr.bf16.gmra.mrb[0].mxu0 %v1692
        %v2395 = vpop.f32.mrb[0].mxu0
        %v2396 = vadd.f32 %v2331, %v2395
        %v2397 = vpop.f32.mrb[0].mxu0
        %v2398 = vpop.f32.mrb[0].mxu0
        %v2399 = vadd.f32 %v2334, %v2398
        %v2400 = vpop.f32.mrb[0].mxu0
        %2401 = vmatprep.mubr.bf16.mxu0 %v1729
        %2402 = vmatmul.mubr.bf16.gmra.mrb[0].mxu0 %v1693
        %v2403 = vpop.f32.mrb[0].mxu0
        %v2404 = vadd.f32 %v2339, %v2403
        %v2405 = vpop.f32.mrb[0].mxu0
        %v2406 = vpop.f32.mrb[0].mxu0
        %v2407 = vadd.f32 %v2342, %v2406
        %v2408 = vpop.f32.mrb[0].mxu0
        %2409 = vmatprep.mubr.bf16.mxu0 %v1730
        %2410 = vmatmul.mubr.bf16.gmra.mrb[0].mxu0 %v1694
        %v2411 = vpop.f32.mrb[0].mxu0
        %v2412 = vadd.f32 %v2347, %v2411
        %v2413 = vpop.f32.mrb[0].mxu0
        %v2414 = vpop.f32.mrb[0].mxu0
        %v2415 = vadd.f32 %v2350, %v2414
        %v2416 = vpop.f32.mrb[0].mxu0
        %2417 = vdwg.mxu0
        %2418 = vmatprep.subr.bf16.mxu0 0
        %2419 = vmatpush1.bf16.msra.mxu0 %v2159
        %2420 = vmatprep.subr.bf16.mxu0 0
        %2421 = vmatpush1.bf16.msra.mxu0 %v2160
        %2422 = vmatprep.subr.bf16.mxu0 0
        %2423 = vmatpush1.bf16.msra.mxu0 %v2161
        %2424 = vmatprep.subr.bf16.mxu0 0
        %2425 = vmatpush1.bf16.msra.mxu0 %v2162
        %2426 = vmatprep.subr.bf16.mxu0 0
        %2427 = vmatpush1.bf16.msra.mxu0 %v2163
        %2428 = vmatprep.subr.bf16.mxu0 0
        %2429 = vmatpush1.bf16.msra.mxu0 %v2164
        %2430 = vmatprep.subr.bf16.mxu0 0
        %2431 = vmatpush1.bf16.msra.mxu0 %v2165
        %2432 = vmatprep.subr.bf16.mxu0 0
        %2433 = vmatpush1.bf16.msra.mxu0 %v2166
        %2434 = vmatprep.subr.bf16.mxu0 0
        %2435 = vmatpush1.bf16.msra.mxu0 0
        %2436 = vmatprep.subr.bf16.mxu0 0
        %2437 = vmatpush1.bf16.msra.mxu0 0
        %2438 = vmatprep.subr.bf16.mxu0 0
        %2439 = vmatpush1.bf16.msra.mxu0 0
        %2440 = vmatprep.subr.bf16.mxu0 0
        %2441 = vmatpush1.bf16.msra.mxu0 0
        %2442 = vmatprep.subr.bf16.mxu0 0
        %2443 = vmatpush1.bf16.msra.mxu0 0
        %2444 = vmatprep.subr.bf16.mxu0 0
        %2445 = vmatpush1.bf16.msra.mxu0 0
        %2446 = vmatprep.subr.bf16.mxu0 0
        %2447 = vmatpush1.bf16.msra.mxu0 0
        %2448 = vmatprep.subr.bf16.mxu0 0
        %2449 = vmatpush1.bf16.msra.mxu0 0
        %2450 = vmatprep.mubr.bf16.mxu0 0
        %2451 = vmatmul.mubr.bf16.gmra.mrb[0].mxu0 %v1764
        %v2452 = vpop.f32.mrb[0].mxu0
        %v2453 = vadd.f32 %v2388, %v2452
        %v2454 = vpop.f32.mrb[0].mxu0
        %v2455 = vpop.f32.mrb[0].mxu0
        %v2456 = vadd.f32 %v2391, %v2455
        %v2457 = vpop.f32.mrb[0].mxu0
        %2458 = vmatprep.mubr.bf16.mxu0 0
        %2459 = vmatmul.mubr.bf16.gmra.mrb[0].mxu0 %v1765
        %v2460 = vpop.f32.mrb[0].mxu0
        %v2461 = vadd.f32 %v2396, %v2460
        %v2462 = vpop.f32.mrb[0].mxu0
        %v2463 = vpop.f32.mrb[0].mxu0
        %v2464 = vadd.f32 %v2399, %v2463
        %v2465 = vpop.f32.mrb[0].mxu0
        %2466 = vmatprep.mubr.bf16.mxu0 0
        %2467 = vmatmul.mubr.bf16.gmra.mrb[0].mxu0 %v1766
        %v2468 = vpop.f32.mrb[0].mxu0
        %v2469 = vadd.f32 %v2404, %v2468
        %v2470 = vpop.f32.mrb[0].mxu0
        %v2471 = vpop.f32.mrb[0].mxu0
        %v2472 = vadd.f32 %v2407, %v2471
        %v2473 = vpop.f32.mrb[0].mxu0
        %2474 = vmatprep.mubr.bf16.mxu0 0
        %2475 = vmatmul.mubr.bf16.gmra.mrb[0].mxu0 %v1767
        %v2476 = vpop.f32.mrb[0].mxu0
        %v2477 = vadd.f32 %v2412, %v2476
        %v2478 = vpop.f32.mrb[0].mxu0
        %v2479 = vpop.f32.mrb[0].mxu0
        %v2480 = vadd.f32 %v2415, %v2479
        %v2481 = vpop.f32.mrb[0].mxu0
        %2482 = vdwg.mxu0
        %v2483 = vmax.f32 %v2453, 0.0
        %v2484 = vmax.f32 %v2456, 0.0
        %v2485 = vmax.f32 %v2461, 0.0
        %v2486 = vmax.f32 %v2464, 0.0
        %v2487 = vmax.f32 %v2469, 0.0
        %v2488 = vmax.f32 %v2472, 0.0
        %v2489 = vmax.f32 %v2477, 0.0
        %v2490 = vmax.f32 %v2480, 0.0
        %v2491 = vpack.c.bf16 0.0, 0.0
        %v2492 = vpack.c.bf16 %v2483, %v2483
        %v2493 = vpack.c.bf16 %v2484, %v2484
        %v2494 = vpack.c.bf16 %v2485, %v2485
        %v2495 = vpack.c.bf16 %v2486, %v2486
        %v2496 = vpack.c.bf16 %v2487, %v2487
        %v2497 = vpack.c.bf16 %v2488, %v2488
        %v2498 = vpack.c.bf16 %v2489, %v2489
        %v2499 = vpack.c.bf16 %v2490, %v2490
        %v2506 = vunpack.c.l.b16 %v2491
        %v2507 = vunpack.c.l.b16 %v2492
        %v2508 = vunpack.c.l.b16 %v2493
        %v2509 = vunpack.c.l.b16 %v2494
        %v2510 = vunpack.c.l.b16 %v2495
        %v2511 = vunpack.c.l.b16 %v2496
        %v2512 = vpack.c.b16 %v2506, %v2506
        %v2513 = vpack.c.b16 %v2507, %v2506
        %v2514 = vpack.c.b16 %v2509, %v2508
        %v2515 = vpack.c.b16 %v2511, %v2510
        %v2521 = vunpack.c.l.b16 %v2497
        %v2522 = vpack.c.b16 %v2508, %v2507
        %v2523 = vpack.c.b16 %v2510, %v2509
        %v2524 = vpack.c.b16 %v2521, %v2511
        %v2529 = vunpack.c.l.b16 %v2498
        %v2530 = vpack.c.b16 %v2529, %v2521
        %v2533 = vunpack.c.l.b16 %v2499
        %v2534 = vpack.c.b16 %v2533, %v2529
        %v2536 = vpack.c.b16 %v2506, %v2533
        %v2538 = vld [vmem:[#allocation8] sm:$0xf]
        %v2539 = vld [vmem:[#allocation8 + $0x4] sm:$0xf]
        %v2540 = vld [vmem:[#allocation8 + $0x8] sm:$0xf]
        %v2541 = vld [vmem:[#allocation8 + $0xc] sm:$0xf]
        %v2542 = vld [vmem:[#allocation8 + $0x10] sm:$0xf]
        %v2543 = vld [vmem:[#allocation8 + $0x14] sm:$0xf]
        %v2544 = vld [vmem:[#allocation8 + $0x18] sm:$0xf]
        %v2545 = vld [vmem:[#allocation8 + $0x1c] sm:$0xf]
        %v2546 = vld [vmem:[#allocation8 + $0x20] sm:$0xf]
        %v2547 = vld [vmem:[#allocation8 + $0x24] sm:$0xf]
        %v2548 = vld [vmem:[#allocation8 + $0x28] sm:$0xf]
        %v2549 = vld [vmem:[#allocation8 + $0x2c] sm:$0xf]
        %v2550 = vld [vmem:[#allocation8 + $0x30] sm:$0xf]
        %v2551 = vld [vmem:[#allocation8 + $0x34] sm:$0xf]
        %v2552 = vld [vmem:[#allocation8 + $0x38] sm:$0xf]
        %v2553 = vld [vmem:[#allocation8 + $0x3c] sm:$0xf]
        %v2554 = vld [vmem:[#allocation8 + $0x40] sm:$0xf]
        %v2555 = vld [vmem:[#allocation8 + $0x44] sm:$0xf]
        %v2556 = vld [vmem:[#allocation8 + $0x48] sm:$0xf]
        %v2557 = vld [vmem:[#allocation8 + $0x4c] sm:$0xf]
        %v2558 = vld [vmem:[#allocation8 + $0x50] sm:$0xf]
        %v2559 = vld [vmem:[#allocation8 + $0x54] sm:$0xf]
        %v2560 = vld [vmem:[#allocation8 + $0x58] sm:$0xf]
        %v2561 = vld [vmem:[#allocation8 + $0x5c] sm:$0xf]
        %v2562 = vld [vmem:[#allocation8 + $0x60] sm:$0xf]
        %v2563 = vld [vmem:[#allocation8 + $0x64] sm:$0xf]
        %v2564 = vld [vmem:[#allocation8 + $0x68] sm:$0xf]
        %v2565 = vld [vmem:[#allocation8 + $0x6c] sm:$0xf]
        %v2566 = vld [vmem:[#allocation8 + $0x70] sm:$0xf]
        %v2567 = vld [vmem:[#allocation8 + $0x74] sm:$0xf]
        %v2568 = vld [vmem:[#allocation8 + $0x78] sm:$0xf]
        %v2569 = vld [vmem:[#allocation8 + $0x7c] sm:$0xf]
        %v2570 = vld [vmem:[#allocation8 + $0x80] sm:$0xf]
        %v2571 = vld [vmem:[#allocation8 + $0x84] sm:$0xf]
        %v2572 = vld [vmem:[#allocation8 + $0x88] sm:$0xf]
        %v2573 = vld [vmem:[#allocation8 + $0x8c] sm:$0xf]
        %v2574 = vld [vmem:[#allocation8 + $0x90] sm:$0xf]
        %v2575 = vld [vmem:[#allocation8 + $0x94] sm:$0xf]
        %v2576 = vld [vmem:[#allocation8 + $0x98] sm:$0xf]
        %v2577 = vld [vmem:[#allocation8 + $0x9c] sm:$0xf]
        %v2578 = vld [vmem:[#allocation8 + $0xa0] sm:$0xf]
        %v2579 = vld [vmem:[#allocation8 + $0xa4] sm:$0xf]
        %v2580 = vld [vmem:[#allocation8 + $0xa8] sm:$0xf]
        %v2581 = vld [vmem:[#allocation8 + $0xac] sm:$0xf]
        %v2582 = vld [vmem:[#allocation8 + $0xb0] sm:$0xf]
        %v2583 = vld [vmem:[#allocation8 + $0xb4] sm:$0xf]
        %v2584 = vld [vmem:[#allocation8 + $0xb8] sm:$0xf]
        %v2585 = vld [vmem:[#allocation8 + $0xbc] sm:$0xf]
        %v2586 = vld [vmem:[#allocation8 + $0xc0] sm:$0xf]
        %v2587 = vld [vmem:[#allocation8 + $0xc4] sm:$0xf]
        %v2588 = vld [vmem:[#allocation8 + $0xc8] sm:$0xf]
        %v2589 = vld [vmem:[#allocation8 + $0xcc] sm:$0xf]
        %v2590 = vld [vmem:[#allocation8 + $0xd0] sm:$0xf]
        %v2591 = vld [vmem:[#allocation8 + $0xd4] sm:$0xf]
        %v2592 = vld [vmem:[#allocation8 + $0xd8] sm:$0xf]
        %v2593 = vld [vmem:[#allocation8 + $0xdc] sm:$0xf]
        %v2594 = vld [vmem:[#allocation8 + $0xe0] sm:$0xf]
        %v2595 = vld [vmem:[#allocation8 + $0xe4] sm:$0xf]
        %v2596 = vld [vmem:[#allocation8 + $0xe8] sm:$0xf]
        %v2597 = vld [vmem:[#allocation8 + $0xec] sm:$0xf]
        %v2598 = vld [vmem:[#allocation8 + $0xf0] sm:$0xf]
        %v2599 = vld [vmem:[#allocation8 + $0xf4] sm:$0xf]
        %v2600 = vld [vmem:[#allocation8 + $0xf8] sm:$0xf]
        %v2601 = vld [vmem:[#allocation8 + $0xfc] sm:$0xf]
        %v2602 = vld [vmem:[#allocation8 + $0x100] sm:$0xf]
        %v2603 = vld [vmem:[#allocation8 + $0x104] sm:$0xf]
        %v2604 = vld [vmem:[#allocation8 + $0x108] sm:$0xf]
        %v2605 = vld [vmem:[#allocation8 + $0x10c] sm:$0xf]
        %v2606 = vld [vmem:[#allocation8 + $0x110] sm:$0xf]
        %v2607 = vld [vmem:[#allocation8 + $0x114] sm:$0xf]
        %v2608 = vld [vmem:[#allocation8 + $0x118] sm:$0xf]
        %v2609 = vld [vmem:[#allocation8 + $0x11c] sm:$0xf]
        %v2610 = vld [vmem:[#allocation8 + $0x120] sm:$0xf]
        %v2611 = vld [vmem:[#allocation8 + $0x124] sm:$0xf]
        %v2612 = vld [vmem:[#allocation8 + $0x128] sm:$0xf]
        %v2613 = vld [vmem:[#allocation8 + $0x12c] sm:$0xf]
        %v2614 = vld [vmem:[#allocation8 + $0x130] sm:$0xf]
        %v2615 = vld [vmem:[#allocation8 + $0x134] sm:$0xf]
        %v2616 = vld [vmem:[#allocation8 + $0x138] sm:$0xf]
        %v2617 = vld [vmem:[#allocation8 + $0x13c] sm:$0xf]
        %v2618 = vld [vmem:[#allocation8 + $0x140] sm:$0xf]
        %v2619 = vld [vmem:[#allocation8 + $0x144] sm:$0xf]
        %v2620 = vld [vmem:[#allocation8 + $0x148] sm:$0xf]
        %v2621 = vld [vmem:[#allocation8 + $0x14c] sm:$0xf]
        %v2622 = vld [vmem:[#allocation8 + $0x150] sm:$0xf]
        %v2623 = vld [vmem:[#allocation8 + $0x154] sm:$0xf]
        %v2624 = vld [vmem:[#allocation8 + $0x158] sm:$0xf]
        %v2625 = vld [vmem:[#allocation8 + $0x15c] sm:$0xf]
        %v2626 = vld [vmem:[#allocation8 + $0x160] sm:$0xf]
        %v2627 = vld [vmem:[#allocation8 + $0x164] sm:$0xf]
        %v2628 = vld [vmem:[#allocation8 + $0x168] sm:$0xf]
        %v2629 = vld [vmem:[#allocation8 + $0x16c] sm:$0xf]
        %v2630 = vld [vmem:[#allocation8 + $0x170] sm:$0xf]
        %v2631 = vld [vmem:[#allocation8 + $0x174] sm:$0xf]
        %v2632 = vld [vmem:[#allocation8 + $0x178] sm:$0xf]
        %v2633 = vld [vmem:[#allocation8 + $0x17c] sm:$0xf]
        %v2634 = vld [vmem:[#allocation8 + $0x180] sm:$0xf]
        %v2635 = vld [vmem:[#allocation8 + $0x184] sm:$0xf]
        %v2636 = vld [vmem:[#allocation8 + $0x188] sm:$0xf]
        %v2637 = vld [vmem:[#allocation8 + $0x18c] sm:$0xf]
        %v2638 = vld [vmem:[#allocation8 + $0x190] sm:$0xf]
        %v2639 = vld [vmem:[#allocation8 + $0x194] sm:$0xf]
        %v2640 = vld [vmem:[#allocation8 + $0x198] sm:$0xf]
        %v2641 = vld [vmem:[#allocation8 + $0x19c] sm:$0xf]
        %v2642 = vld [vmem:[#allocation8 + $0x1a0] sm:$0xf]
        %v2643 = vld [vmem:[#allocation8 + $0x1a4] sm:$0xf]
        %v2644 = vld [vmem:[#allocation8 + $0x1a8] sm:$0xf]
        %v2645 = vld [vmem:[#allocation8 + $0x1ac] sm:$0xf]
        %v2646 = vld [vmem:[#allocation8 + $0x1b0] sm:$0xf]
        %v2647 = vld [vmem:[#allocation8 + $0x1b4] sm:$0xf]
        %v2648 = vld [vmem:[#allocation8 + $0x1b8] sm:$0xf]
        %v2649 = vld [vmem:[#allocation8 + $0x1bc] sm:$0xf]
        %v2650 = vld [vmem:[%s6] sm:$0x1]
        %v2652 = vlaneseq
        %v2653 = vshrl.u32 %v2652, 7
        %v2654 = vsub.s32 0, %v2653
        %v2655 = vrot.slane %v2650, %v2654
        %v2769 = vunpack.c.l.b16 %v2538
        %v2770 = vunpack.c.l.b16 %v2539
        %v2771 = vunpack.c.l.b16 %v2540
        %v2772 = vunpack.c.l.b16 %v2541
        %v2773 = vunpack.c.l.b16 %v2542
        %v2774 = vunpack.c.l.b16 %v2543
        %v2775 = vunpack.c.l.b16 %v2544
        %v2776 = vunpack.c.l.b16 %v2545
        %v2777 = vunpack.c.l.b16 %v2546
        %v2778 = vunpack.c.l.b16 %v2547
        %v2779 = vunpack.c.l.b16 %v2548
        %v2780 = vunpack.c.l.b16 %v2549
        %v2781 = vunpack.c.l.b16 %v2550
        %v2782 = vunpack.c.l.b16 %v2551
        %v2783 = vunpack.c.l.b16 %v2552
        %v2784 = vunpack.c.l.b16 %v2553
        %v2785 = vunpack.c.l.b16 %v2554
        %v2786 = vunpack.c.l.b16 %v2555
        %v2787 = vunpack.c.l.b16 %v2556
        %v2788 = vunpack.c.l.b16 %v2557
        %v2789 = vunpack.c.l.b16 %v2558
        %v2790 = vunpack.c.l.b16 %v2559
        %v2791 = vunpack.c.l.b16 %v2560
        %v2792 = vunpack.c.l.b16 %v2561
        %v2793 = vunpack.c.l.b16 %v2562
        %v2794 = vunpack.c.l.b16 %v2563
        %v2795 = vunpack.c.l.b16 %v2564
        %v2796 = vunpack.c.l.b16 %v2565
        %v2797 = vunpack.c.l.b16 %v2566
        %v2798 = vunpack.c.l.b16 %v2567
        %v2799 = vunpack.c.l.b16 %v2568
        %v2800 = vunpack.c.l.b16 %v2569
        %v2801 = vunpack.c.l.b16 %v2570
        %v2802 = vunpack.c.l.b16 %v2571
        %v2803 = vunpack.c.l.b16 %v2572
        %v2804 = vunpack.c.l.b16 %v2573
        %v2805 = vunpack.c.l.b16 %v2574
        %v2806 = vunpack.c.l.b16 %v2575
        %v2807 = vunpack.c.l.b16 %v2576
        %v2808 = vunpack.c.l.b16 %v2577
        %v2809 = vunpack.c.l.b16 %v2578
        %v2810 = vunpack.c.l.b16 %v2579
        %v2811 = vunpack.c.l.b16 %v2580
        %v2812 = vunpack.c.l.b16 %v2581
        %v2813 = vunpack.c.l.b16 %v2582
        %v2814 = vunpack.c.l.b16 %v2583
        %v2815 = vunpack.c.l.b16 %v2584
        %v2816 = vunpack.c.l.b16 %v2585
        %v2817 = vunpack.c.l.b16 %v2586
        %v2818 = vunpack.c.l.b16 %v2587
        %v2819 = vunpack.c.l.b16 %v2588
        %v2820 = vunpack.c.l.b16 %v2589
        %v2821 = vunpack.c.l.b16 %v2590
        %v2822 = vunpack.c.l.b16 %v2591
        %v2823 = vunpack.c.l.b16 %v2592
        %v2824 = vunpack.c.l.b16 %v2593
        %v2825 = vunpack.c.l.b16 %v2594
        %v2826 = vunpack.c.l.b16 %v2595
        %v2827 = vunpack.c.l.b16 %v2596
        %v2828 = vunpack.c.l.b16 %v2597
        %v2829 = vunpack.c.l.b16 %v2598
        %v2830 = vunpack.c.l.b16 %v2599
        %v2831 = vunpack.c.l.b16 %v2600
        %v2832 = vunpack.c.l.b16 %v2601
        %v2833 = vunpack.c.l.b16 %v2602
        %v2834 = vunpack.c.l.b16 %v2603
        %v2835 = vunpack.c.l.b16 %v2604
        %v2836 = vunpack.c.l.b16 %v2605
        %v2837 = vunpack.c.l.b16 %v2606
        %v2838 = vunpack.c.l.b16 %v2607
        %v2839 = vunpack.c.l.b16 %v2608
        %v2840 = vunpack.c.l.b16 %v2609
        %v2841 = vunpack.c.l.b16 %v2610
        %v2842 = vunpack.c.l.b16 %v2611
        %v2843 = vunpack.c.l.b16 %v2612
        %v2844 = vunpack.c.l.b16 %v2613
        %v2845 = vunpack.c.l.b16 %v2614
        %v2846 = vunpack.c.l.b16 %v2615
        %v2847 = vunpack.c.l.b16 %v2616
        %v2848 = vunpack.c.l.b16 %v2617
        %v2849 = vunpack.c.l.b16 %v2618
        %v2850 = vunpack.c.l.b16 %v2619
        %v2851 = vunpack.c.l.b16 %v2620
        %v2852 = vunpack.c.l.b16 %v2621
        %v2853 = vunpack.c.l.b16 %v2622
        %v2854 = vunpack.c.l.b16 %v2623
        %v2855 = vunpack.c.l.b16 %v2624
        %v2856 = vunpack.c.l.b16 %v2625
        %v2857 = vunpack.c.l.b16 %v2626
        %v2858 = vunpack.c.l.b16 %v2627
        %v2859 = vunpack.c.l.b16 %v2628
        %v2860 = vunpack.c.l.b16 %v2629
        %v2861 = vunpack.c.l.b16 %v2630
        %v2862 = vunpack.c.l.b16 %v2631
        %v2863 = vunpack.c.l.b16 %v2632
        %v2864 = vunpack.c.l.b16 %v2633
        %v2865 = vunpack.c.l.b16 %v2634
        %v2866 = vunpack.c.l.b16 %v2635
        %v2867 = vunpack.c.l.b16 %v2636
        %v2868 = vunpack.c.l.b16 %v2637
        %v2869 = vunpack.c.l.b16 %v2638
        %v2870 = vunpack.c.l.b16 %v2639
        %v2871 = vunpack.c.l.b16 %v2640
        %v2872 = vunpack.c.l.b16 %v2641
        %v2873 = vunpack.c.l.b16 %v2642
        %v2874 = vunpack.c.l.b16 %v2643
        %v2875 = vunpack.c.l.b16 %v2644
        %v2876 = vunpack.c.l.b16 %v2645
        %v2877 = vunpack.c.l.b16 %v2646
        %v2878 = vunpack.c.l.b16 %v2647
        %v2879 = vunpack.c.l.b16 %v2648
        %v2880 = vunpack.c.l.b16 %v2649
        %v2881 = vpack.c.b16 %v2770, %v2769
        %v2882 = vpack.c.b16 %v2772, %v2771
        %v2883 = vpack.c.b16 %v2774, %v2773
        %v2884 = vpack.c.b16 %v2776, %v2775
        %v2885 = vpack.c.b16 %v2778, %v2777
        %v2886 = vpack.c.b16 %v2780, %v2779
        %v2887 = vpack.c.b16 %v2782, %v2781
        %v2888 = vpack.c.b16 %v2784, %v2783
        %v2889 = vpack.c.b16 %v2786, %v2785
        %v2890 = vpack.c.b16 %v2788, %v2787
        %v2891 = vpack.c.b16 %v2790, %v2789
        %v2892 = vpack.c.b16 %v2792, %v2791
        %v2893 = vpack.c.b16 %v2794, %v2793
        %v2894 = vpack.c.b16 %v2796, %v2795
        %v2895 = vpack.c.b16 %v2798, %v2797
        %v2896 = vpack.c.b16 %v2800, %v2799
        %v2897 = vpack.c.b16 %v2802, %v2801
        %v2898 = vpack.c.b16 %v2804, %v2803
        %v2899 = vpack.c.b16 %v2806, %v2805
        %v2900 = vpack.c.b16 %v2808, %v2807
        %v2901 = vpack.c.b16 %v2810, %v2809
        %v2902 = vpack.c.b16 %v2812, %v2811
        %v2903 = vpack.c.b16 %v2814, %v2813
        %v2904 = vpack.c.b16 %v2816, %v2815
        %v2905 = vpack.c.b16 %v2818, %v2817
        %v2906 = vpack.c.b16 %v2820, %v2819
        %v2907 = vpack.c.b16 %v2822, %v2821
        %v2908 = vpack.c.b16 %v2824, %v2823
        %v2909 = vpack.c.b16 %v2826, %v2825
        %v2910 = vpack.c.b16 %v2828, %v2827
        %v2911 = vpack.c.b16 %v2830, %v2829
        %v2912 = vpack.c.b16 %v2832, %v2831
        %v2913 = vpack.c.b16 %v2834, %v2833
        %v2914 = vpack.c.b16 %v2836, %v2835
        %v2915 = vpack.c.b16 %v2838, %v2837
        %v2916 = vpack.c.b16 %v2840, %v2839
        %v2917 = vpack.c.b16 %v2842, %v2841
        %v2918 = vpack.c.b16 %v2844, %v2843
        %v2919 = vpack.c.b16 %v2846, %v2845
        %v2920 = vpack.c.b16 %v2848, %v2847
        %v2921 = vpack.c.b16 %v2850, %v2849
        %v2922 = vpack.c.b16 %v2852, %v2851
        %v2923 = vpack.c.b16 %v2854, %v2853
        %v2924 = vpack.c.b16 %v2856, %v2855
        %v2925 = vpack.c.b16 %v2858, %v2857
        %v2926 = vpack.c.b16 %v2860, %v2859
        %v2927 = vpack.c.b16 %v2862, %v2861
        %v2928 = vpack.c.b16 %v2864, %v2863
        %v2929 = vpack.c.b16 %v2866, %v2865
        %v2930 = vpack.c.b16 %v2868, %v2867
        %v2931 = vpack.c.b16 %v2870, %v2869
        %v2932 = vpack.c.b16 %v2872, %v2871
        %v2933 = vpack.c.b16 %v2874, %v2873
        %v2934 = vpack.c.b16 %v2876, %v2875
        %v2935 = vpack.c.b16 %v2878, %v2877
        %v2936 = vpack.c.b16 %v2880, %v2879
        %2993 = vmatprep.subr.bf16.mxu0 0
        %2994 = vmatpush1.bf16.msra.mxu0 %v2881
        %2995 = vmatprep.subr.bf16.mxu0 0
        %2996 = vmatpush1.bf16.msra.mxu0 %v2882
        %2997 = vmatprep.subr.bf16.mxu0 0
        %2998 = vmatpush1.bf16.msra.mxu0 %v2883
        %2999 = vmatprep.subr.bf16.mxu0 0
        %3000 = vmatpush1.bf16.msra.mxu0 %v2884
        %3001 = vmatprep.subr.bf16.mxu0 0
        %3002 = vmatpush1.bf16.msra.mxu0 %v2885
        %3003 = vmatprep.subr.bf16.mxu0 0
        %3004 = vmatpush1.bf16.msra.mxu0 %v2886
        %3005 = vmatprep.subr.bf16.mxu0 0
        %3006 = vmatpush1.bf16.msra.mxu0 %v2887
        %3007 = vmatprep.subr.bf16.mxu0 0
        %3008 = vmatpush1.bf16.msra.mxu0 %v2888
        %3009 = vmatprep.subr.bf16.mxu0 0
        %3010 = vmatpush1.bf16.msra.mxu0 %v2889
        %3011 = vmatprep.subr.bf16.mxu0 0
        %3012 = vmatpush1.bf16.msra.mxu0 %v2890
        %3013 = vmatprep.subr.bf16.mxu0 0
        %3014 = vmatpush1.bf16.msra.mxu0 %v2891
        %3015 = vmatprep.subr.bf16.mxu0 0
        %3016 = vmatpush1.bf16.msra.mxu0 %v2892
        %3017 = vmatprep.subr.bf16.mxu0 0
        %3018 = vmatpush1.bf16.msra.mxu0 %v2893
        %3019 = vmatprep.subr.bf16.mxu0 0
        %3020 = vmatpush1.bf16.msra.mxu0 %v2894
        %3021 = vmatprep.subr.bf16.mxu0 0
        %3022 = vmatpush1.bf16.msra.mxu0 %v2895
        %3023 = vmatprep.subr.bf16.mxu0 0
        %3024 = vmatpush1.bf16.msra.mxu0 %v2896
        %3025 = vmatprep.mubr.bf16.mxu0 %v2512
        %3026 = vmatmul.mubr.bf16.gmra.mrb[0].mxu0 %v2512
        %v3027 = vpop.f32.mrb[0].mxu0
        %v3028 = vadd.f32 %v2655, %v3027
        %v3029 = vpop.f32.mrb[0].mxu0
        %v3030 = vpop.f32.mrb[0].mxu0
        %v3031 = vadd.f32 %v2655, %v3030
        %v3032 = vpop.f32.mrb[0].mxu0
        %3033 = vmatprep.mubr.bf16.mxu0 %v2522
        %3034 = vmatmul.mubr.bf16.gmra.mrb[0].mxu0 %v2513
        %v3035 = vpop.f32.mrb[0].mxu0
        %v3036 = vadd.f32 %v2655, %v3035
        %v3037 = vpop.f32.mrb[0].mxu0
        %v3038 = vpop.f32.mrb[0].mxu0
        %v3039 = vadd.f32 %v2655, %v3038
        %v3040 = vpop.f32.mrb[0].mxu0
        %3041 = vmatprep.mubr.bf16.mxu0 %v2523
        %3042 = vmatmul.mubr.bf16.gmra.mrb[0].mxu0 %v2514
        %v3043 = vpop.f32.mrb[0].mxu0
        %v3044 = vadd.f32 %v2655, %v3043
        %v3045 = vpop.f32.mrb[0].mxu0
        %v3046 = vpop.f32.mrb[0].mxu0
        %v3047 = vadd.f32 %v2655, %v3046
        %v3048 = vpop.f32.mrb[0].mxu0
        %3049 = vmatprep.mubr.bf16.mxu0 %v2524
        %3050 = vmatmul.mubr.bf16.gmra.mrb[0].mxu0 %v2515
        %v3051 = vpop.f32.mrb[0].mxu0
        %v3052 = vadd.f32 %v2655, %v3051
        %v3053 = vpop.f32.mrb[0].mxu0
        %v3054 = vpop.f32.mrb[0].mxu0
        %v3055 = vadd.f32 %v2655, %v3054
        %v3056 = vpop.f32.mrb[0].mxu0
        %3057 = vdwg.mxu0
        %3058 = vmatprep.subr.bf16.mxu0 0
        %3059 = vmatpush1.bf16.msra.mxu0 %v2897
        %3060 = vmatprep.subr.bf16.mxu0 0
        %3061 = vmatpush1.bf16.msra.mxu0 %v2898
        %3062 = vmatprep.subr.bf16.mxu0 0
        %3063 = vmatpush1.bf16.msra.mxu0 %v2899
        %3064 = vmatprep.subr.bf16.mxu0 0
        %3065 = vmatpush1.bf16.msra.mxu0 %v2900
        %3066 = vmatprep.subr.bf16.mxu0 0
        %3067 = vmatpush1.bf16.msra.mxu0 %v2901
        %3068 = vmatprep.subr.bf16.mxu0 0
        %3069 = vmatpush1.bf16.msra.mxu0 %v2902
        %3070 = vmatprep.subr.bf16.mxu0 0
        %3071 = vmatpush1.bf16.msra.mxu0 %v2903
        %3072 = vmatprep.subr.bf16.mxu0 0
        %3073 = vmatpush1.bf16.msra.mxu0 %v2904
        %3074 = vmatprep.subr.bf16.mxu0 0
        %3075 = vmatpush1.bf16.msra.mxu0 %v2905
        %3076 = vmatprep.subr.bf16.mxu0 0
        %3077 = vmatpush1.bf16.msra.mxu0 %v2906
        %3078 = vmatprep.subr.bf16.mxu0 0
        %3079 = vmatpush1.bf16.msra.mxu0 %v2907
        %3080 = vmatprep.subr.bf16.mxu0 0
        %3081 = vmatpush1.bf16.msra.mxu0 %v2908
        %3082 = vmatprep.subr.bf16.mxu0 0
        %3083 = vmatpush1.bf16.msra.mxu0 %v2909
        %3084 = vmatprep.subr.bf16.mxu0 0
        %3085 = vmatpush1.bf16.msra.mxu0 %v2910
        %3086 = vmatprep.subr.bf16.mxu0 0
        %3087 = vmatpush1.bf16.msra.mxu0 %v2911
        %3088 = vmatprep.subr.bf16.mxu0 0
        %3089 = vmatpush1.bf16.msra.mxu0 %v2912
        %3090 = vmatprep.mubr.bf16.mxu0 %v2522
        %3091 = vmatmul.mubr.bf16.gmra.mrb[0].mxu0 %v2513
        %v3092 = vpop.f32.mrb[0].mxu0
        %v3093 = vadd.f32 %v3028, %v3092
        %v3094 = vpop.f32.mrb[0].mxu0
        %v3095 = vpop.f32.mrb[0].mxu0
        %v3096 = vadd.f32 %v3031, %v3095
        %v3097 = vpop.f32.mrb[0].mxu0
        %3098 = vmatprep.mubr.bf16.mxu0 %v2523
        %3099 = vmatmul.mubr.bf16.gmra.mrb[0].mxu0 %v2514
        %v3100 = vpop.f32.mrb[0].mxu0
        %v3101 = vadd.f32 %v3036, %v3100
        %v3102 = vpop.f32.mrb[0].mxu0
        %v3103 = vpop.f32.mrb[0].mxu0
        %v3104 = vadd.f32 %v3039, %v3103
        %v3105 = vpop.f32.mrb[0].mxu0
        %3106 = vmatprep.mubr.bf16.mxu0 %v2524
        %3107 = vmatmul.mubr.bf16.gmra.mrb[0].mxu0 %v2515
        %v3108 = vpop.f32.mrb[0].mxu0
        %v3109 = vadd.f32 %v3044, %v3108
        %v3110 = vpop.f32.mrb[0].mxu0
        %v3111 = vpop.f32.mrb[0].mxu0
        %v3112 = vadd.f32 %v3047, %v3111
        %v3113 = vpop.f32.mrb[0].mxu0
        %3114 = vmatprep.mubr.bf16.mxu0 %v2534
        %3115 = vmatmul.mubr.bf16.gmra.mrb[0].mxu0 %v2530
        %v3116 = vpop.f32.mrb[0].mxu0
        %v3117 = vadd.f32 %v3052, %v3116
        %v3118 = vpop.f32.mrb[0].mxu0
        %v3119 = vpop.f32.mrb[0].mxu0
        %v3120 = vadd.f32 %v3055, %v3119
        %v3121 = vpop.f32.mrb[0].mxu0
        %3122 = vdwg.mxu0
        %3123 = vmatprep.subr.bf16.mxu0 0
        %3124 = vmatpush1.bf16.msra.mxu0 %v2913
        %3125 = vmatprep.subr.bf16.mxu0 0
        %3126 = vmatpush1.bf16.msra.mxu0 %v2914
        %3127 = vmatprep.subr.bf16.mxu0 0
        %3128 = vmatpush1.bf16.msra.mxu0 %v2915
        %3129 = vmatprep.subr.bf16.mxu0 0
        %3130 = vmatpush1.bf16.msra.mxu0 %v2916
        %3131 = vmatprep.subr.bf16.mxu0 0
        %3132 = vmatpush1.bf16.msra.mxu0 %v2917
        %3133 = vmatprep.subr.bf16.mxu0 0
        %3134 = vmatpush1.bf16.msra.mxu0 %v2918
        %3135 = vmatprep.subr.bf16.mxu0 0
        %3136 = vmatpush1.bf16.msra.mxu0 %v2919
        %3137 = vmatprep.subr.bf16.mxu0 0
        %3138 = vmatpush1.bf16.msra.mxu0 %v2920
        %3139 = vmatprep.subr.bf16.mxu0 0
        %3140 = vmatpush1.bf16.msra.mxu0 %v2921
        %3141 = vmatprep.subr.bf16.mxu0 0
        %3142 = vmatpush1.bf16.msra.mxu0 %v2922
        %3143 = vmatprep.subr.bf16.mxu0 0
        %3144 = vmatpush1.bf16.msra.mxu0 %v2923
        %3145 = vmatprep.subr.bf16.mxu0 0
        %3146 = vmatpush1.bf16.msra.mxu0 %v2924
        %3147 = vmatprep.subr.bf16.mxu0 0
        %3148 = vmatpush1.bf16.msra.mxu0 %v2925
        %3149 = vmatprep.subr.bf16.mxu0 0
        %3150 = vmatpush1.bf16.msra.mxu0 %v2926
        %3151 = vmatprep.subr.bf16.mxu0 0
        %3152 = vmatpush1.bf16.msra.mxu0 %v2927
        %3153 = vmatprep.subr.bf16.mxu0 0
        %3154 = vmatpush1.bf16.msra.mxu0 %v2928
        %3155 = vmatprep.mubr.bf16.mxu0 %v2523
        %3156 = vmatmul.mubr.bf16.gmra.mrb[0].mxu0 %v2514
        %v3157 = vpop.f32.mrb[0].mxu0
        %v3158 = vadd.f32 %v3093, %v3157
        %v3159 = vpop.f32.mrb[0].mxu0
        %v3160 = vpop.f32.mrb[0].mxu0
        %v3161 = vadd.f32 %v3096, %v3160
        %v3162 = vpop.f32.mrb[0].mxu0
        %3163 = vmatprep.mubr.bf16.mxu0 %v2524
        %3164 = vmatmul.mubr.bf16.gmra.mrb[0].mxu0 %v2515
        %v3165 = vpop.f32.mrb[0].mxu0
        %v3166 = vadd.f32 %v3101, %v3165
        %v3167 = vpop.f32.mrb[0].mxu0
        %v3168 = vpop.f32.mrb[0].mxu0
        %v3169 = vadd.f32 %v3104, %v3168
        %v3170 = vpop.f32.mrb[0].mxu0
        %3171 = vmatprep.mubr.bf16.mxu0 %v2534
        %3172 = vmatmul.mubr.bf16.gmra.mrb[0].mxu0 %v2530
        %v3173 = vpop.f32.mrb[0].mxu0
        %v3174 = vadd.f32 %v3109, %v3173
        %v3175 = vpop.f32.mrb[0].mxu0
        %v3176 = vpop.f32.mrb[0].mxu0
        %v3177 = vadd.f32 %v3112, %v3176
        %v3178 = vpop.f32.mrb[0].mxu0
        %3179 = vmatprep.mubr.bf16.mxu0 %v2512
        %3180 = vmatmul.mubr.bf16.gmra.mrb[0].mxu0 %v2536
        %v3181 = vpop.f32.mrb[0].mxu0
        %v3182 = vadd.f32 %v3117, %v3181
        %v3183 = vpop.f32.mrb[0].mxu0
        %v3184 = vpop.f32.mrb[0].mxu0
        %v3185 = vadd.f32 %v3120, %v3184
        %v3186 = vpop.f32.mrb[0].mxu0
        %3187 = vdwg.mxu0
        %3188 = vmatprep.subr.bf16.mxu0 0
        %3189 = vmatpush1.bf16.msra.mxu0 %v2929
        %3190 = vmatprep.subr.bf16.mxu0 0
        %3191 = vmatpush1.bf16.msra.mxu0 %v2930
        %3192 = vmatprep.subr.bf16.mxu0 0
        %3193 = vmatpush1.bf16.msra.mxu0 %v2931
        %3194 = vmatprep.subr.bf16.mxu0 0
        %3195 = vmatpush1.bf16.msra.mxu0 %v2932
        %3196 = vmatprep.subr.bf16.mxu0 0
        %3197 = vmatpush1.bf16.msra.mxu0 %v2933
        %3198 = vmatprep.subr.bf16.mxu0 0
        %3199 = vmatpush1.bf16.msra.mxu0 %v2934
        %3200 = vmatprep.subr.bf16.mxu0 0
        %3201 = vmatpush1.bf16.msra.mxu0 %v2935
        %3202 = vmatprep.subr.bf16.mxu0 0
        %3203 = vmatpush1.bf16.msra.mxu0 %v2936
        %3204 = vmatprep.subr.bf16.mxu0 0
        %3205 = vmatpush1.bf16.msra.mxu0 0
        %3206 = vmatprep.subr.bf16.mxu0 0
        %3207 = vmatpush1.bf16.msra.mxu0 0
        %3208 = vmatprep.subr.bf16.mxu0 0
        %3209 = vmatpush1.bf16.msra.mxu0 0
        %3210 = vmatprep.subr.bf16.mxu0 0
        %3211 = vmatpush1.bf16.msra.mxu0 0
        %3212 = vmatprep.subr.bf16.mxu0 0
        %3213 = vmatpush1.bf16.msra.mxu0 0
        %3214 = vmatprep.subr.bf16.mxu0 0
        %3215 = vmatpush1.bf16.msra.mxu0 0
        %3216 = vmatprep.subr.bf16.mxu0 0
        %3217 = vmatpush1.bf16.msra.mxu0 0
        %3218 = vmatprep.subr.bf16.mxu0 0
        %3219 = vmatpush1.bf16.msra.mxu0 0
        %3220 = vmatprep.mubr.bf16.mxu0 0
        %3221 = vmatmul.mubr.bf16.gmra.mrb[0].mxu0 %v2515
        %v3222 = vpop.f32.mrb[0].mxu0
        %v3223 = vadd.f32 %v3158, %v3222
        %v3224 = vpop.f32.mrb[0].mxu0
        %v3225 = vpop.f32.mrb[0].mxu0
        %v3226 = vadd.f32 %v3161, %v3225
        %v3227 = vpop.f32.mrb[0].mxu0
        %3228 = vmatprep.mubr.bf16.mxu0 0
        %3229 = vmatmul.mubr.bf16.gmra.mrb[0].mxu0 %v2530
        %v3230 = vpop.f32.mrb[0].mxu0
        %v3231 = vadd.f32 %v3166, %v3230
        %v3232 = vpop.f32.mrb[0].mxu0
        %v3233 = vpop.f32.mrb[0].mxu0
        %v3234 = vadd.f32 %v3169, %v3233
        %v3235 = vpop.f32.mrb[0].mxu0
        %3236 = vmatprep.mubr.bf16.mxu0 0
        %3237 = vmatmul.mubr.bf16.gmra.mrb[0].mxu0 %v2536
        %v3238 = vpop.f32.mrb[0].mxu0
        %v3239 = vadd.f32 %v3174, %v3238
        %v3240 = vpop.f32.mrb[0].mxu0
        %v3241 = vpop.f32.mrb[0].mxu0
        %v3242 = vadd.f32 %v3177, %v3241
        %v3243 = vpop.f32.mrb[0].mxu0
        %3244 = vmatprep.mubr.bf16.mxu0 0
        %3245 = vmatmul.mubr.bf16.gmra.mrb[0].mxu0 %v2512
        %v3246 = vpop.f32.mrb[0].mxu0
        %v3247 = vadd.f32 %v3182, %v3246
        %v3248 = vpop.f32.mrb[0].mxu0
        %v3249 = vpop.f32.mrb[0].mxu0
        %v3250 = vadd.f32 %v3185, %v3249
        %v3251 = vpop.f32.mrb[0].mxu0
        %3252 = vdwg.mxu0
        %v3253 = vmax.f32 %v3223, 0.0
        %v3254 = vmax.f32 %v3226, 0.0
        %v3255 = vmax.f32 %v3231, 0.0
        %v3256 = vmax.f32 %v3234, 0.0
        %v3257 = vmax.f32 %v3239, 0.0
        %v3258 = vmax.f32 %v3242, 0.0
        %v3259 = vmax.f32 %v3247, 0.0
        %v3260 = vmax.f32 %v3250, 0.0
        %v3261 = vpack.c.bf16 %v1472, %v1470
        %v3262 = vpack.c.bf16 %v3254, %v3253
        %v3263 = vpack.c.bf16 %v1476, %v1474
        %v3264 = vpack.c.bf16 %v3256, %v3255
        %v3265 = vpack.c.bf16 %v1480, %v1478
        %v3266 = vpack.c.bf16 %v3258, %v3257
        %v3267 = vpack.c.bf16 %v1484, %v1482
        %v3268 = vpack.c.bf16 %v3260, %v3259
        %v3269 = vld [vmem:[#allocation10] sm:$0xff]
        %v3270 = vld [vmem:[#allocation10 + $0x8] sm:$0xff]
        %v3271 = vld [vmem:[#allocation10 + $0x10] sm:$0xff]
        %v3272 = vld [vmem:[#allocation10 + $0x18] sm:$0xf]
        %v3273 = vld [vmem:[#allocation10 + $0x1c] sm:$0xff]
        %v3274 = vld [vmem:[#allocation10 + $0x24] sm:$0xff]
        %v3275 = vld [vmem:[#allocation10 + $0x2c] sm:$0xff]
        %v3276 = vld [vmem:[#allocation10 + $0x34] sm:$0xf]
        %v3277 = vld [vmem:[#allocation10 + $0x38] sm:$0xff]
        %v3278 = vld [vmem:[#allocation10 + $0x40] sm:$0xff]
        %v3279 = vld [vmem:[#allocation10 + $0x48] sm:$0xff]
        %v3280 = vld [vmem:[#allocation10 + $0x50] sm:$0xf]
        %v3281 = vld [vmem:[#allocation10 + $0x54] sm:$0xff]
        %v3282 = vld [vmem:[#allocation10 + $0x5c] sm:$0xff]
        %v3283 = vld [vmem:[#allocation10 + $0x64] sm:$0xff]
        %v3284 = vld [vmem:[#allocation10 + $0x6c] sm:$0xf]
        %v3285 = vld [vmem:[#allocation10 + $0x70] sm:$0xff]
        %v3286 = vld [vmem:[#allocation10 + $0x78] sm:$0xff]
        %v3287 = vld [vmem:[#allocation10 + $0x80] sm:$0xff]
        %v3288 = vld [vmem:[#allocation10 + $0x88] sm:$0xf]
        %v3289 = vld [vmem:[#allocation10 + $0x8c] sm:$0xff]
        %v3290 = vld [vmem:[#allocation10 + $0x94] sm:$0xff]
        %v3291 = vld [vmem:[#allocation10 + $0x9c] sm:$0xff]
        %v3292 = vld [vmem:[#allocation10 + $0xa4] sm:$0xf]
        %v3293 = vld [vmem:[#allocation10 + $0xa8] sm:$0xff]
        %v3294 = vld [vmem:[#allocation10 + $0xb0] sm:$0xff]
        %v3295 = vld [vmem:[#allocation10 + $0xb8] sm:$0xff]
        %v3296 = vld [vmem:[#allocation10 + $0xc0] sm:$0xf]
        %v3297 = vld [vmem:[#allocation10 + $0xc4] sm:$0xff]
        %v3298 = vld [vmem:[#allocation10 + $0xcc] sm:$0xff]
        %v3299 = vld [vmem:[#allocation10 + $0xd4] sm:$0xff]
        %v3300 = vld [vmem:[#allocation10 + $0xdc] sm:$0xf]
        %v3301 = vld [vmem:[#allocation10 + $0xe0] sm:$0xff]
        %v3302 = vld [vmem:[#allocation10 + $0xe8] sm:$0xff]
        %v3303 = vld [vmem:[#allocation10 + $0xf0] sm:$0xff]
        %v3304 = vld [vmem:[#allocation10 + $0xf8] sm:$0xf]
        %v3305 = vld [vmem:[#allocation10 + $0xfc] sm:$0xff]
        %v3306 = vld [vmem:[#allocation10 + $0x104] sm:$0xff]
        %v3307 = vld [vmem:[#allocation10 + $0x10c] sm:$0xff]
        %v3308 = vld [vmem:[#allocation10 + $0x114] sm:$0xf]
        %v3309 = vld [vmem:[#allocation10 + $0x118] sm:$0xff]
        %v3310 = vld [vmem:[#allocation10 + $0x120] sm:$0xff]
        %v3311 = vld [vmem:[#allocation10 + $0x128] sm:$0xff]
        %v3312 = vld [vmem:[#allocation10 + $0x130] sm:$0xf]
        %v3313 = vld [vmem:[#allocation10 + $0x134] sm:$0xff]
        %v3314 = vld [vmem:[#allocation10 + $0x13c] sm:$0xff]
        %v3315 = vld [vmem:[#allocation10 + $0x144] sm:$0xff]
        %v3316 = vld [vmem:[#allocation10 + $0x14c] sm:$0xf]
        %v3317 = vld [vmem:[#allocation10 + $0x150] sm:$0xff]
        %v3318 = vld [vmem:[#allocation10 + $0x158] sm:$0xff]
        %v3319 = vld [vmem:[#allocation10 + $0x160] sm:$0xff]
        %v3320 = vld [vmem:[#allocation10 + $0x168] sm:$0xf]
        %v3321 = vld [vmem:[#allocation10 + $0x16c] sm:$0xff]
        %v3322 = vld [vmem:[#allocation10 + $0x174] sm:$0xff]
        %v3323 = vld [vmem:[#allocation10 + $0x17c] sm:$0xff]
        %v3324 = vld [vmem:[#allocation10 + $0x184] sm:$0xf]
        %v3325 = vld [vmem:[#allocation10 + $0x188] sm:$0xff]
        %v3326 = vld [vmem:[#allocation10 + $0x190] sm:$0xff]
        %v3327 = vld [vmem:[#allocation10 + $0x198] sm:$0xff]
        %v3328 = vld [vmem:[#allocation10 + $0x1a0] sm:$0xf]
        %v3329 = vld [vmem:[#allocation10 + $0x1a4] sm:$0xff]
        %v3330 = vld [vmem:[#allocation10 + $0x1ac] sm:$0xff]
        %v3331 = vld [vmem:[#allocation10 + $0x1b4] sm:$0xff]
        %v3332 = vld [vmem:[#allocation10 + $0x1bc] sm:$0xf]
        %v3333 = vld [vmem:[#allocation10 + $0x1c0] sm:$0xff]
        %v3334 = vld [vmem:[#allocation10 + $0x1c8] sm:$0xff]
        %v3335 = vld [vmem:[#allocation10 + $0x1d0] sm:$0xff]
        %v3336 = vld [vmem:[#allocation10 + $0x1d8] sm:$0xf]
        %v3337 = vld [vmem:[#allocation10 + $0x1dc] sm:$0xff]
        %v3338 = vld [vmem:[#allocation10 + $0x1e4] sm:$0xff]
        %v3339 = vld [vmem:[#allocation10 + $0x1ec] sm:$0xff]
        %v3340 = vld [vmem:[#allocation10 + $0x1f4] sm:$0xf]
        %v3341 = vld [vmem:[#allocation10 + $0x1f8] sm:$0xff]
        %v3342 = vld [vmem:[#allocation10 + $0x200] sm:$0xff]
        %v3343 = vld [vmem:[#allocation10 + $0x208] sm:$0xff]
        %v3344 = vld [vmem:[#allocation10 + $0x210] sm:$0xf]
        %v3345 = vld [vmem:[#allocation10 + $0x214] sm:$0xff]
        %v3346 = vld [vmem:[#allocation10 + $0x21c] sm:$0xff]
        %v3347 = vld [vmem:[#allocation10 + $0x224] sm:$0xff]
        %v3348 = vld [vmem:[#allocation10 + $0x22c] sm:$0xf]
        %v3349 = vld [vmem:[#allocation10 + $0x230] sm:$0xff]
        %v3350 = vld [vmem:[#allocation10 + $0x238] sm:$0xff]
        %v3351 = vld [vmem:[#allocation10 + $0x240] sm:$0xff]
        %v3352 = vld [vmem:[#allocation10 + $0x248] sm:$0xf]
        %v3353 = vld [vmem:[#allocation10 + $0x24c] sm:$0xff]
        %v3354 = vld [vmem:[#allocation10 + $0x254] sm:$0xff]
        %v3355 = vld [vmem:[#allocation10 + $0x25c] sm:$0xff]
        %v3356 = vld [vmem:[#allocation10 + $0x264] sm:$0xf]
        %v3357 = vld [vmem:[#allocation10 + $0x268] sm:$0xff]
        %v3358 = vld [vmem:[#allocation10 + $0x270] sm:$0xff]
        %v3359 = vld [vmem:[#allocation10 + $0x278] sm:$0xff]
        %v3360 = vld [vmem:[#allocation10 + $0x280] sm:$0xf]
        %v3361 = vld [vmem:[#allocation10 + $0x284] sm:$0xff]
        %v3362 = vld [vmem:[#allocation10 + $0x28c] sm:$0xff]
        %v3363 = vld [vmem:[#allocation10 + $0x294] sm:$0xff]
        %v3364 = vld [vmem:[#allocation10 + $0x29c] sm:$0xf]
        %v3365 = vld [vmem:[#allocation10 + $0x2a0] sm:$0xff]
        %v3366 = vld [vmem:[#allocation10 + $0x2a8] sm:$0xff]
        %v3367 = vld [vmem:[#allocation10 + $0x2b0] sm:$0xff]
        %v3368 = vld [vmem:[#allocation10 + $0x2b8] sm:$0xf]
        %v3369 = vld [vmem:[#allocation10 + $0x2bc] sm:$0xff]
        %v3370 = vld [vmem:[#allocation10 + $0x2c4] sm:$0xff]
        %v3371 = vld [vmem:[#allocation10 + $0x2cc] sm:$0xff]
        %v3372 = vld [vmem:[#allocation10 + $0x2d4] sm:$0xf]
        %v3373 = vld [vmem:[#allocation10 + $0x2d8] sm:$0xff]
        %v3374 = vld [vmem:[#allocation10 + $0x2e0] sm:$0xff]
        %v3375 = vld [vmem:[#allocation10 + $0x2e8] sm:$0xff]
        %v3376 = vld [vmem:[#allocation10 + $0x2f0] sm:$0xf]
        %v3377 = vld [vmem:[#allocation10 + $0x2f4] sm:$0xff]
        %v3378 = vld [vmem:[#allocation10 + $0x2fc] sm:$0xff]
        %v3379 = vld [vmem:[#allocation10 + $0x304] sm:$0xff]
        %v3380 = vld [vmem:[#allocation10 + $0x30c] sm:$0xf]
        %v3381 = vld [vmem:[#allocation10 + $0x310] sm:$0xff]
        %v3382 = vld [vmem:[#allocation10 + $0x318] sm:$0xff]
        %v3383 = vld [vmem:[#allocation10 + $0x320] sm:$0xff]
        %v3384 = vld [vmem:[#allocation10 + $0x328] sm:$0xf]
        %v3385 = vld [vmem:[#allocation10 + $0x32c] sm:$0xff]
        %v3386 = vld [vmem:[#allocation10 + $0x334] sm:$0xff]
        %v3387 = vld [vmem:[#allocation10 + $0x33c] sm:$0xff]
        %v3388 = vld [vmem:[#allocation10 + $0x344] sm:$0xf]
        %v3389 = vld [vmem:[#allocation10 + $0x348] sm:$0xff]
        %v3390 = vld [vmem:[#allocation10 + $0x350] sm:$0xff]
        %v3391 = vld [vmem:[#allocation10 + $0x358] sm:$0xff]
        %v3392 = vld [vmem:[#allocation10 + $0x360] sm:$0xf]
        %v3393 = vld [vmem:[#allocation10 + $0x364] sm:$0xff]
        %v3394 = vld [vmem:[#allocation10 + $0x36c] sm:$0xff]
        %v3395 = vld [vmem:[#allocation10 + $0x374] sm:$0xff]
        %v3396 = vld [vmem:[#allocation10 + $0x37c] sm:$0xf]
        %v3397 = vld [vmem:[%s8] sm:$0xff]
        %v3399 = vlaneseq
        %v3400 = vshrl.u32 %v3399, 7
        %v3401 = vsub.s32 0, %v3400
        %v3402 = vrot.slane %v3397, %v3401
        %v3403 = vlaneseq
        %v3404 = vshrl.u32 %v3403, 7
        %v3405 = vsub.s32 1, %v3404
        %v3406 = vrot.slane %v3397, %v3405
        %v3407 = vlaneseq
        %v3408 = vshrl.u32 %v3407, 7
        %v3409 = vsub.s32 2, %v3408
        %v3410 = vrot.slane %v3397, %v3409
        %v3411 = vlaneseq
        %v3412 = vshrl.u32 %v3411, 7
        %v3413 = vsub.s32 3, %v3412
        %v3414 = vrot.slane %v3397, %v3413
        %v3415 = vlaneseq
        %v3416 = vshrl.u32 %v3415, 7
        %v3417 = vsub.s32 4, %v3416
        %v3418 = vrot.slane %v3397, %v3417
        %v3419 = vlaneseq
        %v3420 = vshrl.u32 %v3419, 7
        %v3421 = vsub.s32 5, %v3420
        %v3422 = vrot.slane %v3397, %v3421
        %v3423 = vlaneseq
        %v3424 = vshrl.u32 %v3423, 7
        %v3425 = vsub.s32 6, %v3424
        %v3426 = vrot.slane %v3397, %v3425
        %v3562 = vunpack.c.l.b16 %v3269
        %v3563 = vunpack.c.h.b16 %v3269
        %v3564 = vunpack.c.l.b16 %v3270
        %v3565 = vunpack.c.h.b16 %v3270
        %v3566 = vunpack.c.l.b16 %v3271
        %v3567 = vunpack.c.h.b16 %v3271
        %v3568 = vunpack.c.l.b16 %v3272
        %v3569 = vunpack.c.l.b16 %v3273
        %v3570 = vunpack.c.h.b16 %v3273
        %v3571 = vunpack.c.l.b16 %v3274
        %v3572 = vunpack.c.h.b16 %v3274
        %v3573 = vunpack.c.l.b16 %v3275
        %v3574 = vunpack.c.h.b16 %v3275
        %v3575 = vunpack.c.l.b16 %v3276
        %v3576 = vunpack.c.l.b16 %v3277
        %v3577 = vunpack.c.h.b16 %v3277
        %v3578 = vunpack.c.l.b16 %v3278
        %v3579 = vunpack.c.h.b16 %v3278
        %v3580 = vunpack.c.l.b16 %v3279
        %v3581 = vunpack.c.h.b16 %v3279
        %v3582 = vunpack.c.l.b16 %v3280
        %v3583 = vunpack.c.l.b16 %v3281
        %v3584 = vunpack.c.h.b16 %v3281
        %v3585 = vunpack.c.l.b16 %v3282
        %v3586 = vunpack.c.h.b16 %v3282
        %v3587 = vunpack.c.l.b16 %v3283
        %v3588 = vunpack.c.h.b16 %v3283
        %v3589 = vunpack.c.l.b16 %v3284
        %v3590 = vunpack.c.l.b16 %v3285
        %v3591 = vunpack.c.h.b16 %v3285
        %v3592 = vunpack.c.l.b16 %v3286
        %v3593 = vunpack.c.h.b16 %v3286
        %v3594 = vunpack.c.l.b16 %v3287
        %v3595 = vunpack.c.h.b16 %v3287
        %v3596 = vunpack.c.l.b16 %v3288
        %v3597 = vunpack.c.l.b16 %v3289
        %v3598 = vunpack.c.h.b16 %v3289
        %v3599 = vunpack.c.l.b16 %v3290
        %v3600 = vunpack.c.h.b16 %v3290
        %v3601 = vunpack.c.l.b16 %v3291
        %v3602 = vunpack.c.h.b16 %v3291
        %v3603 = vunpack.c.l.b16 %v3292
        %v3604 = vunpack.c.l.b16 %v3293
        %v3605 = vunpack.c.h.b16 %v3293
        %v3606 = vunpack.c.l.b16 %v3294
        %v3607 = vunpack.c.h.b16 %v3294
        %v3608 = vunpack.c.l.b16 %v3295
        %v3609 = vunpack.c.h.b16 %v3295
        %v3610 = vunpack.c.l.b16 %v3296
        %v3611 = vunpack.c.l.b16 %v3297
        %v3612 = vunpack.c.h.b16 %v3297
        %v3613 = vunpack.c.l.b16 %v3298
        %v3614 = vunpack.c.h.b16 %v3298
        %v3615 = vunpack.c.l.b16 %v3299
        %v3616 = vunpack.c.h.b16 %v3299
        %v3617 = vunpack.c.l.b16 %v3300
        %v3618 = vunpack.c.l.b16 %v3301
        %v3619 = vunpack.c.h.b16 %v3301
        %v3620 = vunpack.c.l.b16 %v3302
        %v3621 = vunpack.c.h.b16 %v3302
        %v3622 = vunpack.c.l.b16 %v3303
        %v3623 = vunpack.c.h.b16 %v3303
        %v3624 = vunpack.c.l.b16 %v3304
        %v3625 = vunpack.c.l.b16 %v3305
        %v3626 = vunpack.c.h.b16 %v3305
        %v3627 = vunpack.c.l.b16 %v3306
        %v3628 = vunpack.c.h.b16 %v3306
        %v3629 = vunpack.c.l.b16 %v3307
        %v3630 = vunpack.c.h.b16 %v3307
        %v3631 = vunpack.c.l.b16 %v3308
        %v3632 = vunpack.c.l.b16 %v3309
        %v3633 = vunpack.c.h.b16 %v3309
        %v3634 = vunpack.c.l.b16 %v3310
        %v3635 = vunpack.c.h.b16 %v3310
        %v3636 = vunpack.c.l.b16 %v3311
        %v3637 = vunpack.c.h.b16 %v3311
        %v3638 = vunpack.c.l.b16 %v3312
        %v3639 = vunpack.c.l.b16 %v3313
        %v3640 = vunpack.c.h.b16 %v3313
        %v3641 = vunpack.c.l.b16 %v3314
        %v3642 = vunpack.c.h.b16 %v3314
        %v3643 = vunpack.c.l.b16 %v3315
        %v3644 = vunpack.c.h.b16 %v3315
        %v3645 = vunpack.c.l.b16 %v3316
        %v3646 = vunpack.c.l.b16 %v3317
        %v3647 = vunpack.c.h.b16 %v3317
        %v3648 = vunpack.c.l.b16 %v3318
        %v3649 = vunpack.c.h.b16 %v3318
        %v3650 = vunpack.c.l.b16 %v3319
        %v3651 = vunpack.c.h.b16 %v3319
        %v3652 = vunpack.c.l.b16 %v3320
        %v3653 = vunpack.c.l.b16 %v3321
        %v3654 = vunpack.c.h.b16 %v3321
        %v3655 = vunpack.c.l.b16 %v3322
        %v3656 = vunpack.c.h.b16 %v3322
        %v3657 = vunpack.c.l.b16 %v3323
        %v3658 = vunpack.c.h.b16 %v3323
        %v3659 = vunpack.c.l.b16 %v3324
        %v3660 = vunpack.c.l.b16 %v3325
        %v3661 = vunpack.c.h.b16 %v3325
        %v3662 = vunpack.c.l.b16 %v3326
        %v3663 = vunpack.c.h.b16 %v3326
        %v3664 = vunpack.c.l.b16 %v3327
        %v3665 = vunpack.c.h.b16 %v3327
        %v3666 = vunpack.c.l.b16 %v3328
        %v3667 = vunpack.c.l.b16 %v3329
        %v3668 = vunpack.c.h.b16 %v3329
        %v3669 = vunpack.c.l.b16 %v3330
        %v3670 = vunpack.c.h.b16 %v3330
        %v3671 = vunpack.c.l.b16 %v3331
        %v3672 = vunpack.c.h.b16 %v3331
        %v3673 = vunpack.c.l.b16 %v3332
        %v3674 = vunpack.c.l.b16 %v3333
        %v3675 = vunpack.c.h.b16 %v3333
        %v3676 = vunpack.c.l.b16 %v3334
        %v3677 = vunpack.c.h.b16 %v3334
        %v3678 = vunpack.c.l.b16 %v3335
        %v3679 = vunpack.c.h.b16 %v3335
        %v3680 = vunpack.c.l.b16 %v3336
        %v3681 = vunpack.c.l.b16 %v3337
        %v3682 = vunpack.c.h.b16 %v3337
        %v3683 = vunpack.c.l.b16 %v3338
        %v3684 = vunpack.c.h.b16 %v3338
        %v3685 = vunpack.c.l.b16 %v3339
        %v3686 = vunpack.c.h.b16 %v3339
        %v3687 = vunpack.c.l.b16 %v3340
        %v3688 = vunpack.c.l.b16 %v3341
        %v3689 = vunpack.c.h.b16 %v3341
        %v3690 = vunpack.c.l.b16 %v3342
        %v3691 = vunpack.c.h.b16 %v3342
        %v3692 = vunpack.c.l.b16 %v3343
        %v3693 = vunpack.c.h.b16 %v3343
        %v3694 = vunpack.c.l.b16 %v3344
        %v3695 = vunpack.c.l.b16 %v3345
        %v3696 = vunpack.c.h.b16 %v3345
        %v3697 = vunpack.c.l.b16 %v3346
        %v3698 = vunpack.c.h.b16 %v3346
        %v3699 = vunpack.c.l.b16 %v3347
        %v3700 = vunpack.c.h.b16 %v3347
        %v3701 = vunpack.c.l.b16 %v3348
        %v3702 = vunpack.c.l.b16 %v3349
        %v3703 = vunpack.c.h.b16 %v3349
        %v3704 = vunpack.c.l.b16 %v3350
        %v3705 = vunpack.c.h.b16 %v3350
        %v3706 = vunpack.c.l.b16 %v3351
        %v3707 = vunpack.c.h.b16 %v3351
        %v3708 = vunpack.c.l.b16 %v3352
        %v3709 = vunpack.c.l.b16 %v3353
        %v3710 = vunpack.c.h.b16 %v3353
        %v3711 = vunpack.c.l.b16 %v3354
        %v3712 = vunpack.c.h.b16 %v3354
        %v3713 = vunpack.c.l.b16 %v3355
        %v3714 = vunpack.c.h.b16 %v3355
        %v3715 = vunpack.c.l.b16 %v3356
        %v3716 = vunpack.c.l.b16 %v3357
        %v3717 = vunpack.c.h.b16 %v3357
        %v3718 = vunpack.c.l.b16 %v3358
        %v3719 = vunpack.c.h.b16 %v3358
        %v3720 = vunpack.c.l.b16 %v3359
        %v3721 = vunpack.c.h.b16 %v3359
        %v3722 = vunpack.c.l.b16 %v3360
        %v3723 = vunpack.c.l.b16 %v3361
        %v3724 = vunpack.c.h.b16 %v3361
        %v3725 = vunpack.c.l.b16 %v3362
        %v3726 = vunpack.c.h.b16 %v3362
        %v3727 = vunpack.c.l.b16 %v3363
        %v3728 = vunpack.c.h.b16 %v3363
        %v3729 = vunpack.c.l.b16 %v3364
        %v3730 = vunpack.c.l.b16 %v3365
        %v3731 = vunpack.c.h.b16 %v3365
        %v3732 = vunpack.c.l.b16 %v3366
        %v3733 = vunpack.c.h.b16 %v3366
        %v3734 = vunpack.c.l.b16 %v3367
        %v3735 = vunpack.c.h.b16 %v3367
        %v3736 = vunpack.c.l.b16 %v3368
        %v3737 = vunpack.c.l.b16 %v3369
        %v3738 = vunpack.c.h.b16 %v3369
        %v3739 = vunpack.c.l.b16 %v3370
        %v3740 = vunpack.c.h.b16 %v3370
        %v3741 = vunpack.c.l.b16 %v3371
        %v3742 = vunpack.c.h.b16 %v3371
        %v3743 = vunpack.c.l.b16 %v3372
        %v3744 = vunpack.c.l.b16 %v3373
        %v3745 = vunpack.c.h.b16 %v3373
        %v3746 = vunpack.c.l.b16 %v3374
        %v3747 = vunpack.c.h.b16 %v3374
        %v3748 = vunpack.c.l.b16 %v3375
        %v3749 = vunpack.c.h.b16 %v3375
        %v3750 = vunpack.c.l.b16 %v3376
        %v3751 = vunpack.c.l.b16 %v3377
        %v3752 = vunpack.c.h.b16 %v3377
        %v3753 = vunpack.c.l.b16 %v3378
        %v3754 = vunpack.c.h.b16 %v3378
        %v3755 = vunpack.c.l.b16 %v3379
        %v3756 = vunpack.c.h.b16 %v3379
        %v3757 = vunpack.c.l.b16 %v3380
        %v3758 = vunpack.c.l.b16 %v3381
        %v3759 = vunpack.c.h.b16 %v3381
        %v3760 = vunpack.c.l.b16 %v3382
        %v3761 = vunpack.c.h.b16 %v3382
        %v3762 = vunpack.c.l.b16 %v3383
        %v3763 = vunpack.c.h.b16 %v3383
        %v3764 = vunpack.c.l.b16 %v3384
        %v3765 = vunpack.c.l.b16 %v3385
        %v3766 = vunpack.c.h.b16 %v3385
        %v3767 = vunpack.c.l.b16 %v3386
        %v3768 = vunpack.c.h.b16 %v3386
        %v3769 = vunpack.c.l.b16 %v3387
        %v3770 = vunpack.c.h.b16 %v3387
        %v3771 = vunpack.c.l.b16 %v3388
        %v3772 = vunpack.c.l.b16 %v3389
        %v3773 = vunpack.c.h.b16 %v3389
        %v3774 = vunpack.c.l.b16 %v3390
        %v3775 = vunpack.c.h.b16 %v3390
        %v3776 = vunpack.c.l.b16 %v3391
        %v3777 = vunpack.c.h.b16 %v3391
        %v3778 = vunpack.c.l.b16 %v3392
        %v3779 = vunpack.c.l.b16 %v3393
        %v3780 = vunpack.c.h.b16 %v3393
        %v3781 = vunpack.c.l.b16 %v3394
        %v3782 = vunpack.c.h.b16 %v3394
        %v3783 = vunpack.c.l.b16 %v3395
        %v3784 = vunpack.c.h.b16 %v3395
        %v3785 = vunpack.c.l.b16 %v3396
        %v3786 = vpack.c.b16 %v3569, %v3562
        %v3787 = vpack.c.b16 %v3570, %v3563
        %v3788 = vpack.c.b16 %v3571, %v3564
        %v3789 = vpack.c.b16 %v3572, %v3565
        %v3790 = vpack.c.b16 %v3573, %v3566
        %v3791 = vpack.c.b16 %v3574, %v3567
        %v3792 = vpack.c.b16 %v3575, %v3568
        %v3793 = vpack.c.b16 %v3583, %v3576
        %v3794 = vpack.c.b16 %v3584, %v3577
        %v3795 = vpack.c.b16 %v3585, %v3578
        %v3796 = vpack.c.b16 %v3586, %v3579
        %v3797 = vpack.c.b16 %v3587, %v3580
        %v3798 = vpack.c.b16 %v3588, %v3581
        %v3799 = vpack.c.b16 %v3589, %v3582
        %v3800 = vpack.c.b16 %v3597, %v3590
        %v3801 = vpack.c.b16 %v3598, %v3591
        %v3802 = vpack.c.b16 %v3599, %v3592
        %v3803 = vpack.c.b16 %v3600, %v3593
        %v3804 = vpack.c.b16 %v3601, %v3594
        %v3805 = vpack.c.b16 %v3602, %v3595
        %v3806 = vpack.c.b16 %v3603, %v3596
        %v3807 = vpack.c.b16 %v3611, %v3604
        %v3808 = vpack.c.b16 %v3612, %v3605
        %v3809 = vpack.c.b16 %v3613, %v3606
        %v3810 = vpack.c.b16 %v3614, %v3607
        %v3811 = vpack.c.b16 %v3615, %v3608
        %v3812 = vpack.c.b16 %v3616, %v3609
        %v3813 = vpack.c.b16 %v3617, %v3610
        %v3814 = vpack.c.b16 %v3625, %v3618
        %v3815 = vpack.c.b16 %v3626, %v3619
        %v3816 = vpack.c.b16 %v3627, %v3620
        %v3817 = vpack.c.b16 %v3628, %v3621
        %v3818 = vpack.c.b16 %v3629, %v3622
        %v3819 = vpack.c.b16 %v3630, %v3623
        %v3820 = vpack.c.b16 %v3631, %v3624
        %v3821 = vpack.c.b16 %v3639, %v3632
        %v3822 = vpack.c.b16 %v3640, %v3633
        %v3823 = vpack.c.b16 %v3641, %v3634
        %v3824 = vpack.c.b16 %v3642, %v3635
        %v3825 = vpack.c.b16 %v3643, %v3636
        %v3826 = vpack.c.b16 %v3644, %v3637
        %v3827 = vpack.c.b16 %v3645, %v3638
        %v3828 = vpack.c.b16 %v3653, %v3646
        %v3829 = vpack.c.b16 %v3654, %v3647
        %v3830 = vpack.c.b16 %v3655, %v3648
        %v3831 = vpack.c.b16 %v3656, %v3649
        %v3832 = vpack.c.b16 %v3657, %v3650
        %v3833 = vpack.c.b16 %v3658, %v3651
        %v3834 = vpack.c.b16 %v3659, %v3652
        %v3835 = vpack.c.b16 %v3667, %v3660
        %v3836 = vpack.c.b16 %v3668, %v3661
        %v3837 = vpack.c.b16 %v3669, %v3662
        %v3838 = vpack.c.b16 %v3670, %v3663
        %v3839 = vpack.c.b16 %v3671, %v3664
        %v3840 = vpack.c.b16 %v3672, %v3665
        %v3841 = vpack.c.b16 %v3673, %v3666
        %v3842 = vpack.c.b16 %v3681, %v3674
        %v3843 = vpack.c.b16 %v3682, %v3675
        %v3844 = vpack.c.b16 %v3683, %v3676
        %v3845 = vpack.c.b16 %v3684, %v3677
        %v3846 = vpack.c.b16 %v3685, %v3678
        %v3847 = vpack.c.b16 %v3686, %v3679
        %v3848 = vpack.c.b16 %v3687, %v3680
        %v3849 = vpack.c.b16 %v3695, %v3688
        %v3850 = vpack.c.b16 %v3696, %v3689
        %v3851 = vpack.c.b16 %v3697, %v3690
        %v3852 = vpack.c.b16 %v3698, %v3691
        %v3853 = vpack.c.b16 %v3699, %v3692
        %v3854 = vpack.c.b16 %v3700, %v3693
        %v3855 = vpack.c.b16 %v3701, %v3694
        %v3856 = vpack.c.b16 %v3709, %v3702
        %v3857 = vpack.c.b16 %v3710, %v3703
        %v3858 = vpack.c.b16 %v3711, %v3704
        %v3859 = vpack.c.b16 %v3712, %v3705
        %v3860 = vpack.c.b16 %v3713, %v3706
        %v3861 = vpack.c.b16 %v3714, %v3707
        %v3862 = vpack.c.b16 %v3715, %v3708
        %v3863 = vpack.c.b16 %v3723, %v3716
        %v3864 = vpack.c.b16 %v3724, %v3717
        %v3865 = vpack.c.b16 %v3725, %v3718
        %v3866 = vpack.c.b16 %v3726, %v3719
        %v3867 = vpack.c.b16 %v3727, %v3720
        %v3868 = vpack.c.b16 %v3728, %v3721
        %v3869 = vpack.c.b16 %v3729, %v3722
        %v3870 = vpack.c.b16 %v3737, %v3730
        %v3871 = vpack.c.b16 %v3738, %v3731
        %v3872 = vpack.c.b16 %v3739, %v3732
        %v3873 = vpack.c.b16 %v3740, %v3733
        %v3874 = vpack.c.b16 %v3741, %v3734
        %v3875 = vpack.c.b16 %v3742, %v3735
        %v3876 = vpack.c.b16 %v3743, %v3736
        %v3877 = vpack.c.b16 %v3751, %v3744
        %v3878 = vpack.c.b16 %v3752, %v3745
        %v3879 = vpack.c.b16 %v3753, %v3746
        %v3880 = vpack.c.b16 %v3754, %v3747
        %v3881 = vpack.c.b16 %v3755, %v3748
        %v3882 = vpack.c.b16 %v3756, %v3749
        %v3883 = vpack.c.b16 %v3757, %v3750
        %v3884 = vpack.c.b16 %v3765, %v3758
        %v3885 = vpack.c.b16 %v3766, %v3759
        %v3886 = vpack.c.b16 %v3767, %v3760
        %v3887 = vpack.c.b16 %v3768, %v3761
        %v3888 = vpack.c.b16 %v3769, %v3762
        %v3889 = vpack.c.b16 %v3770, %v3763
        %v3890 = vpack.c.b16 %v3771, %v3764
        %v3891 = vpack.c.b16 %v3779, %v3772
        %v3892 = vpack.c.b16 %v3780, %v3773
        %v3893 = vpack.c.b16 %v3781, %v3774
        %v3894 = vpack.c.b16 %v3782, %v3775
        %v3895 = vpack.c.b16 %v3783, %v3776
        %v3896 = vpack.c.b16 %v3784, %v3777
        %v3897 = vpack.c.b16 %v3785, %v3778
        %4010 = vmatprep.subr.bf16.mxu0 %v3787
        %4011 = vmatpush1.bf16.msra.mxu0 %v3786
        %4012 = vmatprep.subr.bf16.mxu0 %v3794
        %4013 = vmatpush1.bf16.msra.mxu0 %v3793
        %4014 = vmatprep.subr.bf16.mxu0 %v3801
        %4015 = vmatpush1.bf16.msra.mxu0 %v3800
        %4016 = vmatprep.subr.bf16.mxu0 %v3808
        %4017 = vmatpush1.bf16.msra.mxu0 %v3807
        %4018 = vmatprep.subr.bf16.mxu0 %v3815
        %4019 = vmatpush1.bf16.msra.mxu0 %v3814
        %4020 = vmatprep.subr.bf16.mxu0 %v3822
        %4021 = vmatpush1.bf16.msra.mxu0 %v3821
        %4022 = vmatprep.subr.bf16.mxu0 %v3829
        %4023 = vmatpush1.bf16.msra.mxu0 %v3828
        %4024 = vmatprep.subr.bf16.mxu0 %v3836
        %4025 = vmatpush1.bf16.msra.mxu0 %v3835
        %4026 = vmatprep.subr.bf16.mxu0 %v3843
        %4027 = vmatpush1.bf16.msra.mxu0 %v3842
        %4028 = vmatprep.subr.bf16.mxu0 %v3850
        %4029 = vmatpush1.bf16.msra.mxu0 %v3849
        %4030 = vmatprep.subr.bf16.mxu0 %v3857
        %4031 = vmatpush1.bf16.msra.mxu0 %v3856
        %4032 = vmatprep.subr.bf16.mxu0 %v3864
        %4033 = vmatpush1.bf16.msra.mxu0 %v3863
        %4034 = vmatprep.subr.bf16.mxu0 %v3871
        %4035 = vmatpush1.bf16.msra.mxu0 %v3870
        %4036 = vmatprep.subr.bf16.mxu0 %v3878
        %4037 = vmatpush1.bf16.msra.mxu0 %v3877
        %4038 = vmatprep.subr.bf16.mxu0 %v3885
        %4039 = vmatpush1.bf16.msra.mxu0 %v3884
        %4040 = vmatprep.subr.bf16.mxu0 %v3892
        %4041 = vmatpush1.bf16.msra.mxu0 %v3891
        %4042 = vmatprep.mubr.bf16.mxu0 %v3262
        %4043 = vmatmul.mubr.bf16.gmra.mrb[0].mxu0 %v3261
        %v4044 = vpop.f32.mrb[0].mxu0
        %v4045 = vadd.f32 %v3402, %v4044
        %v4046 = vpop.f32.mrb[0].mxu0
        %v4047 = vadd.f32 %v3406, %v4046
        %v4048 = vpop.f32.mrb[0].mxu0
        %v4049 = vadd.f32 %v3402, %v4048
        %v4050 = vpop.f32.mrb[0].mxu0
        %v4051 = vadd.f32 %v3406, %v4050
        %4052 = vmatprep.mubr.bf16.mxu0 %v3264
        %4053 = vmatmul.mubr.bf16.gmra.mrb[0].mxu0 %v3263
        %v4054 = vpop.f32.mrb[0].mxu0
        %v4055 = vadd.f32 %v3402, %v4054
        %v4056 = vpop.f32.mrb[0].mxu0
        %v4057 = vadd.f32 %v3406, %v4056
        %v4058 = vpop.f32.mrb[0].mxu0
        %v4059 = vadd.f32 %v3402, %v4058
        %v4060 = vpop.f32.mrb[0].mxu0
        %v4061 = vadd.f32 %v3406, %v4060
        %4062 = vmatprep.mubr.bf16.mxu0 %v3266
        %4063 = vmatmul.mubr.bf16.gmra.mrb[0].mxu0 %v3265
        %v4064 = vpop.f32.mrb[0].mxu0
        %v4065 = vadd.f32 %v3402, %v4064
        %v4066 = vpop.f32.mrb[0].mxu0
        %v4067 = vadd.f32 %v3406, %v4066
        %v4068 = vpop.f32.mrb[0].mxu0
        %v4069 = vadd.f32 %v3402, %v4068
        %v4070 = vpop.f32.mrb[0].mxu0
        %v4071 = vadd.f32 %v3406, %v4070
        %4072 = vmatprep.mubr.bf16.mxu0 %v3268
        %4073 = vmatmul.mubr.bf16.gmra.mrb[0].mxu0 %v3267
        %v4074 = vpop.f32.mrb[0].mxu0
        %v4075 = vadd.f32 %v3402, %v4074
        %v4076 = vpop.f32.mrb[0].mxu0
        %v4077 = vadd.f32 %v3406, %v4076
        %v4078 = vpop.f32.mrb[0].mxu0
        %v4079 = vadd.f32 %v3402, %v4078
        %v4080 = vpop.f32.mrb[0].mxu0
        %v4081 = vadd.f32 %v3406, %v4080
        %4082 = vdwg.mxu0
        %4083 = vmatprep.subr.bf16.mxu0 %v3789
        %4084 = vmatpush1.bf16.msra.mxu0 %v3788
        %4085 = vmatprep.subr.bf16.mxu0 %v3796
        %4086 = vmatpush1.bf16.msra.mxu0 %v3795
        %4087 = vmatprep.subr.bf16.mxu0 %v3803
        %4088 = vmatpush1.bf16.msra.mxu0 %v3802
        %4089 = vmatprep.subr.bf16.mxu0 %v3810
        %4090 = vmatpush1.bf16.msra.mxu0 %v3809
        %4091 = vmatprep.subr.bf16.mxu0 %v3817
        %4092 = vmatpush1.bf16.msra.mxu0 %v3816
        %4093 = vmatprep.subr.bf16.mxu0 %v3824
        %4094 = vmatpush1.bf16.msra.mxu0 %v3823
        %4095 = vmatprep.subr.bf16.mxu0 %v3831
        %4096 = vmatpush1.bf16.msra.mxu0 %v3830
        %4097 = vmatprep.subr.bf16.mxu0 %v3838
        %4098 = vmatpush1.bf16.msra.mxu0 %v3837
        %4099 = vmatprep.subr.bf16.mxu0 %v3845
        %4100 = vmatpush1.bf16.msra.mxu0 %v3844
        %4101 = vmatprep.subr.bf16.mxu0 %v3852
        %4102 = vmatpush1.bf16.msra.mxu0 %v3851
        %4103 = vmatprep.subr.bf16.mxu0 %v3859
        %4104 = vmatpush1.bf16.msra.mxu0 %v3858
        %4105 = vmatprep.subr.bf16.mxu0 %v3866
        %4106 = vmatpush1.bf16.msra.mxu0 %v3865
        %4107 = vmatprep.subr.bf16.mxu0 %v3873
        %4108 = vmatpush1.bf16.msra.mxu0 %v3872
        %4109 = vmatprep.subr.bf16.mxu0 %v3880
        %4110 = vmatpush1.bf16.msra.mxu0 %v3879
        %4111 = vmatprep.subr.bf16.mxu0 %v3887
        %4112 = vmatpush1.bf16.msra.mxu0 %v3886
        %4113 = vmatprep.subr.bf16.mxu0 %v3894
        %4114 = vmatpush1.bf16.msra.mxu0 %v3893
        %4115 = vmatprep.mubr.bf16.mxu0 %v3262
        %4116 = vmatmul.mubr.bf16.gmra.mrb[0].mxu0 %v3261
        %v4117 = vpop.f32.mrb[0].mxu0
        %v4118 = vadd.f32 %v3410, %v4117
        %v4119 = vpop.f32.mrb[0].mxu0
        %v4120 = vadd.f32 %v3414, %v4119
        %v4121 = vpop.f32.mrb[0].mxu0
        %v4122 = vadd.f32 %v3410, %v4121
        %v4123 = vpop.f32.mrb[0].mxu0
        %v4124 = vadd.f32 %v3414, %v4123
        %4125 = vmatprep.mubr.bf16.mxu0 %v3264
        %4126 = vmatmul.mubr.bf16.gmra.mrb[0].mxu0 %v3263
        %v4127 = vpop.f32.mrb[0].mxu0
        %v4128 = vadd.f32 %v3410, %v4127
        %v4129 = vpop.f32.mrb[0].mxu0
        %v4130 = vadd.f32 %v3414, %v4129
        %v4131 = vpop.f32.mrb[0].mxu0
        %v4132 = vadd.f32 %v3410, %v4131
        %v4133 = vpop.f32.mrb[0].mxu0
        %v4134 = vadd.f32 %v3414, %v4133
        %4135 = vmatprep.mubr.bf16.mxu0 %v3266
        %4136 = vmatmul.mubr.bf16.gmra.mrb[0].mxu0 %v3265
        %v4137 = vpop.f32.mrb[0].mxu0
        %v4138 = vadd.f32 %v3410, %v4137
        %v4139 = vpop.f32.mrb[0].mxu0
        %v4140 = vadd.f32 %v3414, %v4139
        %v4141 = vpop.f32.mrb[0].mxu0
        %v4142 = vadd.f32 %v3410, %v4141
        %v4143 = vpop.f32.mrb[0].mxu0
        %v4144 = vadd.f32 %v3414, %v4143
        %4145 = vmatprep.mubr.bf16.mxu0 %v3268
        %4146 = vmatmul.mubr.bf16.gmra.mrb[0].mxu0 %v3267
        %v4147 = vpop.f32.mrb[0].mxu0
        %v4148 = vadd.f32 %v3410, %v4147
        %v4149 = vpop.f32.mrb[0].mxu0
        %v4150 = vadd.f32 %v3414, %v4149
        %v4151 = vpop.f32.mrb[0].mxu0
        %v4152 = vadd.f32 %v3410, %v4151
        %v4153 = vpop.f32.mrb[0].mxu0
        %v4154 = vadd.f32 %v3414, %v4153
        %4155 = vdwg.mxu0
        %4156 = vmatprep.subr.bf16.mxu0 %v3791
        %4157 = vmatpush1.bf16.msra.mxu0 %v3790
        %4158 = vmatprep.subr.bf16.mxu0 %v3798
        %4159 = vmatpush1.bf16.msra.mxu0 %v3797
        %4160 = vmatprep.subr.bf16.mxu0 %v3805
        %4161 = vmatpush1.bf16.msra.mxu0 %v3804
        %4162 = vmatprep.subr.bf16.mxu0 %v3812
        %4163 = vmatpush1.bf16.msra.mxu0 %v3811
        %4164 = vmatprep.subr.bf16.mxu0 %v3819
        %4165 = vmatpush1.bf16.msra.mxu0 %v3818
        %4166 = vmatprep.subr.bf16.mxu0 %v3826
        %4167 = vmatpush1.bf16.msra.mxu0 %v3825
        %4168 = vmatprep.subr.bf16.mxu0 %v3833
        %4169 = vmatpush1.bf16.msra.mxu0 %v3832
        %4170 = vmatprep.subr.bf16.mxu0 %v3840
        %4171 = vmatpush1.bf16.msra.mxu0 %v3839
        %4172 = vmatprep.subr.bf16.mxu0 %v3847
        %4173 = vmatpush1.bf16.msra.mxu0 %v3846
        %4174 = vmatprep.subr.bf16.mxu0 %v3854
        %4175 = vmatpush1.bf16.msra.mxu0 %v3853
        %4176 = vmatprep.subr.bf16.mxu0 %v3861
        %4177 = vmatpush1.bf16.msra.mxu0 %v3860
        %4178 = vmatprep.subr.bf16.mxu0 %v3868
        %4179 = vmatpush1.bf16.msra.mxu0 %v3867
        %4180 = vmatprep.subr.bf16.mxu0 %v3875
        %4181 = vmatpush1.bf16.msra.mxu0 %v3874
        %4182 = vmatprep.subr.bf16.mxu0 %v3882
        %4183 = vmatpush1.bf16.msra.mxu0 %v3881
        %4184 = vmatprep.subr.bf16.mxu0 %v3889
        %4185 = vmatpush1.bf16.msra.mxu0 %v3888
        %4186 = vmatprep.subr.bf16.mxu0 %v3896
        %4187 = vmatpush1.bf16.msra.mxu0 %v3895
        %4188 = vmatprep.mubr.bf16.mxu0 %v3262
        %4189 = vmatmul.mubr.bf16.gmra.mrb[0].mxu0 %v3261
        %v4190 = vpop.f32.mrb[0].mxu0
        %v4191 = vadd.f32 %v3418, %v4190
        %v4192 = vpop.f32.mrb[0].mxu0
        %v4193 = vadd.f32 %v3422, %v4192
        %v4194 = vpop.f32.mrb[0].mxu0
        %v4195 = vadd.f32 %v3418, %v4194
        %v4196 = vpop.f32.mrb[0].mxu0
        %v4197 = vadd.f32 %v3422, %v4196
        %4198 = vmatprep.mubr.bf16.mxu0 %v3264
        %4199 = vmatmul.mubr.bf16.gmra.mrb[0].mxu0 %v3263
        %v4200 = vpop.f32.mrb[0].mxu0
        %v4201 = vadd.f32 %v3418, %v4200
        %v4202 = vpop.f32.mrb[0].mxu0
        %v4203 = vadd.f32 %v3422, %v4202
        %v4204 = vpop.f32.mrb[0].mxu0
        %v4205 = vadd.f32 %v3418, %v4204
        %v4206 = vpop.f32.mrb[0].mxu0
        %v4207 = vadd.f32 %v3422, %v4206
        %4208 = vmatprep.mubr.bf16.mxu0 %v3266
        %4209 = vmatmul.mubr.bf16.gmra.mrb[0].mxu0 %v3265
        %v4210 = vpop.f32.mrb[0].mxu0
        %v4211 = vadd.f32 %v3418, %v4210
        %v4212 = vpop.f32.mrb[0].mxu0
        %v4213 = vadd.f32 %v3422, %v4212
        %v4214 = vpop.f32.mrb[0].mxu0
        %v4215 = vadd.f32 %v3418, %v4214
        %v4216 = vpop.f32.mrb[0].mxu0
        %v4217 = vadd.f32 %v3422, %v4216
        %4218 = vmatprep.mubr.bf16.mxu0 %v3268
        %4219 = vmatmul.mubr.bf16.gmra.mrb[0].mxu0 %v3267
        %v4220 = vpop.f32.mrb[0].mxu0
        %v4221 = vadd.f32 %v3418, %v4220
        %v4222 = vpop.f32.mrb[0].mxu0
        %v4223 = vadd.f32 %v3422, %v4222
        %v4224 = vpop.f32.mrb[0].mxu0
        %v4225 = vadd.f32 %v3418, %v4224
        %v4226 = vpop.f32.mrb[0].mxu0
        %v4227 = vadd.f32 %v3422, %v4226
        %4228 = vdwg.mxu0
        %4229 = vmatprep.subr.bf16.mxu0 0
        %4230 = vmatpush1.bf16.msra.mxu0 %v3792
        %4231 = vmatprep.subr.bf16.mxu0 0
        %4232 = vmatpush1.bf16.msra.mxu0 %v3799
        %4233 = vmatprep.subr.bf16.mxu0 0
        %4234 = vmatpush1.bf16.msra.mxu0 %v3806
        %4235 = vmatprep.subr.bf16.mxu0 0
        %4236 = vmatpush1.bf16.msra.mxu0 %v3813
        %4237 = vmatprep.subr.bf16.mxu0 0
        %4238 = vmatpush1.bf16.msra.mxu0 %v3820
        %4239 = vmatprep.subr.bf16.mxu0 0
        %4240 = vmatpush1.bf16.msra.mxu0 %v3827
        %4241 = vmatprep.subr.bf16.mxu0 0
        %4242 = vmatpush1.bf16.msra.mxu0 %v3834
        %4243 = vmatprep.subr.bf16.mxu0 0
        %4244 = vmatpush1.bf16.msra.mxu0 %v3841
        %4245 = vmatprep.subr.bf16.mxu0 0
        %4246 = vmatpush1.bf16.msra.mxu0 %v3848
        %4247 = vmatprep.subr.bf16.mxu0 0
        %4248 = vmatpush1.bf16.msra.mxu0 %v3855
        %4249 = vmatprep.subr.bf16.mxu0 0
        %4250 = vmatpush1.bf16.msra.mxu0 %v3862
        %4251 = vmatprep.subr.bf16.mxu0 0
        %4252 = vmatpush1.bf16.msra.mxu0 %v3869
        %4253 = vmatprep.subr.bf16.mxu0 0
        %4254 = vmatpush1.bf16.msra.mxu0 %v3876
        %4255 = vmatprep.subr.bf16.mxu0 0
        %4256 = vmatpush1.bf16.msra.mxu0 %v3883
        %4257 = vmatprep.subr.bf16.mxu0 0
        %4258 = vmatpush1.bf16.msra.mxu0 %v3890
        %4259 = vmatprep.subr.bf16.mxu0 0
        %4260 = vmatpush1.bf16.msra.mxu0 %v3897
        %4261 = vmatprep.mubr.bf16.mxu0 %v3262
        %4262 = vmatmul.mubr.bf16.gmra.mrb[0].mxu0 %v3261
        %v4263 = vpop.f32.mrb[0].mxu0
        %v4264 = vadd.f32 %v3426, %v4263
        %v4265 = vpop.f32.mrb[0].mxu0
        %v4266 = vpop.f32.mrb[0].mxu0
        %v4267 = vadd.f32 %v3426, %v4266
        %v4268 = vpop.f32.mrb[0].mxu0
        %4269 = vmatprep.mubr.bf16.mxu0 %v3264
        %4270 = vmatmul.mubr.bf16.gmra.mrb[0].mxu0 %v3263
        %v4271 = vpop.f32.mrb[0].mxu0
        %v4272 = vadd.f32 %v3426, %v4271
        %v4273 = vpop.f32.mrb[0].mxu0
        %v4274 = vpop.f32.mrb[0].mxu0
        %v4275 = vadd.f32 %v3426, %v4274
        %v4276 = vpop.f32.mrb[0].mxu0
        %4277 = vmatprep.mubr.bf16.mxu0 %v3266
        %4278 = vmatmul.mubr.bf16.gmra.mrb[0].mxu0 %v3265
        %v4279 = vpop.f32.mrb[0].mxu0
        %v4280 = vadd.f32 %v3426, %v4279
        %v4281 = vpop.f32.mrb[0].mxu0
        %v4282 = vpop.f32.mrb[0].mxu0
        %v4283 = vadd.f32 %v3426, %v4282
        %v4284 = vpop.f32.mrb[0].mxu0
        %4285 = vmatprep.mubr.bf16.mxu0 %v3268
        %4286 = vmatmul.mubr.bf16.gmra.mrb[0].mxu0 %v3267
        %v4287 = vpop.f32.mrb[0].mxu0
        %v4288 = vadd.f32 %v3426, %v4287
        %v4289 = vpop.f32.mrb[0].mxu0
        %v4290 = vpop.f32.mrb[0].mxu0
        %v4291 = vadd.f32 %v3426, %v4290
        %v4292 = vpop.f32.mrb[0].mxu0
        %4293 = vdwg.mxu0
        %v4294 = vmax.f32 %v4045, 0.0
        %v4295 = vmax.f32 %v4047, 0.0
        %v4296 = vmax.f32 %v4118, 0.0
        %v4297 = vmax.f32 %v4120, 0.0
        %v4298 = vmax.f32 %v4191, 0.0
        %v4299 = vmax.f32 %v4193, 0.0
        %v4300 = vmax.f32 %v4264, 0.0
        %v4301 = vmax.f32 %v4049, 0.0
        %v4302 = vmax.f32 %v4051, 0.0
        %v4303 = vmax.f32 %v4122, 0.0
        %v4304 = vmax.f32 %v4124, 0.0
        %v4305 = vmax.f32 %v4195, 0.0
        %v4306 = vmax.f32 %v4197, 0.0
        %v4307 = vmax.f32 %v4267, 0.0
        %v4308 = vmax.f32 %v4055, 0.0
        %v4309 = vmax.f32 %v4057, 0.0
        %v4310 = vmax.f32 %v4128, 0.0
        %v4311 = vmax.f32 %v4130, 0.0
        %v4312 = vmax.f32 %v4201, 0.0
        %v4313 = vmax.f32 %v4203, 0.0
        %v4314 = vmax.f32 %v4272, 0.0
        %v4315 = vmax.f32 %v4059, 0.0
        %v4316 = vmax.f32 %v4061, 0.0
        %v4317 = vmax.f32 %v4132, 0.0
        %v4318 = vmax.f32 %v4134, 0.0
        %v4319 = vmax.f32 %v4205, 0.0
        %v4320 = vmax.f32 %v4207, 0.0
        %v4321 = vmax.f32 %v4275, 0.0
        %v4322 = vmax.f32 %v4065, 0.0
        %v4323 = vmax.f32 %v4067, 0.0
        %v4324 = vmax.f32 %v4138, 0.0
        %v4325 = vmax.f32 %v4140, 0.0
        %v4326 = vmax.f32 %v4211, 0.0
        %v4327 = vmax.f32 %v4213, 0.0
        %v4328 = vmax.f32 %v4280, 0.0
        %v4329 = vmax.f32 %v4069, 0.0
        %v4330 = vmax.f32 %v4071, 0.0
        %v4331 = vmax.f32 %v4142, 0.0
        %v4332 = vmax.f32 %v4144, 0.0
        %v4333 = vmax.f32 %v4215, 0.0
        %v4334 = vmax.f32 %v4217, 0.0
        %v4335 = vmax.f32 %v4283, 0.0
        %v4336 = vmax.f32 %v4075, 0.0
        %v4337 = vmax.f32 %v4077, 0.0
        %v4338 = vmax.f32 %v4148, 0.0
        %v4339 = vmax.f32 %v4150, 0.0
        %v4340 = vmax.f32 %v4221, 0.0
        %v4341 = vmax.f32 %v4223, 0.0
        %v4342 = vmax.f32 %v4288, 0.0
        %v4343 = vmax.f32 %v4079, 0.0
        %v4344 = vmax.f32 %v4081, 0.0
        %v4345 = vmax.f32 %v4152, 0.0
        %v4346 = vmax.f32 %v4154, 0.0
        %v4347 = vmax.f32 %v4225, 0.0
        %v4348 = vmax.f32 %v4227, 0.0
        %v4349 = vmax.f32 %v4291, 0.0
        %v4350 = vadd.f32 %v4294, %v410
        %v4351 = vadd.f32 %v4295, %v411
        %v4352 = vadd.f32 %v4296, %v412
        %v4353 = vadd.f32 %v4297, %v413
        %v4354 = vadd.f32 %v4298, %v414
        %v4355 = vadd.f32 %v4299, %v415
        %v4356 = vadd.f32 %v4300, %v416
        %v4357 = vadd.f32 %v4301, %v417
        %v4358 = vadd.f32 %v4302, %v418
        %v4359 = vadd.f32 %v4303, %v419
        %v4360 = vadd.f32 %v4304, %v420
        %v4361 = vadd.f32 %v4305, %v421
        %v4362 = vadd.f32 %v4306, %v422
        %v4363 = vadd.f32 %v4307, %v423
        %v4364 = vadd.f32 %v4308, %v424
        %v4365 = vadd.f32 %v4309, %v425
        %v4366 = vadd.f32 %v4310, %v426
        %v4367 = vadd.f32 %v4311, %v427
        %v4368 = vadd.f32 %v4312, %v428
        %v4369 = vadd.f32 %v4313, %v429
        %v4370 = vadd.f32 %v4314, %v430
        %v4371 = vadd.f32 %v4315, %v431
        %v4372 = vadd.f32 %v4316, %v432
        %v4373 = vadd.f32 %v4317, %v433
        %v4374 = vadd.f32 %v4318, %v434
        %v4375 = vadd.f32 %v4319, %v435
        %v4376 = vadd.f32 %v4320, %v436
        %v4377 = vadd.f32 %v4321, %v437
        %v4378 = vadd.f32 %v4322, %v438
        %v4379 = vadd.f32 %v4323, %v439
        %v4380 = vadd.f32 %v4324, %v440
        %v4381 = vadd.f32 %v4325, %v441
        %v4382 = vadd.f32 %v4326, %v442
        %v4383 = vadd.f32 %v4327, %v443
        %v4384 = vadd.f32 %v4328, %v444
        %v4385 = vadd.f32 %v4329, %v445
        %v4386 = vadd.f32 %v4330, %v446
        %v4387 = vadd.f32 %v4331, %v447
        %v4388 = vadd.f32 %v4332, %v448
        %v4389 = vadd.f32 %v4333, %v449
        %v4390 = vadd.f32 %v4334, %v450
        %v4391 = vadd.f32 %v4335, %v451
        %v4392 = vadd.f32 %v4336, %v452
        %v4393 = vadd.f32 %v4337, %v453
        %v4394 = vadd.f32 %v4338, %v454
        %v4395 = vadd.f32 %v4339, %v455
        %v4396 = vadd.f32 %v4340, %v456
        %v4397 = vadd.f32 %v4341, %v457
        %v4398 = vadd.f32 %v4342, %v458
        %v4399 = vadd.f32 %v4343, %v459
        %v4400 = vadd.f32 %v4344, %v460
        %v4401 = vadd.f32 %v4345, %v461
        %v4402 = vadd.f32 %v4346, %v462
        %v4403 = vadd.f32 %v4347, %v463
        %v4404 = vadd.f32 %v4348, %v464
        %v4405 = vadd.f32 %v4349, %v465
        %v4406 = vmax.f32 %v4350, 0.0
        %v4407 = vmax.f32 %v4351, 0.0
        %v4408 = vmax.f32 %v4352, 0.0
        %v4409 = vmax.f32 %v4353, 0.0
        %v4410 = vmax.f32 %v4354, 0.0
        %v4411 = vmax.f32 %v4355, 0.0
        %v4412 = vmax.f32 %v4356, 0.0
        %v4413 = vmax.f32 %v4357, 0.0
        %v4414 = vmax.f32 %v4358, 0.0
        %v4415 = vmax.f32 %v4359, 0.0
        %v4416 = vmax.f32 %v4360, 0.0
        %v4417 = vmax.f32 %v4361, 0.0
        %v4418 = vmax.f32 %v4362, 0.0
        %v4419 = vmax.f32 %v4363, 0.0
        %v4420 = vmax.f32 %v4364, 0.0
        %v4421 = vmax.f32 %v4365, 0.0
        %v4422 = vmax.f32 %v4366, 0.0
        %v4423 = vmax.f32 %v4367, 0.0
        %v4424 = vmax.f32 %v4368, 0.0
        %v4425 = vmax.f32 %v4369, 0.0
        %v4426 = vmax.f32 %v4370, 0.0
        %v4427 = vmax.f32 %v4371, 0.0
        %v4428 = vmax.f32 %v4372, 0.0
        %v4429 = vmax.f32 %v4373, 0.0
        %v4430 = vmax.f32 %v4374, 0.0
        %v4431 = vmax.f32 %v4375, 0.0
        %v4432 = vmax.f32 %v4376, 0.0
        %v4433 = vmax.f32 %v4377, 0.0
        %v4434 = vmax.f32 %v4378, 0.0
        %v4435 = vmax.f32 %v4379, 0.0
        %v4436 = vmax.f32 %v4380, 0.0
        %v4437 = vmax.f32 %v4381, 0.0
        %v4438 = vmax.f32 %v4382, 0.0
        %v4439 = vmax.f32 %v4383, 0.0
        %v4440 = vmax.f32 %v4384, 0.0
        %v4441 = vmax.f32 %v4385, 0.0
        %v4442 = vmax.f32 %v4386, 0.0
        %v4443 = vmax.f32 %v4387, 0.0
        %v4444 = vmax.f32 %v4388, 0.0
        %v4445 = vmax.f32 %v4389, 0.0
        %v4446 = vmax.f32 %v4390, 0.0
        %v4447 = vmax.f32 %v4391, 0.0
        %v4448 = vmax.f32 %v4392, 0.0
        %v4449 = vmax.f32 %v4393, 0.0
        %v4450 = vmax.f32 %v4394, 0.0
        %v4451 = vmax.f32 %v4395, 0.0
        %v4452 = vmax.f32 %v4396, 0.0
        %v4453 = vmax.f32 %v4397, 0.0
        %v4454 = vmax.f32 %v4398, 0.0
        %v4455 = vmax.f32 %v4399, 0.0
        %v4456 = vmax.f32 %v4400, 0.0
        %v4457 = vmax.f32 %v4401, 0.0
        %v4458 = vmax.f32 %v4402, 0.0
        %v4459 = vmax.f32 %v4403, 0.0
        %v4460 = vmax.f32 %v4404, 0.0
        %v4461 = vmax.f32 %v4405, 0.0
        %4462 = vst [vmem:[%s408] sm:$0xff] %v4406
        %4463 = vst [vmem:[%s408 + $0x8] sm:$0xff] %v4407
        %4464 = vst [vmem:[%s408 + $0x10] sm:$0xff] %v4408
        %4465 = vst [vmem:[%s408 + $0x18] sm:$0xff] %v4409
        %4466 = vst [vmem:[%s408 + $0x20] sm:$0xff] %v4410
        %4467 = vst [vmem:[%s408 + $0x28] sm:$0xff] %v4411
        %4468 = vst [vmem:[%s408 + $0x30] sm:$0xff] %v4412
        %4469 = vst [vmem:[%s408 + $0x38] sm:$0xff] %v4413
        %4470 = vst [vmem:[%s408 + $0x40] sm:$0xff] %v4414
        %4471 = vst [vmem:[%s408 + $0x48] sm:$0xff] %v4415
        %4472 = vst [vmem:[%s408 + $0x50] sm:$0xff] %v4416
        %4473 = vst [vmem:[%s408 + $0x58] sm:$0xff] %v4417
        %4474 = vst [vmem:[%s408 + $0x60] sm:$0xff] %v4418
        %4475 = vst [vmem:[%s408 + $0x68] sm:$0xff] %v4419
        %4476 = vst [vmem:[%s408 + $0x70] sm:$0xff] %v4420
        %4477 = vst [vmem:[%s408 + $0x78] sm:$0xff] %v4421
        %4478 = vst [vmem:[%s408 + $0x80] sm:$0xff] %v4422
        %4479 = vst [vmem:[%s408 + $0x88] sm:$0xff] %v4423
        %4480 = vst [vmem:[%s408 + $0x90] sm:$0xff] %v4424
        %4481 = vst [vmem:[%s408 + $0x98] sm:$0xff] %v4425
        %4482 = vst [vmem:[%s408 + $0xa0] sm:$0xff] %v4426
        %4483 = vst [vmem:[%s408 + $0xa8] sm:$0xff] %v4427
        %4484 = vst [vmem:[%s408 + $0xb0] sm:$0xff] %v4428
        %4485 = vst [vmem:[%s408 + $0xb8] sm:$0xff] %v4429
        %4486 = vst [vmem:[%s408 + $0xc0] sm:$0xff] %v4430
        %4487 = vst [vmem:[%s408 + $0xc8] sm:$0xff] %v4431
        %4488 = vst [vmem:[%s408 + $0xd0] sm:$0xff] %v4432
        %4489 = vst [vmem:[%s408 + $0xd8] sm:$0xff] %v4433
        %4490 = vst [vmem:[%s408 + $0xe0] sm:$0xff] %v4434
        %4491 = vst [vmem:[%s408 + $0xe8] sm:$0xff] %v4435
        %4492 = vst [vmem:[%s408 + $0xf0] sm:$0xff] %v4436
        %4493 = vst [vmem:[%s408 + $0xf8] sm:$0xff] %v4437
        %4494 = vst [vmem:[%s408 + $0x100] sm:$0xff] %v4438
        %4495 = vst [vmem:[%s408 + $0x108] sm:$0xff] %v4439
        %4496 = vst [vmem:[%s408 + $0x110] sm:$0xff] %v4440
        %4497 = vst [vmem:[%s408 + $0x118] sm:$0xff] %v4441
        %4498 = vst [vmem:[%s408 + $0x120] sm:$0xff] %v4442
        %4499 = vst [vmem:[%s408 + $0x128] sm:$0xff] %v4443
        %4500 = vst [vmem:[%s408 + $0x130] sm:$0xff] %v4444
        %4501 = vst [vmem:[%s408 + $0x138] sm:$0xff] %v4445
        %4502 = vst [vmem:[%s408 + $0x140] sm:$0xff] %v4446
        %4503 = vst [vmem:[%s408 + $0x148] sm:$0xff] %v4447
        %4504 = vst [vmem:[%s408 + $0x150] sm:$0xff] %v4448
        %4505 = vst [vmem:[%s408 + $0x158] sm:$0xff] %v4449
        %4506 = vst [vmem:[%s408 + $0x160] sm:$0xff] %v4450
        %4507 = vst [vmem:[%s408 + $0x168] sm:$0xff] %v4451
        %4508 = vst [vmem:[%s408 + $0x170] sm:$0xff] %v4452
        %4509 = vst [vmem:[%s408 + $0x178] sm:$0xff] %v4453
        %4510 = vst [vmem:[%s408 + $0x180] sm:$0xff] %v4454
        %4511 = vst [vmem:[%s408 + $0x188] sm:$0xff] %v4455
        %4512 = vst [vmem:[%s408 + $0x190] sm:$0xff] %v4456
        %4513 = vst [vmem:[%s408 + $0x198] sm:$0xff] %v4457
        %4514 = vst [vmem:[%s408 + $0x1a0] sm:$0xff] %v4458
        %4515 = vst [vmem:[%s408 + $0x1a8] sm:$0xff] %v4459
        %4516 = vst [vmem:[%s408 + $0x1b0] sm:$0xff] %v4460
        %4517 = vst [vmem:[%s408 + $0x1b8] sm:$0xff] %v4461
        %s4518 = sand.u32 %s230, 1
        %s4519 = scalar_lea.sflag [#allocation4], %s4518
        %s4520 = sand.u32 %s230, 1
        %s4521 = smul.addr %s4520, 448
        %s4522 = scalar_lea.vmem [#allocation11], %s4521
        // Predicated region
        $region77: #{inception_resnet_b_forward.1} parent=55 // pred_check
          %p4523 = pneg %p240
        $region78: #{inception_resnet_b_forward.1} parent=55 // pred_check_branch
          %4525 = sbr.rel (%p4523) target = $region80
        $region79: #{inception_resnet_b_forward.1} parent=55 // pred_region
          %s4527 = ssub.s32 7168, 7168
          %4528 = vsyncadd %s4519, %s4527
          %s4529 = smul.addr %s28, 56
          %s4530 = smul.addr %s4529, 128
          %s4531 = scalar_lea.hbm %s9, %s4530
          %s4532 = sshll.u32 %s4522, 4
          %s4533 = int_to_ptr.vmem [resolvable:$true] %s4532
          %4538 = dma.vmem_to_hbm [thread:$0]  %s4533, 7168, %s4531, %s4519, 896, 896, 56
        $region80: #{inception_resnet_b_forward.1} parent=55 // pred_fallthru
          _
      $region56: #{inception_resnet_b_forward.1} parent=5 // pred_fallthru
        _
      %p4539 = scmp.le.s32.totalorder 2, %s23
      // Predicated region
      $region81: #{inception_resnet_b_forward.1} parent=5 // pred_check
        %p4540 = pneg %p4539
      $region82: #{inception_resnet_b_forward.1} parent=5 // pred_check_branch
        %4542 = sbr.rel (%p4540) target = $region84
      $region83: #{inception_resnet_b_forward.1} parent=5 // pred_region
        %s4543 = ssub.s32 %s23, 2
        // Predicated region
        $region85: #{inception_resnet_b_forward.1} parent=83 // pred_check
          %p4544 = pneg %p246
        $region86: #{inception_resnet_b_forward.1} parent=83 // pred_check_branch
          %4546 = sbr.rel (%p4544) target = $region88
        $region87: #{inception_resnet_b_forward.1} parent=83 // pred_region
          %s4547 = sand.u32 %s231, 1
          %s4548 = scalar_lea.sflag [#allocation4], %s4547
          %s4549 = sand.u32 %s231, 1
          %s4550 = smul.addr %s4549, 448
          %s4551 = scalar_lea.vmem [#allocation11], %s4550
          %4552 = dma.done %s4548, 7168
        $region88: #{inception_resnet_b_forward.1} parent=83 // pred_fallthru
          _
      $region84: #{inception_resnet_b_forward.1} parent=5 // pred_fallthru
        _
    $region6: #{inception_resnet_b_forward.1} parent=1 // loop_footer
      %s27 = sadd.s32 1, %s23
    $region7: #{inception_resnet_b_forward.1} parent=1 // loop_footer_branch
      %22 = sbr.rel target = $region3
    $region8: #{inception_resnet_b_forward.1} parent=1 // loop_exit
      _
    %4553 = vsyncpa [#allocation3], 1
    %s4554 = scalar_lea.sflag [#allocation3], 1
    %4555 = vsyncpa %s4554, 1
    %4556 = vsyncpa [#allocation6], 1
    %4557 = vsyncpa [#allocation9], 1
    %4558 = vsyncpa [#allocation4], 1
    %s4559 = scalar_lea.sflag [#allocation4], 1
    %4560 = vsyncpa %s4559, 1

</llo_original>
